<compile_context>
chip_gen: v7x
topology: tpu7x:2x2x1
jax: 0.10.0
libtpu: 0.0.40
codegen_flags: <defaults>
</compile_context>

<pallas_src>
import functools

import numpy as np

import jax
import jax.numpy as jnp
from jax.experimental import pallas as pl
from jax.experimental.pallas import tpu as pltpu


# ----------------------------------------------------------------------------
# Reversed-Morton (recursive quadrant) ordering helpers (host side, trace time)
# ----------------------------------------------------------------------------
def _lane_index(s, h, w):
    """Lane index of position (h, w) in an s x s map: finest 2x2-quadrant bits
    are the MOST significant digits, so each stride-2 conv's 4 patch members
    form 4 contiguous lane blocks."""
    k = s.bit_length() - 1
    lane = 0
    for j in range(k):
        q = 2 * ((h >> j) & 1) + ((w >> j) & 1)
        lane += q * (4 ** (k - 1 - j))
    return lane


def _rev_morton_perm(s):
    """perm such that permuted[..., lane] = flat[..., perm[lane]] (flat = h*s+w)."""
    perm = np.zeros(s * s, dtype=np.int32)
    for h in range(s):
        for w in range(s):
            perm[_lane_index(s, h, w)] = h * s + w
    return perm


# ----------------------------------------------------------------------------
# Fused kernel: conv pyramid + final 4x4 conv + MLP head (one grid step = one
# batch row)
# ----------------------------------------------------------------------------
def _make_kernel(C, n_stage, n_mlp):
    def kernel(*refs):
        idx = 0
        chunk_refs = refs[idx:idx + n_stage + 1]
        idx += n_stage + 1
        wq_ref, cb_ref, wf_ref, bf_ref = refs[idx:idx + 4]
        idx += 4
        mlp_refs = refs[idx:idx + 2 * n_mlp]
        idx += 2 * n_mlp
        out_ref, enc_ref = refs[idx], refs[idx + 1]

        # ---- hourglass conv stages: out = residual + relu(conv2x2_s2(x) + b)
        a = chunk_refs[0][0]                               # (C, s0*s0) lanes
        for st in range(n_stage):
            m_out = a.shape[1] // 4
            acc = jnp.zeros((C, m_out), dtype=jnp.float32)
            if m_out % 128 == 0:
                # patch member q is a 128-aligned contiguous lane block
                for q in range(4):
                    blk = a[:, q * m_out:(q + 1) * m_out]
                    acc = acc + jnp.dot(wq_ref[st * 4 + q], blk,
                                        preferred_element_type=jnp.float32)
            else:
                # small stage: extract the block with a constant 0/1 selection
                # matmul (guaranteed lowering, negligible cost at this size)
                d_in = 4 * m_out
                rows = jax.lax.broadcasted_iota(jnp.int32, (d_in, m_out), 0)
                cols = jax.lax.broadcasted_iota(jnp.int32, (d_in, m_out), 1)
                for q in range(4):
                    sel = (rows == cols + q * m_out).astype(jnp.float32)
                    blk = jnp.dot(a, sel, preferred_element_type=jnp.float32)
                    acc = acc + jnp.dot(wq_ref[st * 4 + q], blk,
                                        preferred_element_type=jnp.float32)
            y = jnp.maximum(acc + cb_ref[st], 0.0)         # conv + bias + relu
            a = chunk_refs[st + 1][0] + y                  # skip connection

        # ---- final 4x4 conv (full contraction of the 4x4 map) + relu
        # a: (C, 16), columns in recursive-quadrant order matching wf packing.
        row_iota = jax.lax.broadcasted_iota(jnp.int32, (1, C), 1)
        yf = jnp.zeros((1, C), dtype=jnp.float32)
        for c in range(C):
            pick = (row_iota == c).astype(jnp.float32)     # (1, C) one-hot
            row = jnp.dot(pick, a, preferred_element_type=jnp.float32)  # (1,16)
            yf = yf + jnp.dot(row, wf_ref[c],
                              preferred_element_type=jnp.float32)       # (1, C)
        h = jnp.maximum(yf + bf_ref[...], 0.0)             # (1, C)

        # ---- MLP head (Linear+ReLU x5, then Linear(8 -> 1)), all in VMEM
        enc = h
        for k in range(n_mlp):
            w = mlp_refs[2 * k][...]
            b = mlp_refs[2 * k + 1][...]
            h = jnp.dot(h, w, preferred_element_type=jnp.float32) + b
            if k < n_mlp - 1:
                h = jnp.maximum(h, 0.0)
                if h.shape[-1] != 1:                       # mirror torch check
                    enc = h

        out_ref[0] = h.astype(out_ref.dtype)               # (1, 1)
        enc_ref[0] = enc.astype(enc_ref.dtype)             # (1, enc_dim)

    return kernel


# ----------------------------------------------------------------------------
# Parameter init (PyTorch-style) and packing for the fused kernel
# ----------------------------------------------------------------------------
def init_params(key, hg_feat, num_feat=(128, 64, 32, 16, 8), out_feat=1):
    """Raw (torch-layout) parameters."""
    n_conv = 4  # ConvolutionHourglassFeatureExtractor(depth=5) -> 4 stride-2 convs
    keys = jax.random.split(key, 2 * (n_conv + 1) + 2 * (len(num_feat) + 1))
    ki = iter(keys)

    def uniform(k, shape, fan_in):
        bound = 1.0 / (fan_in ** 0.5)
        return jax.random.uniform(k, shape, jnp.float32, -bound, bound)

    hg_conv = []
    for _ in range(n_conv):
        fan_in = hg_feat * 2 * 2
        w = uniform(next(ki), (hg_feat, hg_feat, 2, 2), fan_in)
        b = uniform(next(ki), (hg_feat,), fan_in)
        hg_conv.append((w, b))

    fan_in = hg_feat * 4 * 4
    wf = uniform(next(ki), (hg_feat, hg_feat, 4, 4), fan_in)
    bf = uniform(next(ki), (hg_feat,), fan_in)

    mlp = []
    in_f = hg_feat
    for of in num_feat:
        w = uniform(next(ki), (of, in_f), in_f)            # torch Linear: (out, in)
        b = uniform(next(ki), (of,), in_f)
        mlp.append((w, b))
        in_f = of
    wl = uniform(next(ki), (out_feat, in_f), in_f)
    bl = uniform(next(ki), (out_feat,), in_f)

    return dict(hg_conv=hg_conv, hg_conv_final=(wf, bf), mlp=mlp,
                mlp_final=(wl, bl))


def pack_params(raw):
    """Pack raw torch-layout params into the layouts the fused kernel expects."""
    n_conv = len(raw['hg_conv'])
    C = int(np.asarray(raw['hg_conv'][0][0]).shape[0])

    wq = np.zeros((4 * n_conv, C, C), np.float32)          # per-stage, per-(kh,kw)
    cb = np.zeros((n_conv, C, 1), np.float32)
    for i, (w, b) in enumerate(raw['hg_conv']):
        w_np = np.asarray(w)
        for q in range(4):
            wq[i * 4 + q] = w_np[:, :, q // 2, q % 2]      # (C_out, C_in)
        cb[i] = np.asarray(b).reshape(C, 1)

    wf_raw, bf_raw = raw['hg_conv_final']
    wf_np = np.asarray(wf_raw)                             # (C_out, C_in, 4, 4)
    wf = np.zeros((C, 16, C), np.float32)                  # [c_in, lane, c_out]
    for h in range(4):
        for w_ in range(4):
            n = _lane_index(4, h, w_)
            wf[:, n, :] = wf_np[:, :, h, w_].T
    bf = np.asarray(bf_raw).reshape(1, C).astype(np.float32)

    mlp_w, mlp_b = [], []
    for (w, b) in raw['mlp']:
        mlp_w.append(jnp.asarray(np.asarray(w).T))         # (in, out)
        mlp_b.append(jnp.asarray(np.asarray(b).reshape(1, -1)))
    wl, bl = raw['mlp_final']
    mlp_w.append(jnp.asarray(np.asarray(wl).T))
    mlp_b.append(jnp.asarray(np.asarray(bl).reshape(1, -1)))

    return dict(wq=jnp.asarray(wq), cb=jnp.asarray(cb), wf=jnp.asarray(wf),
                bf=jnp.asarray(bf), mlp_w=mlp_w, mlp_b=mlp_b)


# ----------------------------------------------------------------------------
# Forward pass (LearnLossActive, original=False)
# ----------------------------------------------------------------------------
def learn_loss_active_forward(x, packed, hg_feat_shape=(64, 32, 16, 8, 4)):
    """x: (B, C, L) float32, L = sum(s*s).  Returns (out (B,1), encodings (B,8))."""
    B, C, L = x.shape
    sizes = tuple(hg_feat_shape)
    assert L == sum(s * s for s in sizes)
    assert sizes[-1] == 4, "final conv of the extractor is 4x4"
    n_stage = len(sizes) - 1

    # One-time layout prep: chunk split + reversed-Morton lane permutation
    # (one fused gather per level; everything after this is inside the kernel).
    chunks = []
    border = 0
    for s in sizes:
        ch = jax.lax.slice_in_dim(x, border, border + s * s, axis=2)
        perm = jnp.asarray(_rev_morton_perm(s))
        chunks.append(jnp.take(ch, perm, axis=2))          # (B, C, s*s)
        border += s * s

    mlp_w, mlp_b = packed['mlp_w'], packed['mlp_b']
    n_mlp = len(mlp_w)
    enc_dim = int(mlp_w[-2].shape[1])                      # 8 for the default cfg

    inputs = list(chunks) + [packed['wq'], packed['cb'], packed['wf'], packed['bf']]
    for w_, b_ in zip(mlp_w, mlp_b):
        inputs.extend([w_, b_])

    def chunk_spec(arr):
        return pl.BlockSpec((1,) + tuple(arr.shape[1:]), lambda i: (i, 0, 0))

    def const_spec(arr):
        zeros = (0,) * arr.ndim
        return pl.BlockSpec(tuple(arr.shape), lambda i, zeros=zeros: zeros)

    in_specs = [chunk_spec(c) for c in chunks]
    in_specs += [const_spec(a) for a in inputs[len(chunks):]]

    out_shape = (jax.ShapeDtypeStruct((B, 1, 1), x.dtype),
                 jax.ShapeDtypeStruct((B, 1, enc_dim), x.dtype))
    out_specs = (pl.BlockSpec((1, 1, 1), lambda i: (i, 0, 0)),
                 pl.BlockSpec((1, 1, enc_dim), lambda i: (i, 0, 0)))

    kernel = _make_kernel(C, n_stage, n_mlp)
    out3, enc3 = pl.pallas_call(
        kernel,
        grid=(B,),
        out_shape=out_shape,
        in_specs=in_specs,
        out_specs=out_specs,
        compiler_params=pltpu.CompilerParams(
            dimension_semantics=("parallel",)),
    )(*inputs)

    return out3.reshape(B, 1), enc3.reshape(B, enc_dim)


# ----------------------------------------------------------------------------
# Pure-numpy (float64) reference of the PyTorch module, for verification
# ----------------------------------------------------------------------------
def reference_forward_np(x, raw, hg_feat_shape):
    x = np.asarray(x, np.float64)
    B, C, L = x.shape
    conv_x, border = [], 0
    for s in hg_feat_shape:
        conv_x.append(x[:, :, border:border + s * s].reshape(B, C, s, s))
        border += s * s

    x_ = conv_x[0]
    for i, (w, b) in enumerate(raw['hg_conv']):
        w = np.asarray(w, np.float64)
        b = np.asarray(b, np.float64)
        y = None
        for kh in range(2):
            for kw in range(2):
                t = np.einsum('oc,bchw->bohw', w[:, :, kh, kw],
                              x_[:, :, kh::2, kw::2])
                y = t if y is None else y + t
        y = np.maximum(y + b[None, :, None, None], 0.0)
        x_ = conv_x[i + 1] + y

    wf, bf = raw['hg_conv_final']
    wf = np.asarray(wf, np.float64)
    bf = np.asarray(bf, np.float64)
    h = np.einsum('ochw,bchw->bo', wf, x_) + bf[None, :]
    h = np.maximum(h, 0.0)

    enc = None
    for (w, b) in raw['mlp']:
        w = np.asarray(w, np.float64)
        b = np.asarray(b, np.float64)
        h = np.maximum(h @ w.T + b[None, :], 0.0)
        if h.shape[-1] != 1:
            enc = h
    wl, bl = raw['mlp_final']
    out = h @ np.asarray(wl, np.float64).T + np.asarray(bl, np.float64)[None, :]
    return out, enc


if __name__ == "__main__":
    key = jax.random.PRNGKey(0)
    B, hg_feat = 2, 4
    hg_feat_shape = (64, 32, 16, 8, 4)
    L = sum(s * s for s in hg_feat_shape)  # 5456

    k_in, k_p = jax.random.split(key)
    x = jax.random.normal(k_in, (B, hg_feat, L), dtype=jnp.float32)
    raw = init_params(k_p, hg_feat)
    packed = pack_params(raw)

    fwd = jax.jit(functools.partial(learn_loss_active_forward,
                                    hg_feat_shape=hg_feat_shape))
    out, enc = fwd(x, packed)
    out = jax.block_until_ready(out)
    enc = jax.block_until_ready(enc)

    assert out.shape == (B, 1), out.shape
    assert enc.shape == (B, 8), enc.shape

    ref_out, ref_enc = reference_forward_np(np.asarray(x), raw, hg_feat_shape)
    np.testing.assert_allclose(np.asarray(out), ref_out, rtol=2e-2, atol=2e-2)
    np.testing.assert_allclose(np.asarray(enc), ref_enc, rtol=2e-2, atol=2e-2)

    print("KERNEL_OK")
</pallas_src>

<mosaic_0001>
module attributes {stable_mosaic.version = 11 : i64} {
  func.func private @main(%arg0: i32) attributes {dimension_semantics = [#tpu.dimension_semantics<core_parallel>], iteration_bounds = array<i64: 2>, tpu.core_type = #tpu.core_type<sc_scalar_subcore>, window_params = []} {
    return
  }
}

module attributes {stable_mosaic.version = 11 : i64} {
  func.func private @main(%arg0: i32) attributes {dimension_semantics = [#tpu.dimension_semantics<core_parallel>], iteration_bounds = array<i64: 2>, tpu.core_type = #tpu.core_type<sc_scalar_subcore>, window_params = []} {
    return
  }
}

module attributes {stable_mosaic.version = 11 : i64} {
  func.func @kernel(%arg0: i32, %arg1: memref<1x4x4096xf32, #tpu.memory_space<vmem>>, %arg2: memref<1x4x1024xf32, #tpu.memory_space<vmem>>, %arg3: memref<1x4x256xf32, #tpu.memory_space<vmem>>, %arg4: memref<1x4x64xf32, #tpu.memory_space<vmem>>, %arg5: memref<1x4x16xf32, #tpu.memory_space<vmem>>, %arg6: memref<16x4x4xf32, #tpu.memory_space<vmem>>, %arg7: memref<4x4x1xf32, #tpu.memory_space<vmem>>, %arg8: memref<4x16x4xf32, #tpu.memory_space<vmem>>, %arg9: memref<1x4xf32, #tpu.memory_space<vmem>>, %arg10: memref<4x128xf32, #tpu.memory_space<vmem>>, %arg11: memref<1x128xf32, #tpu.memory_space<vmem>>, %arg12: memref<128x64xf32, #tpu.memory_space<vmem>>, %arg13: memref<1x64xf32, #tpu.memory_space<vmem>>, %arg14: memref<64x32xf32, #tpu.memory_space<vmem>>, %arg15: memref<1x32xf32, #tpu.memory_space<vmem>>, %arg16: memref<32x16xf32, #tpu.memory_space<vmem>>, %arg17: memref<1x16xf32, #tpu.memory_space<vmem>>, %arg18: memref<16x8xf32, #tpu.memory_space<vmem>>, %arg19: memref<1x8xf32, #tpu.memory_space<vmem>>, %arg20: memref<8x1xf32, #tpu.memory_space<vmem>>, %arg21: memref<1x1xf32, #tpu.memory_space<vmem>>, %arg22: memref<1x1x1xf32, #tpu.memory_space<vmem>>, %arg23: memref<1x1x8xf32, #tpu.memory_space<vmem>>) attributes {dimension_semantics = [#tpu.dimension_semantics<parallel>], iteration_bounds = array<i64: 2>, scalar_prefetch = 0 : i64, scratch_operands = 0 : i64, tpu.core_type = #tpu.core_type<tc>, window_params = [{transform_indices = @transform_0, window_bounds = array<i64: 1, 4, 4096>}, {transform_indices = @transform_1, window_bounds = array<i64: 1, 4, 1024>}, {transform_indices = @transform_2, window_bounds = array<i64: 1, 4, 256>}, {transform_indices = @transform_3, window_bounds = array<i64: 1, 4, 64>}, {transform_indices = @transform_4, window_bounds = array<i64: 1, 4, 16>}, {pipeline_mode = #tpu.pipeline_mode<synchronous>, transform_indices = @transform_5, window_bounds = array<i64: 16, 4, 4>}, {pipeline_mode = #tpu.pipeline_mode<synchronous>, transform_indices = @transform_6, window_bounds = array<i64: 4, 4, 1>}, {pipeline_mode = #tpu.pipeline_mode<synchronous>, transform_indices = @transform_7, window_bounds = array<i64: 4, 16, 4>}, {pipeline_mode = #tpu.pipeline_mode<synchronous>, transform_indices = @transform_8, window_bounds = array<i64: 1, 4>}, {pipeline_mode = #tpu.pipeline_mode<synchronous>, transform_indices = @transform_9, window_bounds = array<i64: 4, 128>}, {pipeline_mode = #tpu.pipeline_mode<synchronous>, transform_indices = @transform_10, window_bounds = array<i64: 1, 128>}, {pipeline_mode = #tpu.pipeline_mode<synchronous>, transform_indices = @transform_11, window_bounds = array<i64: 128, 64>}, {pipeline_mode = #tpu.pipeline_mode<synchronous>, transform_indices = @transform_12, window_bounds = array<i64: 1, 64>}, {pipeline_mode = #tpu.pipeline_mode<synchronous>, transform_indices = @transform_13, window_bounds = array<i64: 64, 32>}, {pipeline_mode = #tpu.pipeline_mode<synchronous>, transform_indices = @transform_14, window_bounds = array<i64: 1, 32>}, {pipeline_mode = #tpu.pipeline_mode<synchronous>, transform_indices = @transform_15, window_bounds = array<i64: 32, 16>}, {pipeline_mode = #tpu.pipeline_mode<synchronous>, transform_indices = @transform_16, window_bounds = array<i64: 1, 16>}, {pipeline_mode = #tpu.pipeline_mode<synchronous>, transform_indices = @transform_17, window_bounds = array<i64: 16, 8>}, {pipeline_mode = #tpu.pipeline_mode<synchronous>, transform_indices = @transform_18, window_bounds = array<i64: 1, 8>}, {pipeline_mode = #tpu.pipeline_mode<synchronous>, transform_indices = @transform_19, window_bounds = array<i64: 8, 1>}, {pipeline_mode = #tpu.pipeline_mode<synchronous>, transform_indices = @transform_20, window_bounds = array<i64: 1, 1>}, {transform_indices = @transform_21, window_bounds = array<i64: 1, 1, 1>}, {transform_indices = @transform_22, window_bounds = array<i64: 1, 1, 8>}]} {
    %c0 = arith.constant 0 : index
    %c0_0 = arith.constant 0 : index
    %c0_1 = arith.constant 0 : index
    %0 = vector.load %arg1[%c0, %c0_0, %c0_1] : memref<1x4x4096xf32, #tpu.memory_space<vmem>>, vector<1x4x4096xf32>
    %1 = vector.shape_cast %0 : vector<1x4x4096xf32> to vector<4x4096xf32>
    %cst = arith.constant 0.000000e+00 : f32
    %2 = vector.broadcast %cst : f32 to vector<4x1024xf32>
    %3 = vector.extract_strided_slice %1 {offsets = [0, 0], sizes = [4, 1024], strides = [1, 1]} : vector<4x4096xf32> to vector<4x1024xf32>
    %c0_2 = arith.constant 0 : index
    %c0_3 = arith.constant 0 : index
    %c0_4 = arith.constant 0 : index
    %4 = vector.load %arg6[%c0_2, %c0_3, %c0_4] : memref<16x4x4xf32, #tpu.memory_space<vmem>>, vector<1x4x4xf32>
    %5 = vector.shape_cast %4 : vector<1x4x4xf32> to vector<4x4xf32>
    %cst_5 = arith.constant dense<0.000000e+00> : vector<4x1024xf32>
    %6 = tpu.matmul %5, %3, %cst_5 {dimension_numbers = #tpu.dot_dimension_numbers<[1], [0], [0], [1], [0, 0, 1, 1], [], []>} : vector<4x4xf32>, vector<4x1024xf32>, vector<4x1024xf32> -> vector<4x1024xf32>
    %7 = arith.addf %2, %6 : vector<4x1024xf32>
    %8 = vector.extract_strided_slice %1 {offsets = [0, 1024], sizes = [4, 1024], strides = [1, 1]} : vector<4x4096xf32> to vector<4x1024xf32>
    %c1 = arith.constant 1 : index
    %c0_6 = arith.constant 0 : index
    %c0_7 = arith.constant 0 : index
    %9 = vector.load %arg6[%c1, %c0_6, %c0_7] : memref<16x4x4xf32, #tpu.memory_space<vmem>>, vector<1x4x4xf32>
    %10 = vector.shape_cast %9 : vector<1x4x4xf32> to vector<4x4xf32>
    %cst_8 = arith.constant dense<0.000000e+00> : vector<4x1024xf32>
    %11 = tpu.matmul %10, %8, %cst_8 {dimension_numbers = #tpu.dot_dimension_numbers<[1], [0], [0], [1], [0, 0, 1, 1], [], []>} : vector<4x4xf32>, vector<4x1024xf32>, vector<4x1024xf32> -> vector<4x1024xf32>
    %12 = arith.addf %7, %11 : vector<4x1024xf32>
    %13 = vector.extract_strided_slice %1 {offsets = [0, 2048], sizes = [4, 1024], strides = [1, 1]} : vector<4x4096xf32> to vector<4x1024xf32>
    %c2 = arith.constant 2 : index
    %c0_9 = arith.constant 0 : index
    %c0_10 = arith.constant 0 : index
    %14 = vector.load %arg6[%c2, %c0_9, %c0_10] : memref<16x4x4xf32, #tpu.memory_space<vmem>>, vector<1x4x4xf32>
    %15 = vector.shape_cast %14 : vector<1x4x4xf32> to vector<4x4xf32>
    %cst_11 = arith.constant dense<0.000000e+00> : vector<4x1024xf32>
    %16 = tpu.matmul %15, %13, %cst_11 {dimension_numbers = #tpu.dot_dimension_numbers<[1], [0], [0], [1], [0, 0, 1, 1], [], []>} : vector<4x4xf32>, vector<4x1024xf32>, vector<4x1024xf32> -> vector<4x1024xf32>
    %17 = arith.addf %12, %16 : vector<4x1024xf32>
    %18 = vector.extract_strided_slice %1 {offsets = [0, 3072], sizes = [4, 1024], strides = [1, 1]} : vector<4x4096xf32> to vector<4x1024xf32>
    %c3 = arith.constant 3 : index
    %c0_12 = arith.constant 0 : index
    %c0_13 = arith.constant 0 : index
    %19 = vector.load %arg6[%c3, %c0_12, %c0_13] : memref<16x4x4xf32, #tpu.memory_space<vmem>>, vector<1x4x4xf32>
    %20 = vector.shape_cast %19 : vector<1x4x4xf32> to vector<4x4xf32>
    %cst_14 = arith.constant dense<0.000000e+00> : vector<4x1024xf32>
    %21 = tpu.matmul %20, %18, %cst_14 {dimension_numbers = #tpu.dot_dimension_numbers<[1], [0], [0], [1], [0, 0, 1, 1], [], []>} : vector<4x4xf32>, vector<4x1024xf32>, vector<4x1024xf32> -> vector<4x1024xf32>
    %22 = arith.addf %17, %21 : vector<4x1024xf32>
    %c0_15 = arith.constant 0 : index
    %c0_16 = arith.constant 0 : index
    %c0_17 = arith.constant 0 : index
    %23 = vector.load %arg7[%c0_15, %c0_16, %c0_17] : memref<4x4x1xf32, #tpu.memory_space<vmem>>, vector<1x4x1xf32>
    %24 = vector.shape_cast %23 : vector<1x4x1xf32> to vector<4x1xf32>
    %25 = vector.broadcast %24 : vector<4x1xf32> to vector<4x1024xf32>
    %26 = arith.addf %22, %25 : vector<4x1024xf32>
    %cst_18 = arith.constant 0.000000e+00 : f32
    %27 = vector.broadcast %cst_18 : f32 to vector<4x1024xf32>
    %28 = arith.maximumf %26, %27 : vector<4x1024xf32>
    %c0_19 = arith.constant 0 : index
    %c0_20 = arith.constant 0 : index
    %c0_21 = arith.constant 0 : index
    %29 = vector.load %arg2[%c0_19, %c0_20, %c0_21] : memref<1x4x1024xf32, #tpu.memory_space<vmem>>, vector<1x4x1024xf32>
    %30 = vector.shape_cast %29 : vector<1x4x1024xf32> to vector<4x1024xf32>
    %31 = arith.addf %30, %28 : vector<4x1024xf32>
    %cst_22 = arith.constant 0.000000e+00 : f32
    %32 = vector.broadcast %cst_22 : f32 to vector<4x256xf32>
    %33 = vector.extract_strided_slice %31 {offsets = [0, 0], sizes = [4, 256], strides = [1, 1]} : vector<4x1024xf32> to vector<4x256xf32>
    %c4 = arith.constant 4 : index
    %c0_23 = arith.constant 0 : index
    %c0_24 = arith.constant 0 : index
    %34 = vector.load %arg6[%c4, %c0_23, %c0_24] : memref<16x4x4xf32, #tpu.memory_space<vmem>>, vector<1x4x4xf32>
    %35 = vector.shape_cast %34 : vector<1x4x4xf32> to vector<4x4xf32>
    %cst_25 = arith.constant dense<0.000000e+00> : vector<4x256xf32>
    %36 = tpu.matmul %35, %33, %cst_25 {dimension_numbers = #tpu.dot_dimension_numbers<[1], [0], [0], [1], [0, 0, 1, 1], [], []>} : vector<4x4xf32>, vector<4x256xf32>, vector<4x256xf32> -> vector<4x256xf32>
    %37 = arith.addf %32, %36 : vector<4x256xf32>
    %38 = vector.extract_strided_slice %31 {offsets = [0, 256], sizes = [4, 256], strides = [1, 1]} : vector<4x1024xf32> to vector<4x256xf32>
    %c5 = arith.constant 5 : index
    %c0_26 = arith.constant 0 : index
    %c0_27 = arith.constant 0 : index
    %39 = vector.load %arg6[%c5, %c0_26, %c0_27] : memref<16x4x4xf32, #tpu.memory_space<vmem>>, vector<1x4x4xf32>
    %40 = vector.shape_cast %39 : vector<1x4x4xf32> to vector<4x4xf32>
    %cst_28 = arith.constant dense<0.000000e+00> : vector<4x256xf32>
    %41 = tpu.matmul %40, %38, %cst_28 {dimension_numbers = #tpu.dot_dimension_numbers<[1], [0], [0], [1], [0, 0, 1, 1], [], []>} : vector<4x4xf32>, vector<4x256xf32>, vector<4x256xf32> -> vector<4x256xf32>
    %42 = arith.addf %37, %41 : vector<4x256xf32>
    %43 = vector.extract_strided_slice %31 {offsets = [0, 512], sizes = [4, 256], strides = [1, 1]} : vector<4x1024xf32> to vector<4x256xf32>
    %c6 = arith.constant 6 : index
    %c0_29 = arith.constant 0 : index
    %c0_30 = arith.constant 0 : index
    %44 = vector.load %arg6[%c6, %c0_29, %c0_30] : memref<16x4x4xf32, #tpu.memory_space<vmem>>, vector<1x4x4xf32>
    %45 = vector.shape_cast %44 : vector<1x4x4xf32> to vector<4x4xf32>
    %cst_31 = arith.constant dense<0.000000e+00> : vector<4x256xf32>
    %46 = tpu.matmul %45, %43, %cst_31 {dimension_numbers = #tpu.dot_dimension_numbers<[1], [0], [0], [1], [0, 0, 1, 1], [], []>} : vector<4x4xf32>, vector<4x256xf32>, vector<4x256xf32> -> vector<4x256xf32>
    %47 = arith.addf %42, %46 : vector<4x256xf32>
    %48 = vector.extract_strided_slice %31 {offsets = [0, 768], sizes = [4, 256], strides = [1, 1]} : vector<4x1024xf32> to vector<4x256xf32>
    %c7 = arith.constant 7 : index
    %c0_32 = arith.constant 0 : index
    %c0_33 = arith.constant 0 : index
    %49 = vector.load %arg6[%c7, %c0_32, %c0_33] : memref<16x4x4xf32, #tpu.memory_space<vmem>>, vector<1x4x4xf32>
    %50 = vector.shape_cast %49 : vector<1x4x4xf32> to vector<4x4xf32>
    %cst_34 = arith.constant dense<0.000000e+00> : vector<4x256xf32>
    %51 = tpu.matmul %50, %48, %cst_34 {dimension_numbers = #tpu.dot_dimension_numbers<[1], [0], [0], [1], [0, 0, 1, 1], [], []>} : vector<4x4xf32>, vector<4x256xf32>, vector<4x256xf32> -> vector<4x256xf32>
    %52 = arith.addf %47, %51 : vector<4x256xf32>
    %c1_35 = arith.constant 1 : index
    %c0_36 = arith.constant 0 : index
    %c0_37 = arith.constant 0 : index
    %53 = vector.load %arg7[%c1_35, %c0_36, %c0_37] : memref<4x4x1xf32, #tpu.memory_space<vmem>>, vector<1x4x1xf32>
    %54 = vector.shape_cast %53 : vector<1x4x1xf32> to vector<4x1xf32>
    %55 = vector.broadcast %54 : vector<4x1xf32> to vector<4x256xf32>
    %56 = arith.addf %52, %55 : vector<4x256xf32>
    %cst_38 = arith.constant 0.000000e+00 : f32
    %57 = vector.broadcast %cst_38 : f32 to vector<4x256xf32>
    %58 = arith.maximumf %56, %57 : vector<4x256xf32>
    %c0_39 = arith.constant 0 : index
    %c0_40 = arith.constant 0 : index
    %c0_41 = arith.constant 0 : index
    %59 = vector.load %arg3[%c0_39, %c0_40, %c0_41] : memref<1x4x256xf32, #tpu.memory_space<vmem>>, vector<1x4x256xf32>
    %60 = vector.shape_cast %59 : vector<1x4x256xf32> to vector<4x256xf32>
    %61 = arith.addf %60, %58 : vector<4x256xf32>
    %cst_42 = arith.constant 0.000000e+00 : f32
    %62 = vector.broadcast %cst_42 : f32 to vector<4x64xf32>
    %63 = tpu.iota {dimensions = array<i32: 0>} : vector<256x64xi32>
    %64 = tpu.iota {dimensions = array<i32: 1>} : vector<256x64xi32>
    %c0_i32 = arith.constant 0 : i32
    %65 = vector.broadcast %c0_i32 : i32 to vector<256x64xi32>
    %66 = arith.addi %64, %65 : vector<256x64xi32>
    %67 = arith.cmpi eq, %63, %66 : vector<256x64xi32>
    %68 = arith.extui %67 : vector<256x64xi1> to vector<256x64xi32>
    %69 = arith.sitofp %68 : vector<256x64xi32> to vector<256x64xf32>
    %cst_43 = arith.constant dense<0.000000e+00> : vector<4x64xf32>
    %70 = tpu.matmul %61, %69, %cst_43 {dimension_numbers = #tpu.dot_dimension_numbers<[1], [0], [0], [1], [0, 0, 1, 1], [], []>} : vector<4x256xf32>, vector<256x64xf32>, vector<4x64xf32> -> vector<4x64xf32>
    %c8 = arith.constant 8 : index
    %c0_44 = arith.constant 0 : index
    %c0_45 = arith.constant 0 : index
    %71 = vector.load %arg6[%c8, %c0_44, %c0_45] : memref<16x4x4xf32, #tpu.memory_space<vmem>>, vector<1x4x4xf32>
    %72 = vector.shape_cast %71 : vector<1x4x4xf32> to vector<4x4xf32>
    %cst_46 = arith.constant dense<0.000000e+00> : vector<4x64xf32>
    %73 = tpu.matmul %72, %70, %cst_46 {dimension_numbers = #tpu.dot_dimension_numbers<[1], [0], [0], [1], [0, 0, 1, 1], [], []>} : vector<4x4xf32>, vector<4x64xf32>, vector<4x64xf32> -> vector<4x64xf32>
    %74 = arith.addf %62, %73 : vector<4x64xf32>
    %c64_i32 = arith.constant 64 : i32
    %75 = vector.broadcast %c64_i32 : i32 to vector<256x64xi32>
    %76 = arith.addi %64, %75 : vector<256x64xi32>
    %77 = arith.cmpi eq, %63, %76 : vector<256x64xi32>
    %78 = arith.extui %77 : vector<256x64xi1> to vector<256x64xi32>
    %79 = arith.sitofp %78 : vector<256x64xi32> to vector<256x64xf32>
    %cst_47 = arith.constant dense<0.000000e+00> : vector<4x64xf32>
    %80 = tpu.matmul %61, %79, %cst_47 {dimension_numbers = #tpu.dot_dimension_numbers<[1], [0], [0], [1], [0, 0, 1, 1], [], []>} : vector<4x256xf32>, vector<256x64xf32>, vector<4x64xf32> -> vector<4x64xf32>
    %c9 = arith.constant 9 : index
    %c0_48 = arith.constant 0 : index
    %c0_49 = arith.constant 0 : index
    %81 = vector.load %arg6[%c9, %c0_48, %c0_49] : memref<16x4x4xf32, #tpu.memory_space<vmem>>, vector<1x4x4xf32>
    %82 = vector.shape_cast %81 : vector<1x4x4xf32> to vector<4x4xf32>
    %cst_50 = arith.constant dense<0.000000e+00> : vector<4x64xf32>
    %83 = tpu.matmul %82, %80, %cst_50 {dimension_numbers = #tpu.dot_dimension_numbers<[1], [0], [0], [1], [0, 0, 1, 1], [], []>} : vector<4x4xf32>, vector<4x64xf32>, vector<4x64xf32> -> vector<4x64xf32>
    %84 = arith.addf %74, %83 : vector<4x64xf32>
    %c128_i32 = arith.constant 128 : i32
    %85 = vector.broadcast %c128_i32 : i32 to vector<256x64xi32>
    %86 = arith.addi %64, %85 : vector<256x64xi32>
    %87 = arith.cmpi eq, %63, %86 : vector<256x64xi32>
    %88 = arith.extui %87 : vector<256x64xi1> to vector<256x64xi32>
    %89 = arith.sitofp %88 : vector<256x64xi32> to vector<256x64xf32>
    %cst_51 = arith.constant dense<0.000000e+00> : vector<4x64xf32>
    %90 = tpu.matmul %61, %89, %cst_51 {dimension_numbers = #tpu.dot_dimension_numbers<[1], [0], [0], [1], [0, 0, 1, 1], [], []>} : vector<4x256xf32>, vector<256x64xf32>, vector<4x64xf32> -> vector<4x64xf32>
    %c10 = arith.constant 10 : index
    %c0_52 = arith.constant 0 : index
    %c0_53 = arith.constant 0 : index
    %91 = vector.load %arg6[%c10, %c0_52, %c0_53] : memref<16x4x4xf32, #tpu.memory_space<vmem>>, vector<1x4x4xf32>
    %92 = vector.shape_cast %91 : vector<1x4x4xf32> to vector<4x4xf32>
    %cst_54 = arith.constant dense<0.000000e+00> : vector<4x64xf32>
    %93 = tpu.matmul %92, %90, %cst_54 {dimension_numbers = #tpu.dot_dimension_numbers<[1], [0], [0], [1], [0, 0, 1, 1], [], []>} : vector<4x4xf32>, vector<4x64xf32>, vector<4x64xf32> -> vector<4x64xf32>
    %94 = arith.addf %84, %93 : vector<4x64xf32>
    %c192_i32 = arith.constant 192 : i32
    %95 = vector.broadcast %c192_i32 : i32 to vector<256x64xi32>
    %96 = arith.addi %64, %95 : vector<256x64xi32>
    %97 = arith.cmpi eq, %63, %96 : vector<256x64xi32>
    %98 = arith.extui %97 : vector<256x64xi1> to vector<256x64xi32>
    %99 = arith.sitofp %98 : vector<256x64xi32> to vector<256x64xf32>
    %cst_55 = arith.constant dense<0.000000e+00> : vector<4x64xf32>
    %100 = tpu.matmul %61, %99, %cst_55 {dimension_numbers = #tpu.dot_dimension_numbers<[1], [0], [0], [1], [0, 0, 1, 1], [], []>} : vector<4x256xf32>, vector<256x64xf32>, vector<4x64xf32> -> vector<4x64xf32>
    %c11 = arith.constant 11 : index
    %c0_56 = arith.constant 0 : index
    %c0_57 = arith.constant 0 : index
    %101 = vector.load %arg6[%c11, %c0_56, %c0_57] : memref<16x4x4xf32, #tpu.memory_space<vmem>>, vector<1x4x4xf32>
    %102 = vector.shape_cast %101 : vector<1x4x4xf32> to vector<4x4xf32>
    %cst_58 = arith.constant dense<0.000000e+00> : vector<4x64xf32>
    %103 = tpu.matmul %102, %100, %cst_58 {dimension_numbers = #tpu.dot_dimension_numbers<[1], [0], [0], [1], [0, 0, 1, 1], [], []>} : vector<4x4xf32>, vector<4x64xf32>, vector<4x64xf32> -> vector<4x64xf32>
    %104 = arith.addf %94, %103 : vector<4x64xf32>
    %c2_59 = arith.constant 2 : index
    %c0_60 = arith.constant 0 : index
    %c0_61 = arith.constant 0 : index
    %105 = vector.load %arg7[%c2_59, %c0_60, %c0_61] : memref<4x4x1xf32, #tpu.memory_space<vmem>>, vector<1x4x1xf32>
    %106 = vector.shape_cast %105 : vector<1x4x1xf32> to vector<4x1xf32>
    %107 = vector.broadcast %106 : vector<4x1xf32> to vector<4x64xf32>
    %108 = arith.addf %104, %107 : vector<4x64xf32>
    %cst_62 = arith.constant 0.000000e+00 : f32
    %109 = vector.broadcast %cst_62 : f32 to vector<4x64xf32>
    %110 = arith.maximumf %108, %109 : vector<4x64xf32>
    %c0_63 = arith.constant 0 : index
    %c0_64 = arith.constant 0 : index
    %c0_65 = arith.constant 0 : index
    %111 = vector.load %arg4[%c0_63, %c0_64, %c0_65] : memref<1x4x64xf32, #tpu.memory_space<vmem>>, vector<1x4x64xf32>
    %112 = vector.shape_cast %111 : vector<1x4x64xf32> to vector<4x64xf32>
    %113 = arith.addf %112, %110 : vector<4x64xf32>
    %cst_66 = arith.constant 0.000000e+00 : f32
    %114 = vector.broadcast %cst_66 : f32 to vector<4x16xf32>
    %115 = tpu.iota {dimensions = array<i32: 0>} : vector<64x16xi32>
    %116 = tpu.iota {dimensions = array<i32: 1>} : vector<64x16xi32>
    %c0_i32_67 = arith.constant 0 : i32
    %117 = vector.broadcast %c0_i32_67 : i32 to vector<64x16xi32>
    %118 = arith.addi %116, %117 : vector<64x16xi32>
    %119 = arith.cmpi eq, %115, %118 : vector<64x16xi32>
    %120 = arith.extui %119 : vector<64x16xi1> to vector<64x16xi32>
    %121 = arith.sitofp %120 : vector<64x16xi32> to vector<64x16xf32>
    %cst_68 = arith.constant dense<0.000000e+00> : vector<4x16xf32>
    %122 = tpu.matmul %113, %121, %cst_68 {dimension_numbers = #tpu.dot_dimension_numbers<[1], [0], [0], [1], [0, 0, 1, 1], [], []>} : vector<4x64xf32>, vector<64x16xf32>, vector<4x16xf32> -> vector<4x16xf32>
    %c12 = arith.constant 12 : index
    %c0_69 = arith.constant 0 : index
    %c0_70 = arith.constant 0 : index
    %123 = vector.load %arg6[%c12, %c0_69, %c0_70] : memref<16x4x4xf32, #tpu.memory_space<vmem>>, vector<1x4x4xf32>
    %124 = vector.shape_cast %123 : vector<1x4x4xf32> to vector<4x4xf32>
    %cst_71 = arith.constant dense<0.000000e+00> : vector<4x16xf32>
    %125 = tpu.matmul %124, %122, %cst_71 {dimension_numbers = #tpu.dot_dimension_numbers<[1], [0], [0], [1], [0, 0, 1, 1], [], []>} : vector<4x4xf32>, vector<4x16xf32>, vector<4x16xf32> -> vector<4x16xf32>
    %126 = arith.addf %114, %125 : vector<4x16xf32>
    %c16_i32 = arith.constant 16 : i32
    %127 = vector.broadcast %c16_i32 : i32 to vector<64x16xi32>
    %128 = arith.addi %116, %127 : vector<64x16xi32>
    %129 = arith.cmpi eq, %115, %128 : vector<64x16xi32>
    %130 = arith.extui %129 : vector<64x16xi1> to vector<64x16xi32>
    %131 = arith.sitofp %130 : vector<64x16xi32> to vector<64x16xf32>
    %cst_72 = arith.constant dense<0.000000e+00> : vector<4x16xf32>
    %132 = tpu.matmul %113, %131, %cst_72 {dimension_numbers = #tpu.dot_dimension_numbers<[1], [0], [0], [1], [0, 0, 1, 1], [], []>} : vector<4x64xf32>, vector<64x16xf32>, vector<4x16xf32> -> vector<4x16xf32>
    %c13 = arith.constant 13 : index
    %c0_73 = arith.constant 0 : index
    %c0_74 = arith.constant 0 : index
    %133 = vector.load %arg6[%c13, %c0_73, %c0_74] : memref<16x4x4xf32, #tpu.memory_space<vmem>>, vector<1x4x4xf32>
    %134 = vector.shape_cast %133 : vector<1x4x4xf32> to vector<4x4xf32>
    %cst_75 = arith.constant dense<0.000000e+00> : vector<4x16xf32>
    %135 = tpu.matmul %134, %132, %cst_75 {dimension_numbers = #tpu.dot_dimension_numbers<[1], [0], [0], [1], [0, 0, 1, 1], [], []>} : vector<4x4xf32>, vector<4x16xf32>, vector<4x16xf32> -> vector<4x16xf32>
    %136 = arith.addf %126, %135 : vector<4x16xf32>
    %c32_i32 = arith.constant 32 : i32
    %137 = vector.broadcast %c32_i32 : i32 to vector<64x16xi32>
    %138 = arith.addi %116, %137 : vector<64x16xi32>
    %139 = arith.cmpi eq, %115, %138 : vector<64x16xi32>
    %140 = arith.extui %139 : vector<64x16xi1> to vector<64x16xi32>
    %141 = arith.sitofp %140 : vector<64x16xi32> to vector<64x16xf32>
    %cst_76 = arith.constant dense<0.000000e+00> : vector<4x16xf32>
    %142 = tpu.matmul %113, %141, %cst_76 {dimension_numbers = #tpu.dot_dimension_numbers<[1], [0], [0], [1], [0, 0, 1, 1], [], []>} : vector<4x64xf32>, vector<64x16xf32>, vector<4x16xf32> -> vector<4x16xf32>
    %c14 = arith.constant 14 : index
    %c0_77 = arith.constant 0 : index
    %c0_78 = arith.constant 0 : index
    %143 = vector.load %arg6[%c14, %c0_77, %c0_78] : memref<16x4x4xf32, #tpu.memory_space<vmem>>, vector<1x4x4xf32>
    %144 = vector.shape_cast %143 : vector<1x4x4xf32> to vector<4x4xf32>
    %cst_79 = arith.constant dense<0.000000e+00> : vector<4x16xf32>
    %145 = tpu.matmul %144, %142, %cst_79 {dimension_numbers = #tpu.dot_dimension_numbers<[1], [0], [0], [1], [0, 0, 1, 1], [], []>} : vector<4x4xf32>, vector<4x16xf32>, vector<4x16xf32> -> vector<4x16xf32>
    %146 = arith.addf %136, %145 : vector<4x16xf32>
    %c48_i32 = arith.constant 48 : i32
    %147 = vector.broadcast %c48_i32 : i32 to vector<64x16xi32>
    %148 = arith.addi %116, %147 : vector<64x16xi32>
    %149 = arith.cmpi eq, %115, %148 : vector<64x16xi32>
    %150 = arith.extui %149 : vector<64x16xi1> to vector<64x16xi32>
    %151 = arith.sitofp %150 : vector<64x16xi32> to vector<64x16xf32>
    %cst_80 = arith.constant dense<0.000000e+00> : vector<4x16xf32>
    %152 = tpu.matmul %113, %151, %cst_80 {dimension_numbers = #tpu.dot_dimension_numbers<[1], [0], [0], [1], [0, 0, 1, 1], [], []>} : vector<4x64xf32>, vector<64x16xf32>, vector<4x16xf32> -> vector<4x16xf32>
    %c15 = arith.constant 15 : index
    %c0_81 = arith.constant 0 : index
    %c0_82 = arith.constant 0 : index
    %153 = vector.load %arg6[%c15, %c0_81, %c0_82] : memref<16x4x4xf32, #tpu.memory_space<vmem>>, vector<1x4x4xf32>
    %154 = vector.shape_cast %153 : vector<1x4x4xf32> to vector<4x4xf32>
    %cst_83 = arith.constant dense<0.000000e+00> : vector<4x16xf32>
    %155 = tpu.matmul %154, %152, %cst_83 {dimension_numbers = #tpu.dot_dimension_numbers<[1], [0], [0], [1], [0, 0, 1, 1], [], []>} : vector<4x4xf32>, vector<4x16xf32>, vector<4x16xf32> -> vector<4x16xf32>
    %156 = arith.addf %146, %155 : vector<4x16xf32>
    %c3_84 = arith.constant 3 : index
    %c0_85 = arith.constant 0 : index
    %c0_86 = arith.constant 0 : index
    %157 = vector.load %arg7[%c3_84, %c0_85, %c0_86] : memref<4x4x1xf32, #tpu.memory_space<vmem>>, vector<1x4x1xf32>
    %158 = vector.shape_cast %157 : vector<1x4x1xf32> to vector<4x1xf32>
    %159 = vector.broadcast %158 : vector<4x1xf32> to vector<4x16xf32>
    %160 = arith.addf %156, %159 : vector<4x16xf32>
    %cst_87 = arith.constant 0.000000e+00 : f32
    %161 = vector.broadcast %cst_87 : f32 to vector<4x16xf32>
    %162 = arith.maximumf %160, %161 : vector<4x16xf32>
    %c0_88 = arith.constant 0 : index
    %c0_89 = arith.constant 0 : index
    %c0_90 = arith.constant 0 : index
    %163 = vector.load %arg5[%c0_88, %c0_89, %c0_90] : memref<1x4x16xf32, #tpu.memory_space<vmem>>, vector<1x4x16xf32>
    %164 = vector.shape_cast %163 : vector<1x4x16xf32> to vector<4x16xf32>
    %165 = arith.addf %164, %162 : vector<4x16xf32>
    %166 = tpu.iota {dimensions = array<i32: 1>} : vector<1x4xi32>
    %cst_91 = arith.constant 0.000000e+00 : f32
    %167 = vector.broadcast %cst_91 : f32 to vector<1x4xf32>
    %c0_i32_92 = arith.constant 0 : i32
    %168 = vector.broadcast %c0_i32_92 : i32 to vector<1x4xi32>
    %169 = arith.cmpi eq, %166, %168 : vector<1x4xi32>
    %170 = arith.extui %169 : vector<1x4xi1> to vector<1x4xi32>
    %171 = arith.sitofp %170 : vector<1x4xi32> to vector<1x4xf32>
    %cst_93 = arith.constant dense<0.000000e+00> : vector<1x16xf32>
    %172 = tpu.matmul %171, %165, %cst_93 {dimension_numbers = #tpu.dot_dimension_numbers<[1], [0], [0], [1], [0, 0, 1, 1], [], []>} : vector<1x4xf32>, vector<4x16xf32>, vector<1x16xf32> -> vector<1x16xf32>
    %c0_94 = arith.constant 0 : index
    %c0_95 = arith.constant 0 : index
    %c0_96 = arith.constant 0 : index
    %173 = vector.load %arg8[%c0_94, %c0_95, %c0_96] : memref<4x16x4xf32, #tpu.memory_space<vmem>>, vector<1x16x4xf32>
    %174 = vector.shape_cast %173 : vector<1x16x4xf32> to vector<16x4xf32>
    %cst_97 = arith.constant dense<0.000000e+00> : vector<1x4xf32>
    %175 = tpu.matmul %172, %174, %cst_97 {dimension_numbers = #tpu.dot_dimension_numbers<[1], [0], [0], [1], [0, 0, 1, 1], [], []>} : vector<1x16xf32>, vector<16x4xf32>, vector<1x4xf32> -> vector<1x4xf32>
    %176 = arith.addf %167, %175 : vector<1x4xf32>
    %c1_i32 = arith.constant 1 : i32
    %177 = vector.broadcast %c1_i32 : i32 to vector<1x4xi32>
    %178 = arith.cmpi eq, %166, %177 : vector<1x4xi32>
    %179 = arith.extui %178 : vector<1x4xi1> to vector<1x4xi32>
    %180 = arith.sitofp %179 : vector<1x4xi32> to vector<1x4xf32>
    %cst_98 = arith.constant dense<0.000000e+00> : vector<1x16xf32>
    %181 = tpu.matmul %180, %165, %cst_98 {dimension_numbers = #tpu.dot_dimension_numbers<[1], [0], [0], [1], [0, 0, 1, 1], [], []>} : vector<1x4xf32>, vector<4x16xf32>, vector<1x16xf32> -> vector<1x16xf32>
    %c1_99 = arith.constant 1 : index
    %c0_100 = arith.constant 0 : index
    %c0_101 = arith.constant 0 : index
    %182 = vector.load %arg8[%c1_99, %c0_100, %c0_101] : memref<4x16x4xf32, #tpu.memory_space<vmem>>, vector<1x16x4xf32>
    %183 = vector.shape_cast %182 : vector<1x16x4xf32> to vector<16x4xf32>
    %cst_102 = arith.constant dense<0.000000e+00> : vector<1x4xf32>
    %184 = tpu.matmul %181, %183, %cst_102 {dimension_numbers = #tpu.dot_dimension_numbers<[1], [0], [0], [1], [0, 0, 1, 1], [], []>} : vector<1x16xf32>, vector<16x4xf32>, vector<1x4xf32> -> vector<1x4xf32>
    %185 = arith.addf %176, %184 : vector<1x4xf32>
    %c2_i32 = arith.constant 2 : i32
    %186 = vector.broadcast %c2_i32 : i32 to vector<1x4xi32>
    %187 = arith.cmpi eq, %166, %186 : vector<1x4xi32>
    %188 = arith.extui %187 : vector<1x4xi1> to vector<1x4xi32>
    %189 = arith.sitofp %188 : vector<1x4xi32> to vector<1x4xf32>
    %cst_103 = arith.constant dense<0.000000e+00> : vector<1x16xf32>
    %190 = tpu.matmul %189, %165, %cst_103 {dimension_numbers = #tpu.dot_dimension_numbers<[1], [0], [0], [1], [0, 0, 1, 1], [], []>} : vector<1x4xf32>, vector<4x16xf32>, vector<1x16xf32> -> vector<1x16xf32>
    %c2_104 = arith.constant 2 : index
    %c0_105 = arith.constant 0 : index
    %c0_106 = arith.constant 0 : index
    %191 = vector.load %arg8[%c2_104, %c0_105, %c0_106] : memref<4x16x4xf32, #tpu.memory_space<vmem>>, vector<1x16x4xf32>
    %192 = vector.shape_cast %191 : vector<1x16x4xf32> to vector<16x4xf32>
    %cst_107 = arith.constant dense<0.000000e+00> : vector<1x4xf32>
    %193 = tpu.matmul %190, %192, %cst_107 {dimension_numbers = #tpu.dot_dimension_numbers<[1], [0], [0], [1], [0, 0, 1, 1], [], []>} : vector<1x16xf32>, vector<16x4xf32>, vector<1x4xf32> -> vector<1x4xf32>
    %194 = arith.addf %185, %193 : vector<1x4xf32>
    %c3_i32 = arith.constant 3 : i32
    %195 = vector.broadcast %c3_i32 : i32 to vector<1x4xi32>
    %196 = arith.cmpi eq, %166, %195 : vector<1x4xi32>
    %197 = arith.extui %196 : vector<1x4xi1> to vector<1x4xi32>
    %198 = arith.sitofp %197 : vector<1x4xi32> to vector<1x4xf32>
    %cst_108 = arith.constant dense<0.000000e+00> : vector<1x16xf32>
    %199 = tpu.matmul %198, %165, %cst_108 {dimension_numbers = #tpu.dot_dimension_numbers<[1], [0], [0], [1], [0, 0, 1, 1], [], []>} : vector<1x4xf32>, vector<4x16xf32>, vector<1x16xf32> -> vector<1x16xf32>
    %c3_109 = arith.constant 3 : index
    %c0_110 = arith.constant 0 : index
    %c0_111 = arith.constant 0 : index
    %200 = vector.load %arg8[%c3_109, %c0_110, %c0_111] : memref<4x16x4xf32, #tpu.memory_space<vmem>>, vector<1x16x4xf32>
    %201 = vector.shape_cast %200 : vector<1x16x4xf32> to vector<16x4xf32>
    %cst_112 = arith.constant dense<0.000000e+00> : vector<1x4xf32>
    %202 = tpu.matmul %199, %201, %cst_112 {dimension_numbers = #tpu.dot_dimension_numbers<[1], [0], [0], [1], [0, 0, 1, 1], [], []>} : vector<1x16xf32>, vector<16x4xf32>, vector<1x4xf32> -> vector<1x4xf32>
    %203 = arith.addf %194, %202 : vector<1x4xf32>
    %c0_113 = arith.constant 0 : index
    %c0_114 = arith.constant 0 : index
    %204 = vector.load %arg9[%c0_113, %c0_114] : memref<1x4xf32, #tpu.memory_space<vmem>>, vector<1x4xf32>
    %205 = arith.addf %203, %204 : vector<1x4xf32>
    %cst_115 = arith.constant 0.000000e+00 : f32
    %206 = vector.broadcast %cst_115 : f32 to vector<1x4xf32>
    %207 = arith.maximumf %205, %206 : vector<1x4xf32>
    %c0_116 = arith.constant 0 : index
    %c0_117 = arith.constant 0 : index
    %208 = vector.load %arg10[%c0_116, %c0_117] : memref<4x128xf32, #tpu.memory_space<vmem>>, vector<4x128xf32>
    %c0_118 = arith.constant 0 : index
    %c0_119 = arith.constant 0 : index
    %209 = vector.load %arg11[%c0_118, %c0_119] : memref<1x128xf32, #tpu.memory_space<vmem>>, vector<1x128xf32>
    %cst_120 = arith.constant dense<0.000000e+00> : vector<1x128xf32>
    %210 = tpu.matmul %207, %208, %cst_120 {dimension_numbers = #tpu.dot_dimension_numbers<[1], [0], [0], [1], [0, 0, 1, 1], [], []>} : vector<1x4xf32>, vector<4x128xf32>, vector<1x128xf32> -> vector<1x128xf32>
    %211 = arith.addf %210, %209 : vector<1x128xf32>
    %cst_121 = arith.constant 0.000000e+00 : f32
    %212 = vector.broadcast %cst_121 : f32 to vector<1x128xf32>
    %213 = arith.maximumf %211, %212 : vector<1x128xf32>
    %c0_122 = arith.constant 0 : index
    %c0_123 = arith.constant 0 : index
    %214 = vector.load %arg12[%c0_122, %c0_123] : memref<128x64xf32, #tpu.memory_space<vmem>>, vector<128x64xf32>
    %c0_124 = arith.constant 0 : index
    %c0_125 = arith.constant 0 : index
    %215 = vector.load %arg13[%c0_124, %c0_125] : memref<1x64xf32, #tpu.memory_space<vmem>>, vector<1x64xf32>
    %cst_126 = arith.constant dense<0.000000e+00> : vector<1x64xf32>
    %216 = tpu.matmul %213, %214, %cst_126 {dimension_numbers = #tpu.dot_dimension_numbers<[1], [0], [0], [1], [0, 0, 1, 1], [], []>} : vector<1x128xf32>, vector<128x64xf32>, vector<1x64xf32> -> vector<1x64xf32>
    %217 = arith.addf %216, %215 : vector<1x64xf32>
    %cst_127 = arith.constant 0.000000e+00 : f32
    %218 = vector.broadcast %cst_127 : f32 to vector<1x64xf32>
    %219 = arith.maximumf %217, %218 : vector<1x64xf32>
    %c0_128 = arith.constant 0 : index
    %c0_129 = arith.constant 0 : index
    %220 = vector.load %arg14[%c0_128, %c0_129] : memref<64x32xf32, #tpu.memory_space<vmem>>, vector<64x32xf32>
    %c0_130 = arith.constant 0 : index
    %c0_131 = arith.constant 0 : index
    %221 = vector.load %arg15[%c0_130, %c0_131] : memref<1x32xf32, #tpu.memory_space<vmem>>, vector<1x32xf32>
    %cst_132 = arith.constant dense<0.000000e+00> : vector<1x32xf32>
    %222 = tpu.matmul %219, %220, %cst_132 {dimension_numbers = #tpu.dot_dimension_numbers<[1], [0], [0], [1], [0, 0, 1, 1], [], []>} : vector<1x64xf32>, vector<64x32xf32>, vector<1x32xf32> -> vector<1x32xf32>
    %223 = arith.addf %222, %221 : vector<1x32xf32>
    %cst_133 = arith.constant 0.000000e+00 : f32
    %224 = vector.broadcast %cst_133 : f32 to vector<1x32xf32>
    %225 = arith.maximumf %223, %224 : vector<1x32xf32>
    %c0_134 = arith.constant 0 : index
    %c0_135 = arith.constant 0 : index
    %226 = vector.load %arg16[%c0_134, %c0_135] : memref<32x16xf32, #tpu.memory_space<vmem>>, vector<32x16xf32>
    %c0_136 = arith.constant 0 : index
    %c0_137 = arith.constant 0 : index
    %227 = vector.load %arg17[%c0_136, %c0_137] : memref<1x16xf32, #tpu.memory_space<vmem>>, vector<1x16xf32>
    %cst_138 = arith.constant dense<0.000000e+00> : vector<1x16xf32>
    %228 = tpu.matmul %225, %226, %cst_138 {dimension_numbers = #tpu.dot_dimension_numbers<[1], [0], [0], [1], [0, 0, 1, 1], [], []>} : vector<1x32xf32>, vector<32x16xf32>, vector<1x16xf32> -> vector<1x16xf32>
    %229 = arith.addf %228, %227 : vector<1x16xf32>
    %cst_139 = arith.constant 0.000000e+00 : f32
    %230 = vector.broadcast %cst_139 : f32 to vector<1x16xf32>
    %231 = arith.maximumf %229, %230 : vector<1x16xf32>
    %c0_140 = arith.constant 0 : index
    %c0_141 = arith.constant 0 : index
    %232 = vector.load %arg18[%c0_140, %c0_141] : memref<16x8xf32, #tpu.memory_space<vmem>>, vector<16x8xf32>
    %c0_142 = arith.constant 0 : index
    %c0_143 = arith.constant 0 : index
    %233 = vector.load %arg19[%c0_142, %c0_143] : memref<1x8xf32, #tpu.memory_space<vmem>>, vector<1x8xf32>
    %cst_144 = arith.constant dense<0.000000e+00> : vector<1x8xf32>
    %234 = tpu.matmul %231, %232, %cst_144 {dimension_numbers = #tpu.dot_dimension_numbers<[1], [0], [0], [1], [0, 0, 1, 1], [], []>} : vector<1x16xf32>, vector<16x8xf32>, vector<1x8xf32> -> vector<1x8xf32>
    %235 = arith.addf %234, %233 : vector<1x8xf32>
    %cst_145 = arith.constant 0.000000e+00 : f32
    %236 = vector.broadcast %cst_145 : f32 to vector<1x8xf32>
    %237 = arith.maximumf %235, %236 : vector<1x8xf32>
    %c0_146 = arith.constant 0 : index
    %c0_147 = arith.constant 0 : index
    %238 = vector.load %arg20[%c0_146, %c0_147] : memref<8x1xf32, #tpu.memory_space<vmem>>, vector<8x1xf32>
    %c0_148 = arith.constant 0 : index
    %c0_149 = arith.constant 0 : index
    %239 = vector.load %arg21[%c0_148, %c0_149] : memref<1x1xf32, #tpu.memory_space<vmem>>, vector<1x1xf32>
    %cst_150 = arith.constant dense<0.000000e+00> : vector<1x1xf32>
    %240 = tpu.matmul %237, %238, %cst_150 {dimension_numbers = #tpu.dot_dimension_numbers<[1], [0], [0], [1], [0, 0, 1, 1], [], []>} : vector<1x8xf32>, vector<8x1xf32>, vector<1x1xf32> -> vector<1x1xf32>
    %241 = arith.addf %240, %239 : vector<1x1xf32>
    %c0_151 = arith.constant 0 : index
    %c0_152 = arith.constant 0 : index
    %c0_153 = arith.constant 0 : index
    %242 = vector.load %arg22[%c0_151, %c0_152, %c0_153] : memref<1x1x1xf32, #tpu.memory_space<vmem>>, vector<1x1x1xf32>
    %243 = vector.shape_cast %242 : vector<1x1x1xf32> to vector<1x1xf32>
    %244 = vector.shape_cast %241 : vector<1x1xf32> to vector<1x1x1xf32>
    tpu.vector_store %arg22[%c0_151, %c0_152, %c0_153], %244 {strides = array<i32>} : memref<1x1x1xf32, #tpu.memory_space<vmem>>, vector<1x1x1xf32>,
    %c0_154 = arith.constant 0 : index
    %c0_155 = arith.constant 0 : index
    %c0_156 = arith.constant 0 : index
    %245 = vector.load %arg23[%c0_154, %c0_155, %c0_156] : memref<1x1x8xf32, #tpu.memory_space<vmem>>, vector<1x1x8xf32>
    %246 = vector.shape_cast %245 : vector<1x1x8xf32> to vector<1x8xf32>
    %247 = vector.shape_cast %237 : vector<1x8xf32> to vector<1x1x8xf32>
    tpu.vector_store %arg23[%c0_154, %c0_155, %c0_156], %247 {strides = array<i32>} : memref<1x1x8xf32, #tpu.memory_space<vmem>>, vector<1x1x8xf32>,
    return
  }
  func.func @transform_0(%arg0: i32) -> (i32, i32, i32) {
    %c0_i32 = arith.constant 0 : i32
    %c0_i32_0 = arith.constant 0 : i32
    %c0_i32_1 = arith.constant 0 : i32
    return %arg0, %c0_i32, %c0_i32_0 : i32, i32, i32
  }
  func.func @transform_1(%arg0: i32) -> (i32, i32, i32) {
    %c0_i32 = arith.constant 0 : i32
    %c0_i32_0 = arith.constant 0 : i32
    %c0_i32_1 = arith.constant 0 : i32
    return %arg0, %c0_i32, %c0_i32_0 : i32, i32, i32
  }
  func.func @transform_2(%arg0: i32) -> (i32, i32, i32) {
    %c0_i32 = arith.constant 0 : i32
    %c0_i32_0 = arith.constant 0 : i32
    %c0_i32_1 = arith.constant 0 : i32
    return %arg0, %c0_i32, %c0_i32_0 : i32, i32, i32
  }
  func.func @transform_3(%arg0: i32) -> (i32, i32, i32) {
    %c0_i32 = arith.constant 0 : i32
    %c0_i32_0 = arith.constant 0 : i32
    %c0_i32_1 = arith.constant 0 : i32
    return %arg0, %c0_i32, %c0_i32_0 : i32, i32, i32
  }
  func.func @transform_4(%arg0: i32) -> (i32, i32, i32) {
    %c0_i32 = arith.constant 0 : i32
    %c0_i32_0 = arith.constant 0 : i32
    %c0_i32_1 = arith.constant 0 : i32
    return %arg0, %c0_i32, %c0_i32_0 : i32, i32, i32
  }
  func.func @transform_5(%arg0: i32) -> (i32, i32, i32) {
    %c0_i32 = arith.constant 0 : i32
    %c0_i32_0 = arith.constant 0 : i32
    %c0_i32_1 = arith.constant 0 : i32
    %c0_i32_2 = arith.constant 0 : i32
    return %c0_i32, %c0_i32_0, %c0_i32_1 : i32, i32, i32
  }
  func.func @transform_6(%arg0: i32) -> (i32, i32, i32) {
    %c0_i32 = arith.constant 0 : i32
    %c0_i32_0 = arith.constant 0 : i32
    %c0_i32_1 = arith.constant 0 : i32
    %c0_i32_2 = arith.constant 0 : i32
    return %c0_i32, %c0_i32_0, %c0_i32_1 : i32, i32, i32
  }
  func.func @transform_7(%arg0: i32) -> (i32, i32, i32) {
    %c0_i32 = arith.constant 0 : i32
    %c0_i32_0 = arith.constant 0 : i32
    %c0_i32_1 = arith.constant 0 : i32
    %c0_i32_2 = arith.constant 0 : i32
    return %c0_i32, %c0_i32_0, %c0_i32_1 : i32, i32, i32
  }
  func.func @transform_8(%arg0: i32) -> (i32, i32) {
    %c0_i32 = arith.constant 0 : i32
    %c0_i32_0 = arith.constant 0 : i32
    %c0_i32_1 = arith.constant 0 : i32
    return %c0_i32, %c0_i32_0 : i32, i32
  }
  func.func @transform_9(%arg0: i32) -> (i32, i32) {
    %c0_i32 = arith.constant 0 : i32
    %c0_i32_0 = arith.constant 0 : i32
    %c0_i32_1 = arith.constant 0 : i32
    return %c0_i32, %c0_i32_0 : i32, i32
  }
  func.func @transform_10(%arg0: i32) -> (i32, i32) {
    %c0_i32 = arith.constant 0 : i32
    %c0_i32_0 = arith.constant 0 : i32
    %c0_i32_1 = arith.constant 0 : i32
    return %c0_i32, %c0_i32_0 : i32, i32
  }
  func.func @transform_11(%arg0: i32) -> (i32, i32) {
    %c0_i32 = arith.constant 0 : i32
    %c0_i32_0 = arith.constant 0 : i32
    %c0_i32_1 = arith.constant 0 : i32
    return %c0_i32, %c0_i32_0 : i32, i32
  }
  func.func @transform_12(%arg0: i32) -> (i32, i32) {
    %c0_i32 = arith.constant 0 : i32
    %c0_i32_0 = arith.constant 0 : i32
    %c0_i32_1 = arith.constant 0 : i32
    return %c0_i32, %c0_i32_0 : i32, i32
  }
  func.func @transform_13(%arg0: i32) -> (i32, i32) {
    %c0_i32 = arith.constant 0 : i32
    %c0_i32_0 = arith.constant 0 : i32
    %c0_i32_1 = arith.constant 0 : i32
    return %c0_i32, %c0_i32_0 : i32, i32
  }
  func.func @transform_14(%arg0: i32) -> (i32, i32) {
    %c0_i32 = arith.constant 0 : i32
    %c0_i32_0 = arith.constant 0 : i32
    %c0_i32_1 = arith.constant 0 : i32
    return %c0_i32, %c0_i32_0 : i32, i32
  }
  func.func @transform_15(%arg0: i32) -> (i32, i32) {
    %c0_i32 = arith.constant 0 : i32
    %c0_i32_0 = arith.constant 0 : i32
    %c0_i32_1 = arith.constant 0 : i32
    return %c0_i32, %c0_i32_0 : i32, i32
  }
  func.func @transform_16(%arg0: i32) -> (i32, i32) {
    %c0_i32 = arith.constant 0 : i32
    %c0_i32_0 = arith.constant 0 : i32
    %c0_i32_1 = arith.constant 0 : i32
    return %c0_i32, %c0_i32_0 : i32, i32
  }
  func.func @transform_17(%arg0: i32) -> (i32, i32) {
    %c0_i32 = arith.constant 0 : i32
    %c0_i32_0 = arith.constant 0 : i32
    %c0_i32_1 = arith.constant 0 : i32
    return %c0_i32, %c0_i32_0 : i32, i32
  }
  func.func @transform_18(%arg0: i32) -> (i32, i32) {
    %c0_i32 = arith.constant 0 : i32
    %c0_i32_0 = arith.constant 0 : i32
    %c0_i32_1 = arith.constant 0 : i32
    return %c0_i32, %c0_i32_0 : i32, i32
  }
  func.func @transform_19(%arg0: i32) -> (i32, i32) {
    %c0_i32 = arith.constant 0 : i32
    %c0_i32_0 = arith.constant 0 : i32
    %c0_i32_1 = arith.constant 0 : i32
    return %c0_i32, %c0_i32_0 : i32, i32
  }
  func.func @transform_20(%arg0: i32) -> (i32, i32) {
    %c0_i32 = arith.constant 0 : i32
    %c0_i32_0 = arith.constant 0 : i32
    %c0_i32_1 = arith.constant 0 : i32
    return %c0_i32, %c0_i32_0 : i32, i32
  }
  func.func @transform_21(%arg0: i32) -> (i32, i32, i32) {
    %c0_i32 = arith.constant 0 : i32
    %c0_i32_0 = arith.constant 0 : i32
    %c0_i32_1 = arith.constant 0 : i32
    return %arg0, %c0_i32, %c0_i32_0 : i32, i32, i32
  }
  func.func @transform_22(%arg0: i32) -> (i32, i32, i32) {
    %c0_i32 = arith.constant 0 : i32
    %c0_i32_0 = arith.constant 0 : i32
    %c0_i32_1 = arith.constant 0 : i32
    return %arg0, %c0_i32, %c0_i32_0 : i32, i32, i32
  }
}

</mosaic_0001>

<llo_original>
// kernel: learn_loss_active_forward.1
$region0: #{learn_loss_active_forward.1}
  #allocation0 [shape = 'u32[]', space=smem, size = 0x4, offset = 0x4, fixed_abs, tag = 'smem constant byte address 0x4 - core index']
  #allocation1 [shape = 'u32[144,128]{1,0:T(1,128)}', space=vmem, size = 0x12000, scoped, tag = 'internal scratch']
  #allocation2 [shape = 'f32[1,1]{1,0:T(1,128)S(1)}', space=vmem, size = 0x200, scoped, tag = 'scoped memory for learn_loss_active_forward.1']
  %s0 = inlined_call_operand.vmem [shape: f32[2,4,4096], index: 0, kind: input, shape index: {}]
  %s1 = inlined_call_operand.vmem [shape: f32[2,4,1024], index: 1, kind: input, shape index: {}]
  %s2 = inlined_call_operand.vmem [shape: f32[2,4,256], index: 2, kind: input, shape index: {}]
  %s3 = inlined_call_operand.vmem [shape: f32[2,4,64], index: 3, kind: input, shape index: {}]
  %s4 = inlined_call_operand.vmem [shape: f32[2,4,16], index: 4, kind: input, shape index: {}]
  %s5 = inlined_call_operand.vmem [shape: f32[16,4,4], index: 5, kind: input, shape index: {}]
  %s6 = inlined_call_operand.vmem [shape: f32[4,4,1], index: 6, kind: input, shape index: {}]
  %s7 = inlined_call_operand.vmem [shape: f32[4,16,4], index: 7, kind: input, shape index: {}]
  %s8 = inlined_call_operand.vmem [shape: f32[1,4], index: 8, kind: input, shape index: {}]
  %s9 = inlined_call_operand.vmem [shape: f32[4,128], index: 9, kind: input, shape index: {}]
  %s10 = inlined_call_operand.vmem [shape: f32[1,128], index: 10, kind: input, shape index: {}]
  %s11 = inlined_call_operand.vmem [shape: f32[128,64], index: 11, kind: input, shape index: {}]
  %s12 = inlined_call_operand.vmem [shape: f32[1,64], index: 12, kind: input, shape index: {}]
  %s13 = inlined_call_operand.vmem [shape: f32[64,32], index: 13, kind: input, shape index: {}]
  %s14 = inlined_call_operand.vmem [shape: f32[1,32], index: 14, kind: input, shape index: {}]
  %s15 = inlined_call_operand.vmem [shape: f32[32,16], index: 15, kind: input, shape index: {}]
  %s16 = inlined_call_operand.vmem [shape: f32[1,16], index: 16, kind: input, shape index: {}]
  %s17 = inlined_call_operand.vmem [shape: f32[16,8], index: 17, kind: input, shape index: {}]
  %s18 = inlined_call_operand.vmem [shape: f32[1,8], index: 18, kind: input, shape index: {}]
  %s19 = inlined_call_operand.vmem [shape: f32[8,1], index: 19, kind: input, shape index: {}]
  %s20 = inlined_call_operand.<no memory space> [shape: f32[1,1], index: 20, kind: input, shape index: {}]
  %s21 = inlined_call_operand.vmem [shape: f32[2,1,1], index: 21, kind: output, shape index: {0}]
  %s22 = inlined_call_operand.hbm [shape: f32[2,1,8], index: 22, kind: output, shape index: {1}]
  %23 = xla_tuple %s21, %s22
  %s24 = sld [smem:[#allocation0]]
  $region125: #{learn_loss_active_forward.1} parent=0
    _
  %s26 = ssub.s32 1, %s24
  %s27 = scalar_select 0, %s26, %s24
  %v28 = vstv %s20
  %29 = vst [vmem:[#allocation2] sm:$0x1] %v28
  $region1: #{learn_loss_active_forward.1} parent=0
    #allocation3 [shape = 'u8[1024]{0}', space=vmem, size = 0x400, scoped, tag = 'output window, operand 1']
    #allocation4 [shape = 's32[2]{0}', space=sflag, size = 0x8, scoped, tag = 'scoped memory for learn_loss_active_forward.1']
    %30 = vsyncpa [#allocation4], 0
    %s31 = scalar_lea.sflag [#allocation4], 1
    %32 = vsyncpa %s31, 0
    loop: start=0, step=1, limit=4
    $region2: #{learn_loss_active_forward.1} parent=1 // loop_pre_header
      _
    $region3: #{learn_loss_active_forward.1} parent=1 // loop_header
      %s34 = sphi 0, %s38
      %p35 = scmp.ge.s32.totalorder %s34, 4
      %s44 = sphi 0, %s46
      %s47 = sphi 0, %s44
      %s48 = sphi 0, %s47
      %s64 = sphi 0, %s48
      %s70 = sphi 0, %s72
      %s73 = sphi 0, %s70
      %s74 = sphi 0, %s73
      %s90 = sphi 0, %s74
      %s96 = sphi 0, %s98
      %s99 = sphi 0, %s96
      %s100 = sphi 0, %s99
      %s116 = sphi 0, %s100
      %s122 = sphi 0, %s124
      %s125 = sphi 0, %s122
      %s126 = sphi 0, %s125
      %s142 = sphi 0, %s126
      %s148 = sphi 0, %s150
      %s151 = sphi 0, %s148
      %s152 = sphi 0, %s151
      %s168 = sphi 0, %s152
      %s172 = sphi 0, %s172
      %s174 = sphi 0, %s172
      %s175 = sphi 0, %s174
      %s189 = sphi 0, %s175
      %s193 = sphi 0, %s193
      %s195 = sphi 0, %s193
      %s196 = sphi 0, %s195
      %s210 = sphi 0, %s196
      %s214 = sphi 0, %s214
      %s216 = sphi 0, %s214
      %s217 = sphi 0, %s216
      %s231 = sphi 0, %s217
      %s235 = sphi 0, %s235
      %s237 = sphi 0, %s235
      %s238 = sphi 0, %s237
      %s252 = sphi 0, %s238
      %s256 = sphi 0, %s256
      %s258 = sphi 0, %s256
      %s259 = sphi 0, %s258
      %s273 = sphi 0, %s259
      %s277 = sphi 0, %s277
      %s279 = sphi 0, %s277
      %s280 = sphi 0, %s279
      %s294 = sphi 0, %s280
      %s298 = sphi 0, %s298
      %s300 = sphi 0, %s298
      %s301 = sphi 0, %s300
      %s315 = sphi 0, %s301
      %s319 = sphi 0, %s319
      %s321 = sphi 0, %s319
      %s322 = sphi 0, %s321
      %s336 = sphi 0, %s322
      %s340 = sphi 0, %s340
      %s342 = sphi 0, %s340
      %s343 = sphi 0, %s342
      %s357 = sphi 0, %s343
      %s361 = sphi 0, %s361
      %s363 = sphi 0, %s361
      %s364 = sphi 0, %s363
      %s378 = sphi 0, %s364
      %s382 = sphi 0, %s382
      %s384 = sphi 0, %s382
      %s385 = sphi 0, %s384
      %s399 = sphi 0, %s385
      %s403 = sphi 0, %s403
      %s405 = sphi 0, %s403
      %s406 = sphi 0, %s405
      %s420 = sphi 0, %s406
      %s424 = sphi 0, %s424
      %s426 = sphi 0, %s424
      %s427 = sphi 0, %s426
      %s441 = sphi 0, %s427
      %s445 = sphi 0, %s445
      %s447 = sphi 0, %s445
      %s448 = sphi 0, %s447
      %s462 = sphi 0, %s448
      %s466 = sphi 0, %s466
      %s468 = sphi 0, %s466
      %s469 = sphi 0, %s468
      %s483 = sphi 0, %s469
      %s487 = sphi 0, %s487
      %s489 = sphi 0, %s487
      %s490 = sphi 0, %s489
      %s504 = sphi 0, %s490
      %s510 = sphi 0, %s512
      %s513 = sphi 0, %s510
      %s514 = sphi 0, %s513
      %s530 = sphi 0, %s514
      %s536 = sphi 0, %s538
      %s539 = sphi 0, %s536
      %s540 = sphi 0, %s539
      %s556 = sphi 0, %s540
    $region4: #{learn_loss_active_forward.1} parent=1 // loop_header_branch
      %37 = sbr.rel (%p35) target = $region8
    $region5: #{learn_loss_active_forward.1} parent=1 // loop_body
      %s39 = ssub.s32 %s34, 1
      %s40 = ssub.s32 %s34, 2
      %s41 = sadd.s32 %s34, 1
      %s42 = ssub.s32 %s34, %s41
      %p43 = scmp.eq.s32.totalorder %s42, 0
      %s45 = sadd.s32 %s44, 1
      %s46 = scalar_select %p43, %s44, %s45
      %p49 = pneg %p43
      %p50 = scmp.eq.s32.totalorder %s34, 1
      %p51 = por %p49, %p50
      %p52 = scmp.ne.s32.totalorder %s44, %s47
      %p53 = scmp.eq.s32.totalorder %s34, 0
      %p54 = por %p52, %p53
      %p55 = scmp.ne.s32.totalorder %s44, %s47
      %p56 = scmp.eq.s32.totalorder %s39, 1
      %p57 = por %p55, %p56
      %p58 = scmp.ne.s32.totalorder %s47, %s48
      %p59 = scmp.eq.s32.totalorder %s39, 0
      %p60 = por %p58, %p59
      %p61 = scmp.ne.s32.totalorder %s47, %s48
      %p62 = scmp.eq.s32.totalorder %s40, 1
      %p63 = por %p61, %p62
      %p65 = scmp.ne.s32.totalorder %s48, %s64
      %p66 = scmp.eq.s32.totalorder %s40, 0
      %p67 = por %p65, %p66
      %s68 = ssub.s32 %s34, %s41
      %p69 = scmp.eq.s32.totalorder %s68, 0
      %s71 = sadd.s32 %s70, 1
      %s72 = scalar_select %p69, %s70, %s71
      %p75 = pneg %p69
      %p76 = scmp.eq.s32.totalorder %s34, 1
      %p77 = por %p75, %p76
      %p78 = scmp.ne.s32.totalorder %s70, %s73
      %p79 = scmp.eq.s32.totalorder %s34, 0
      %p80 = por %p78, %p79
      %p81 = scmp.ne.s32.totalorder %s70, %s73
      %p82 = scmp.eq.s32.totalorder %s39, 1
      %p83 = por %p81, %p82
      %p84 = scmp.ne.s32.totalorder %s73, %s74
      %p85 = scmp.eq.s32.totalorder %s39, 0
      %p86 = por %p84, %p85
      %p87 = scmp.ne.s32.totalorder %s73, %s74
      %p88 = scmp.eq.s32.totalorder %s40, 1
      %p89 = por %p87, %p88
      %p91 = scmp.ne.s32.totalorder %s74, %s90
      %p92 = scmp.eq.s32.totalorder %s40, 0
      %p93 = por %p91, %p92
      %s94 = ssub.s32 %s34, %s41
      %p95 = scmp.eq.s32.totalorder %s94, 0
      %s97 = sadd.s32 %s96, 1
      %s98 = scalar_select %p95, %s96, %s97
      %p101 = pneg %p95
      %p102 = scmp.eq.s32.totalorder %s34, 1
      %p103 = por %p101, %p102
      %p104 = scmp.ne.s32.totalorder %s96, %s99
      %p105 = scmp.eq.s32.totalorder %s34, 0
      %p106 = por %p104, %p105
      %p107 = scmp.ne.s32.totalorder %s96, %s99
      %p108 = scmp.eq.s32.totalorder %s39, 1
      %p109 = por %p107, %p108
      %p110 = scmp.ne.s32.totalorder %s99, %s100
      %p111 = scmp.eq.s32.totalorder %s39, 0
      %p112 = por %p110, %p111
      %p113 = scmp.ne.s32.totalorder %s99, %s100
      %p114 = scmp.eq.s32.totalorder %s40, 1
      %p115 = por %p113, %p114
      %p117 = scmp.ne.s32.totalorder %s100, %s116
      %p118 = scmp.eq.s32.totalorder %s40, 0
      %p119 = por %p117, %p118
      %s120 = ssub.s32 %s34, %s41
      %p121 = scmp.eq.s32.totalorder %s120, 0
      %s123 = sadd.s32 %s122, 1
      %s124 = scalar_select %p121, %s122, %s123
      %p127 = pneg %p121
      %p128 = scmp.eq.s32.totalorder %s34, 1
      %p129 = por %p127, %p128
      %p130 = scmp.ne.s32.totalorder %s122, %s125
      %p131 = scmp.eq.s32.totalorder %s34, 0
      %p132 = por %p130, %p131
      %p133 = scmp.ne.s32.totalorder %s122, %s125
      %p134 = scmp.eq.s32.totalorder %s39, 1
      %p135 = por %p133, %p134
      %p136 = scmp.ne.s32.totalorder %s125, %s126
      %p137 = scmp.eq.s32.totalorder %s39, 0
      %p138 = por %p136, %p137
      %p139 = scmp.ne.s32.totalorder %s125, %s126
      %p140 = scmp.eq.s32.totalorder %s40, 1
      %p141 = por %p139, %p140
      %p143 = scmp.ne.s32.totalorder %s126, %s142
      %p144 = scmp.eq.s32.totalorder %s40, 0
      %p145 = por %p143, %p144
      %s146 = ssub.s32 %s34, %s41
      %p147 = scmp.eq.s32.totalorder %s146, 0
      %s149 = sadd.s32 %s148, 1
      %s150 = scalar_select %p147, %s148, %s149
      %p153 = pneg %p147
      %p154 = scmp.eq.s32.totalorder %s34, 1
      %p155 = por %p153, %p154
      %p156 = scmp.ne.s32.totalorder %s148, %s151
      %p157 = scmp.eq.s32.totalorder %s34, 0
      %p158 = por %p156, %p157
      %p159 = scmp.ne.s32.totalorder %s148, %s151
      %p160 = scmp.eq.s32.totalorder %s39, 1
      %p161 = por %p159, %p160
      %p162 = scmp.ne.s32.totalorder %s151, %s152
      %p163 = scmp.eq.s32.totalorder %s39, 0
      %p164 = por %p162, %p163
      %p165 = scmp.ne.s32.totalorder %s151, %s152
      %p166 = scmp.eq.s32.totalorder %s40, 1
      %p167 = por %p165, %p166
      %p169 = scmp.ne.s32.totalorder %s152, %s168
      %p170 = scmp.eq.s32.totalorder %s40, 0
      %p171 = por %p169, %p170
      %s173 = sadd.s32 %s172, 1
      %p176 = scmp.eq.s32.totalorder %s34, 1
      %p177 = scmp.ne.s32.totalorder %s172, %s174
      %p178 = scmp.eq.s32.totalorder %s34, 0
      %p179 = por %p177, %p178
      %p180 = scmp.ne.s32.totalorder %s172, %s174
      %p181 = scmp.eq.s32.totalorder %s39, 1
      %p182 = por %p180, %p181
      %p183 = scmp.ne.s32.totalorder %s174, %s175
      %p184 = scmp.eq.s32.totalorder %s39, 0
      %p185 = por %p183, %p184
      %p186 = scmp.ne.s32.totalorder %s174, %s175
      %p187 = scmp.eq.s32.totalorder %s40, 1
      %p188 = por %p186, %p187
      %p190 = scmp.ne.s32.totalorder %s175, %s189
      %p191 = scmp.eq.s32.totalorder %s40, 0
      %p192 = por %p190, %p191
      %s194 = sadd.s32 %s193, 1
      %p197 = scmp.eq.s32.totalorder %s34, 1
      %p198 = scmp.ne.s32.totalorder %s193, %s195
      %p199 = scmp.eq.s32.totalorder %s34, 0
      %p200 = por %p198, %p199
      %p201 = scmp.ne.s32.totalorder %s193, %s195
      %p202 = scmp.eq.s32.totalorder %s39, 1
      %p203 = por %p201, %p202
      %p204 = scmp.ne.s32.totalorder %s195, %s196
      %p205 = scmp.eq.s32.totalorder %s39, 0
      %p206 = por %p204, %p205
      %p207 = scmp.ne.s32.totalorder %s195, %s196
      %p208 = scmp.eq.s32.totalorder %s40, 1
      %p209 = por %p207, %p208
      %p211 = scmp.ne.s32.totalorder %s196, %s210
      %p212 = scmp.eq.s32.totalorder %s40, 0
      %p213 = por %p211, %p212
      %s215 = sadd.s32 %s214, 1
      %p218 = scmp.eq.s32.totalorder %s34, 1
      %p219 = scmp.ne.s32.totalorder %s214, %s216
      %p220 = scmp.eq.s32.totalorder %s34, 0
      %p221 = por %p219, %p220
      %p222 = scmp.ne.s32.totalorder %s214, %s216
      %p223 = scmp.eq.s32.totalorder %s39, 1
      %p224 = por %p222, %p223
      %p225 = scmp.ne.s32.totalorder %s216, %s217
      %p226 = scmp.eq.s32.totalorder %s39, 0
      %p227 = por %p225, %p226
      %p228 = scmp.ne.s32.totalorder %s216, %s217
      %p229 = scmp.eq.s32.totalorder %s40, 1
      %p230 = por %p228, %p229
      %p232 = scmp.ne.s32.totalorder %s217, %s231
      %p233 = scmp.eq.s32.totalorder %s40, 0
      %p234 = por %p232, %p233
      %s236 = sadd.s32 %s235, 1
      %p239 = scmp.eq.s32.totalorder %s34, 1
      %p240 = scmp.ne.s32.totalorder %s235, %s237
      %p241 = scmp.eq.s32.totalorder %s34, 0
      %p242 = por %p240, %p241
      %p243 = scmp.ne.s32.totalorder %s235, %s237
      %p244 = scmp.eq.s32.totalorder %s39, 1
      %p245 = por %p243, %p244
      %p246 = scmp.ne.s32.totalorder %s237, %s238
      %p247 = scmp.eq.s32.totalorder %s39, 0
      %p248 = por %p246, %p247
      %p249 = scmp.ne.s32.totalorder %s237, %s238
      %p250 = scmp.eq.s32.totalorder %s40, 1
      %p251 = por %p249, %p250
      %p253 = scmp.ne.s32.totalorder %s238, %s252
      %p254 = scmp.eq.s32.totalorder %s40, 0
      %p255 = por %p253, %p254
      %s257 = sadd.s32 %s256, 1
      %p260 = scmp.eq.s32.totalorder %s34, 1
      %p261 = scmp.ne.s32.totalorder %s256, %s258
      %p262 = scmp.eq.s32.totalorder %s34, 0
      %p263 = por %p261, %p262
      %p264 = scmp.ne.s32.totalorder %s256, %s258
      %p265 = scmp.eq.s32.totalorder %s39, 1
      %p266 = por %p264, %p265
      %p267 = scmp.ne.s32.totalorder %s258, %s259
      %p268 = scmp.eq.s32.totalorder %s39, 0
      %p269 = por %p267, %p268
      %p270 = scmp.ne.s32.totalorder %s258, %s259
      %p271 = scmp.eq.s32.totalorder %s40, 1
      %p272 = por %p270, %p271
      %p274 = scmp.ne.s32.totalorder %s259, %s273
      %p275 = scmp.eq.s32.totalorder %s40, 0
      %p276 = por %p274, %p275
      %s278 = sadd.s32 %s277, 1
      %p281 = scmp.eq.s32.totalorder %s34, 1
      %p282 = scmp.ne.s32.totalorder %s277, %s279
      %p283 = scmp.eq.s32.totalorder %s34, 0
      %p284 = por %p282, %p283
      %p285 = scmp.ne.s32.totalorder %s277, %s279
      %p286 = scmp.eq.s32.totalorder %s39, 1
      %p287 = por %p285, %p286
      %p288 = scmp.ne.s32.totalorder %s279, %s280
      %p289 = scmp.eq.s32.totalorder %s39, 0
      %p290 = por %p288, %p289
      %p291 = scmp.ne.s32.totalorder %s279, %s280
      %p292 = scmp.eq.s32.totalorder %s40, 1
      %p293 = por %p291, %p292
      %p295 = scmp.ne.s32.totalorder %s280, %s294
      %p296 = scmp.eq.s32.totalorder %s40, 0
      %p297 = por %p295, %p296
      %s299 = sadd.s32 %s298, 1
      %p302 = scmp.eq.s32.totalorder %s34, 1
      %p303 = scmp.ne.s32.totalorder %s298, %s300
      %p304 = scmp.eq.s32.totalorder %s34, 0
      %p305 = por %p303, %p304
      %p306 = scmp.ne.s32.totalorder %s298, %s300
      %p307 = scmp.eq.s32.totalorder %s39, 1
      %p308 = por %p306, %p307
      %p309 = scmp.ne.s32.totalorder %s300, %s301
      %p310 = scmp.eq.s32.totalorder %s39, 0
      %p311 = por %p309, %p310
      %p312 = scmp.ne.s32.totalorder %s300, %s301
      %p313 = scmp.eq.s32.totalorder %s40, 1
      %p314 = por %p312, %p313
      %p316 = scmp.ne.s32.totalorder %s301, %s315
      %p317 = scmp.eq.s32.totalorder %s40, 0
      %p318 = por %p316, %p317
      %s320 = sadd.s32 %s319, 1
      %p323 = scmp.eq.s32.totalorder %s34, 1
      %p324 = scmp.ne.s32.totalorder %s319, %s321
      %p325 = scmp.eq.s32.totalorder %s34, 0
      %p326 = por %p324, %p325
      %p327 = scmp.ne.s32.totalorder %s319, %s321
      %p328 = scmp.eq.s32.totalorder %s39, 1
      %p329 = por %p327, %p328
      %p330 = scmp.ne.s32.totalorder %s321, %s322
      %p331 = scmp.eq.s32.totalorder %s39, 0
      %p332 = por %p330, %p331
      %p333 = scmp.ne.s32.totalorder %s321, %s322
      %p334 = scmp.eq.s32.totalorder %s40, 1
      %p335 = por %p333, %p334
      %p337 = scmp.ne.s32.totalorder %s322, %s336
      %p338 = scmp.eq.s32.totalorder %s40, 0
      %p339 = por %p337, %p338
      %s341 = sadd.s32 %s340, 1
      %p344 = scmp.eq.s32.totalorder %s34, 1
      %p345 = scmp.ne.s32.totalorder %s340, %s342
      %p346 = scmp.eq.s32.totalorder %s34, 0
      %p347 = por %p345, %p346
      %p348 = scmp.ne.s32.totalorder %s340, %s342
      %p349 = scmp.eq.s32.totalorder %s39, 1
      %p350 = por %p348, %p349
      %p351 = scmp.ne.s32.totalorder %s342, %s343
      %p352 = scmp.eq.s32.totalorder %s39, 0
      %p353 = por %p351, %p352
      %p354 = scmp.ne.s32.totalorder %s342, %s343
      %p355 = scmp.eq.s32.totalorder %s40, 1
      %p356 = por %p354, %p355
      %p358 = scmp.ne.s32.totalorder %s343, %s357
      %p359 = scmp.eq.s32.totalorder %s40, 0
      %p360 = por %p358, %p359
      %s362 = sadd.s32 %s361, 1
      %p365 = scmp.eq.s32.totalorder %s34, 1
      %p366 = scmp.ne.s32.totalorder %s361, %s363
      %p367 = scmp.eq.s32.totalorder %s34, 0
      %p368 = por %p366, %p367
      %p369 = scmp.ne.s32.totalorder %s361, %s363
      %p370 = scmp.eq.s32.totalorder %s39, 1
      %p371 = por %p369, %p370
      %p372 = scmp.ne.s32.totalorder %s363, %s364
      %p373 = scmp.eq.s32.totalorder %s39, 0
      %p374 = por %p372, %p373
      %p375 = scmp.ne.s32.totalorder %s363, %s364
      %p376 = scmp.eq.s32.totalorder %s40, 1
      %p377 = por %p375, %p376
      %p379 = scmp.ne.s32.totalorder %s364, %s378
      %p380 = scmp.eq.s32.totalorder %s40, 0
      %p381 = por %p379, %p380
      %s383 = sadd.s32 %s382, 1
      %p386 = scmp.eq.s32.totalorder %s34, 1
      %p387 = scmp.ne.s32.totalorder %s382, %s384
      %p388 = scmp.eq.s32.totalorder %s34, 0
      %p389 = por %p387, %p388
      %p390 = scmp.ne.s32.totalorder %s382, %s384
      %p391 = scmp.eq.s32.totalorder %s39, 1
      %p392 = por %p390, %p391
      %p393 = scmp.ne.s32.totalorder %s384, %s385
      %p394 = scmp.eq.s32.totalorder %s39, 0
      %p395 = por %p393, %p394
      %p396 = scmp.ne.s32.totalorder %s384, %s385
      %p397 = scmp.eq.s32.totalorder %s40, 1
      %p398 = por %p396, %p397
      %p400 = scmp.ne.s32.totalorder %s385, %s399
      %p401 = scmp.eq.s32.totalorder %s40, 0
      %p402 = por %p400, %p401
      %s404 = sadd.s32 %s403, 1
      %p407 = scmp.eq.s32.totalorder %s34, 1
      %p408 = scmp.ne.s32.totalorder %s403, %s405
      %p409 = scmp.eq.s32.totalorder %s34, 0
      %p410 = por %p408, %p409
      %p411 = scmp.ne.s32.totalorder %s403, %s405
      %p412 = scmp.eq.s32.totalorder %s39, 1
      %p413 = por %p411, %p412
      %p414 = scmp.ne.s32.totalorder %s405, %s406
      %p415 = scmp.eq.s32.totalorder %s39, 0
      %p416 = por %p414, %p415
      %p417 = scmp.ne.s32.totalorder %s405, %s406
      %p418 = scmp.eq.s32.totalorder %s40, 1
      %p419 = por %p417, %p418
      %p421 = scmp.ne.s32.totalorder %s406, %s420
      %p422 = scmp.eq.s32.totalorder %s40, 0
      %p423 = por %p421, %p422
      %s425 = sadd.s32 %s424, 1
      %p428 = scmp.eq.s32.totalorder %s34, 1
      %p429 = scmp.ne.s32.totalorder %s424, %s426
      %p430 = scmp.eq.s32.totalorder %s34, 0
      %p431 = por %p429, %p430
      %p432 = scmp.ne.s32.totalorder %s424, %s426
      %p433 = scmp.eq.s32.totalorder %s39, 1
      %p434 = por %p432, %p433
      %p435 = scmp.ne.s32.totalorder %s426, %s427
      %p436 = scmp.eq.s32.totalorder %s39, 0
      %p437 = por %p435, %p436
      %p438 = scmp.ne.s32.totalorder %s426, %s427
      %p439 = scmp.eq.s32.totalorder %s40, 1
      %p440 = por %p438, %p439
      %p442 = scmp.ne.s32.totalorder %s427, %s441
      %p443 = scmp.eq.s32.totalorder %s40, 0
      %p444 = por %p442, %p443
      %s446 = sadd.s32 %s445, 1
      %p449 = scmp.eq.s32.totalorder %s34, 1
      %p450 = scmp.ne.s32.totalorder %s445, %s447
      %p451 = scmp.eq.s32.totalorder %s34, 0
      %p452 = por %p450, %p451
      %p453 = scmp.ne.s32.totalorder %s445, %s447
      %p454 = scmp.eq.s32.totalorder %s39, 1
      %p455 = por %p453, %p454
      %p456 = scmp.ne.s32.totalorder %s447, %s448
      %p457 = scmp.eq.s32.totalorder %s39, 0
      %p458 = por %p456, %p457
      %p459 = scmp.ne.s32.totalorder %s447, %s448
      %p460 = scmp.eq.s32.totalorder %s40, 1
      %p461 = por %p459, %p460
      %p463 = scmp.ne.s32.totalorder %s448, %s462
      %p464 = scmp.eq.s32.totalorder %s40, 0
      %p465 = por %p463, %p464
      %s467 = sadd.s32 %s466, 1
      %p470 = scmp.eq.s32.totalorder %s34, 1
      %p471 = scmp.ne.s32.totalorder %s466, %s468
      %p472 = scmp.eq.s32.totalorder %s34, 0
      %p473 = por %p471, %p472
      %p474 = scmp.ne.s32.totalorder %s466, %s468
      %p475 = scmp.eq.s32.totalorder %s39, 1
      %p476 = por %p474, %p475
      %p477 = scmp.ne.s32.totalorder %s468, %s469
      %p478 = scmp.eq.s32.totalorder %s39, 0
      %p479 = por %p477, %p478
      %p480 = scmp.ne.s32.totalorder %s468, %s469
      %p481 = scmp.eq.s32.totalorder %s40, 1
      %p482 = por %p480, %p481
      %p484 = scmp.ne.s32.totalorder %s469, %s483
      %p485 = scmp.eq.s32.totalorder %s40, 0
      %p486 = por %p484, %p485
      %s488 = sadd.s32 %s487, 1
      %p491 = scmp.eq.s32.totalorder %s34, 1
      %p492 = scmp.ne.s32.totalorder %s487, %s489
      %p493 = scmp.eq.s32.totalorder %s34, 0
      %p494 = por %p492, %p493
      %p495 = scmp.ne.s32.totalorder %s487, %s489
      %p496 = scmp.eq.s32.totalorder %s39, 1
      %p497 = por %p495, %p496
      %p498 = scmp.ne.s32.totalorder %s489, %s490
      %p499 = scmp.eq.s32.totalorder %s39, 0
      %p500 = por %p498, %p499
      %p501 = scmp.ne.s32.totalorder %s489, %s490
      %p502 = scmp.eq.s32.totalorder %s40, 1
      %p503 = por %p501, %p502
      %p505 = scmp.ne.s32.totalorder %s490, %s504
      %p506 = scmp.eq.s32.totalorder %s40, 0
      %p507 = por %p505, %p506
      %s508 = ssub.s32 %s34, %s41
      %p509 = scmp.eq.s32.totalorder %s508, 0
      %s511 = sadd.s32 %s510, 1
      %s512 = scalar_select %p509, %s510, %s511
      %p515 = pneg %p509
      %p516 = scmp.eq.s32.totalorder %s34, 1
      %p517 = por %p515, %p516
      %p518 = scmp.ne.s32.totalorder %s510, %s513
      %p519 = scmp.eq.s32.totalorder %s34, 0
      %p520 = por %p518, %p519
      %p521 = scmp.ne.s32.totalorder %s510, %s513
      %p522 = scmp.eq.s32.totalorder %s39, 1
      %p523 = por %p521, %p522
      %p524 = scmp.ne.s32.totalorder %s513, %s514
      %p525 = scmp.eq.s32.totalorder %s39, 0
      %p526 = por %p524, %p525
      %p527 = scmp.ne.s32.totalorder %s513, %s514
      %p528 = scmp.eq.s32.totalorder %s40, 1
      %p529 = por %p527, %p528
      %p531 = scmp.ne.s32.totalorder %s514, %s530
      %p532 = scmp.eq.s32.totalorder %s40, 0
      %p533 = por %p531, %p532
      %s534 = ssub.s32 %s34, %s41
      %p535 = scmp.eq.s32.totalorder %s534, 0
      %s537 = sadd.s32 %s536, 1
      %s538 = scalar_select %p535, %s536, %s537
      %p541 = pneg %p535
      %p542 = scmp.eq.s32.totalorder %s34, 1
      %p543 = por %p541, %p542
      %p544 = scmp.ne.s32.totalorder %s536, %s539
      %p545 = scmp.eq.s32.totalorder %s34, 0
      %p546 = por %p544, %p545
      %p547 = scmp.ne.s32.totalorder %s536, %s539
      %p548 = scmp.eq.s32.totalorder %s39, 1
      %p549 = por %p547, %p548
      %p550 = scmp.ne.s32.totalorder %s539, %s540
      %p551 = scmp.eq.s32.totalorder %s39, 0
      %p552 = por %p550, %p551
      %p553 = scmp.ne.s32.totalorder %s539, %s540
      %p554 = scmp.eq.s32.totalorder %s40, 1
      %p555 = por %p553, %p554
      %p557 = scmp.ne.s32.totalorder %s540, %s556
      %p558 = scmp.eq.s32.totalorder %s40, 0
      %p559 = por %p557, %p558
      %p560 = scmp.le.s32.totalorder 1, %s34
      %p561 = scmp.lt.s32.totalorder %s34, 3
      %p562 = pnand %p560, %p561
      %p563 = pneg %p562
      // Predicated region
      $region9: #{learn_loss_active_forward.1} parent=5 // pred_check
        _
      $region10: #{learn_loss_active_forward.1} parent=5 // pred_check_branch
        %565 = sbr.rel (%p562) target = $region12
      $region11: #{learn_loss_active_forward.1} parent=5 // pred_region
        %s566 = ssub.s32 %s34, 1
        // Predicated region
        $region13: #{learn_loss_active_forward.1} parent=11 // pred_check
          %p567 = pneg %p185
        $region14: #{learn_loss_active_forward.1} parent=11 // pred_check_branch
          %569 = sbr.rel (%p567) target = $region16
        $region15: #{learn_loss_active_forward.1} parent=11 // pred_region
          _
        $region16: #{learn_loss_active_forward.1} parent=11 // pred_fallthru
          _
        // Predicated region
        $region17: #{learn_loss_active_forward.1} parent=11 // pred_check
          %p570 = pneg %p206
        $region18: #{learn_loss_active_forward.1} parent=11 // pred_check_branch
          %572 = sbr.rel (%p570) target = $region20
        $region19: #{learn_loss_active_forward.1} parent=11 // pred_region
          _
        $region20: #{learn_loss_active_forward.1} parent=11 // pred_fallthru
          _
        // Predicated region
        $region21: #{learn_loss_active_forward.1} parent=11 // pred_check
          %p573 = pneg %p227
        $region22: #{learn_loss_active_forward.1} parent=11 // pred_check_branch
          %575 = sbr.rel (%p573) target = $region24
        $region23: #{learn_loss_active_forward.1} parent=11 // pred_region
          _
        $region24: #{learn_loss_active_forward.1} parent=11 // pred_fallthru
          _
        // Predicated region
        $region25: #{learn_loss_active_forward.1} parent=11 // pred_check
          %p576 = pneg %p248
        $region26: #{learn_loss_active_forward.1} parent=11 // pred_check_branch
          %578 = sbr.rel (%p576) target = $region28
        $region27: #{learn_loss_active_forward.1} parent=11 // pred_region
          _
        $region28: #{learn_loss_active_forward.1} parent=11 // pred_fallthru
          _
        // Predicated region
        $region29: #{learn_loss_active_forward.1} parent=11 // pred_check
          %p579 = pneg %p269
        $region30: #{learn_loss_active_forward.1} parent=11 // pred_check_branch
          %581 = sbr.rel (%p579) target = $region32
        $region31: #{learn_loss_active_forward.1} parent=11 // pred_region
          _
        $region32: #{learn_loss_active_forward.1} parent=11 // pred_fallthru
          _
        // Predicated region
        $region33: #{learn_loss_active_forward.1} parent=11 // pred_check
          %p582 = pneg %p290
        $region34: #{learn_loss_active_forward.1} parent=11 // pred_check_branch
          %584 = sbr.rel (%p582) target = $region36
        $region35: #{learn_loss_active_forward.1} parent=11 // pred_region
          _
        $region36: #{learn_loss_active_forward.1} parent=11 // pred_fallthru
          _
        // Predicated region
        $region37: #{learn_loss_active_forward.1} parent=11 // pred_check
          %p585 = pneg %p311
        $region38: #{learn_loss_active_forward.1} parent=11 // pred_check_branch
          %587 = sbr.rel (%p585) target = $region40
        $region39: #{learn_loss_active_forward.1} parent=11 // pred_region
          _
        $region40: #{learn_loss_active_forward.1} parent=11 // pred_fallthru
          _
        // Predicated region
        $region41: #{learn_loss_active_forward.1} parent=11 // pred_check
          %p588 = pneg %p332
        $region42: #{learn_loss_active_forward.1} parent=11 // pred_check_branch
          %590 = sbr.rel (%p588) target = $region44
        $region43: #{learn_loss_active_forward.1} parent=11 // pred_region
          _
        $region44: #{learn_loss_active_forward.1} parent=11 // pred_fallthru
          _
        // Predicated region
        $region45: #{learn_loss_active_forward.1} parent=11 // pred_check
          %p591 = pneg %p353
        $region46: #{learn_loss_active_forward.1} parent=11 // pred_check_branch
          %593 = sbr.rel (%p591) target = $region48
        $region47: #{learn_loss_active_forward.1} parent=11 // pred_region
          _
        $region48: #{learn_loss_active_forward.1} parent=11 // pred_fallthru
          _
        // Predicated region
        $region49: #{learn_loss_active_forward.1} parent=11 // pred_check
          %p594 = pneg %p374
        $region50: #{learn_loss_active_forward.1} parent=11 // pred_check_branch
          %596 = sbr.rel (%p594) target = $region52
        $region51: #{learn_loss_active_forward.1} parent=11 // pred_region
          _
        $region52: #{learn_loss_active_forward.1} parent=11 // pred_fallthru
          _
        // Predicated region
        $region53: #{learn_loss_active_forward.1} parent=11 // pred_check
          %p597 = pneg %p395
        $region54: #{learn_loss_active_forward.1} parent=11 // pred_check_branch
          %599 = sbr.rel (%p597) target = $region56
        $region55: #{learn_loss_active_forward.1} parent=11 // pred_region
          _
        $region56: #{learn_loss_active_forward.1} parent=11 // pred_fallthru
          _
        // Predicated region
        $region57: #{learn_loss_active_forward.1} parent=11 // pred_check
          %p600 = pneg %p416
        $region58: #{learn_loss_active_forward.1} parent=11 // pred_check_branch
          %602 = sbr.rel (%p600) target = $region60
        $region59: #{learn_loss_active_forward.1} parent=11 // pred_region
          _
        $region60: #{learn_loss_active_forward.1} parent=11 // pred_fallthru
          _
        // Predicated region
        $region61: #{learn_loss_active_forward.1} parent=11 // pred_check
          %p603 = pneg %p437
        $region62: #{learn_loss_active_forward.1} parent=11 // pred_check_branch
          %605 = sbr.rel (%p603) target = $region64
        $region63: #{learn_loss_active_forward.1} parent=11 // pred_region
          _
        $region64: #{learn_loss_active_forward.1} parent=11 // pred_fallthru
          _
        // Predicated region
        $region65: #{learn_loss_active_forward.1} parent=11 // pred_check
          %p606 = pneg %p458
        $region66: #{learn_loss_active_forward.1} parent=11 // pred_check_branch
          %608 = sbr.rel (%p606) target = $region68
        $region67: #{learn_loss_active_forward.1} parent=11 // pred_region
          _
        $region68: #{learn_loss_active_forward.1} parent=11 // pred_fallthru
          _
        // Predicated region
        $region69: #{learn_loss_active_forward.1} parent=11 // pred_check
          %p609 = pneg %p479
        $region70: #{learn_loss_active_forward.1} parent=11 // pred_check_branch
          %611 = sbr.rel (%p609) target = $region72
        $region71: #{learn_loss_active_forward.1} parent=11 // pred_region
          _
        $region72: #{learn_loss_active_forward.1} parent=11 // pred_fallthru
          _
        // Predicated region
        $region73: #{learn_loss_active_forward.1} parent=11 // pred_check
          %p612 = pneg %p500
        $region74: #{learn_loss_active_forward.1} parent=11 // pred_check_branch
          %614 = sbr.rel (%p612) target = $region76
        $region75: #{learn_loss_active_forward.1} parent=11 // pred_region
          _
        $region76: #{learn_loss_active_forward.1} parent=11 // pred_fallthru
          _
      $region12: #{learn_loss_active_forward.1} parent=5 // pred_fallthru
        _
      %p615 = scmp.lt.s32.totalorder %s34, 2
      // Predicated region
      $region77: #{learn_loss_active_forward.1} parent=5 // pred_check
        %p616 = pneg %p615
      $region78: #{learn_loss_active_forward.1} parent=5 // pred_check_branch
        %618 = sbr.rel (%p616) target = $region80
      $region79: #{learn_loss_active_forward.1} parent=5 // pred_region
        // Predicated region
        $region81: #{learn_loss_active_forward.1} parent=79 // pred_check
          %p619 = pneg %p54
        $region82: #{learn_loss_active_forward.1} parent=79 // pred_check_branch
          %621 = sbr.rel (%p619) target = $region84
        $region83: #{learn_loss_active_forward.1} parent=79 // pred_region
          %p622 = scmp.lt.s32.totalorder %s34, 1
          %s623 = scalar_select %p622, %s34, 1
          %s624 = smul.addr %s623, 32
          %s625 = smul.addr %s624, 4
          %s626 = scalar_lea.vmem %s0, %s625
        $region84: #{learn_loss_active_forward.1} parent=79 // pred_fallthru
          _
        // Predicated region
        $region85: #{learn_loss_active_forward.1} parent=79 // pred_check
          %p627 = pneg %p80
        $region86: #{learn_loss_active_forward.1} parent=79 // pred_check_branch
          %629 = sbr.rel (%p627) target = $region88
        $region87: #{learn_loss_active_forward.1} parent=79 // pred_region
          %p630 = scmp.lt.s32.totalorder %s34, 1
          %s631 = scalar_select %p630, %s34, 1
          %s632 = smul.addr %s631, 8
          %s633 = smul.addr %s632, 4
          %s634 = scalar_lea.vmem %s1, %s633
        $region88: #{learn_loss_active_forward.1} parent=79 // pred_fallthru
          _
        // Predicated region
        $region89: #{learn_loss_active_forward.1} parent=79 // pred_check
          %p635 = pneg %p106
        $region90: #{learn_loss_active_forward.1} parent=79 // pred_check_branch
          %637 = sbr.rel (%p635) target = $region92
        $region91: #{learn_loss_active_forward.1} parent=79 // pred_region
          %p638 = scmp.lt.s32.totalorder %s34, 1
          %s639 = scalar_select %p638, %s34, 1
          %s640 = smul.addr %s639, 2
          %s641 = smul.addr %s640, 4
          %s642 = scalar_lea.vmem %s2, %s641
        $region92: #{learn_loss_active_forward.1} parent=79 // pred_fallthru
          _
        // Predicated region
        $region93: #{learn_loss_active_forward.1} parent=79 // pred_check
          %p643 = pneg %p132
        $region94: #{learn_loss_active_forward.1} parent=79 // pred_check_branch
          %645 = sbr.rel (%p643) target = $region96
        $region95: #{learn_loss_active_forward.1} parent=79 // pred_region
          %p646 = scmp.lt.s32.totalorder %s34, 1
          %s647 = scalar_select %p646, %s34, 1
          %s648 = smul.addr %s647, 4
          %s649 = scalar_lea.vmem %s3, %s648
        $region96: #{learn_loss_active_forward.1} parent=79 // pred_fallthru
          _
        // Predicated region
        $region97: #{learn_loss_active_forward.1} parent=79 // pred_check
          %p650 = pneg %p158
        $region98: #{learn_loss_active_forward.1} parent=79 // pred_check_branch
          %652 = sbr.rel (%p650) target = $region100
        $region99: #{learn_loss_active_forward.1} parent=79 // pred_region
          %p653 = scmp.lt.s32.totalorder %s34, 1
          %s654 = scalar_select %p653, %s34, 1
          %s655 = smul.addr %s654, 4
          %s656 = scalar_lea.vmem %s4, %s655
        $region100: #{learn_loss_active_forward.1} parent=79 // pred_fallthru
          _
      $region80: #{learn_loss_active_forward.1} parent=5 // pred_fallthru
        _
      %p657 = scmp.le.s32.totalorder 1, %s34
      %p658 = scmp.lt.s32.totalorder %s34, 3
      %p659 = pnand %p657, %p658
      %p660 = pneg %p659
      // Predicated region
      $region101: #{learn_loss_active_forward.1} parent=5 // pred_check
        _
      $region102: #{learn_loss_active_forward.1} parent=5 // pred_check_branch
        %662 = sbr.rel (%p659) target = $region104
      $region103: #{learn_loss_active_forward.1} parent=5 // pred_region
        %s663 = ssub.s32 %s34, 1
        %p664 = scmp.lt.s32.totalorder %s39, 1
        %s665 = scalar_select %p664, %s39, 1
        %s666 = smul.addr %s665, 32
        %s667 = smul.addr %s666, 4
        %s668 = scalar_lea.vmem %s0, %s667
        %p669 = pneg %p60
        %p670 = pneg %p57
        %p671 = scmp.lt.s32.totalorder %s39, 1
        %s672 = scalar_select %p671, %s39, 1
        %s673 = smul.addr %s672, 8
        %s674 = smul.addr %s673, 4
        %s675 = scalar_lea.vmem %s1, %s674
        %p676 = pneg %p86
        %p677 = pneg %p83
        %p678 = scmp.lt.s32.totalorder %s39, 1
        %s679 = scalar_select %p678, %s39, 1
        %s680 = smul.addr %s679, 2
        %s681 = smul.addr %s680, 4
        %s682 = scalar_lea.vmem %s2, %s681
        %p683 = pneg %p112
        %p684 = pneg %p109
        %p685 = scmp.lt.s32.totalorder %s39, 1
        %s686 = scalar_select %p685, %s39, 1
        %s687 = smul.addr %s686, 4
        %s688 = scalar_lea.vmem %s3, %s687
        %p689 = pneg %p138
        %p690 = pneg %p135
        %p691 = scmp.lt.s32.totalorder %s39, 1
        %s692 = scalar_select %p691, %s39, 1
        %s693 = smul.addr %s692, 4
        %s694 = scalar_lea.vmem %s4, %s693
        %p695 = pneg %p164
        %p696 = pneg %p161
        %p697 = pneg %p185
        %p698 = pneg %p182
        %p699 = pneg %p206
        %p700 = pneg %p203
        %p701 = pneg %p227
        %p702 = pneg %p224
        %p703 = pneg %p248
        %p704 = pneg %p245
        %p705 = pneg %p269
        %p706 = pneg %p266
        %p707 = pneg %p290
        %p708 = pneg %p287
        %p709 = pneg %p311
        %p710 = pneg %p308
        %p711 = pneg %p332
        %p712 = pneg %p329
        %p713 = pneg %p353
        %p714 = pneg %p350
        %p715 = pneg %p374
        %p716 = pneg %p371
        %p717 = pneg %p395
        %p718 = pneg %p392
        %p719 = pneg %p416
        %p720 = pneg %p413
        %p721 = pneg %p437
        %p722 = pneg %p434
        %p723 = pneg %p458
        %p724 = pneg %p455
        %p725 = pneg %p479
        %p726 = pneg %p476
        %p727 = pneg %p500
        %p728 = pneg %p497
        %p729 = pneg %p526
        %p730 = pneg %p523
        %p731 = scmp.lt.s32.totalorder %s39, 1
        %s732 = scalar_select %p731, %s39, 1
        %s733 = scalar_lea.vmem %s21, %s732
        %p734 = pneg %p552
        %p735 = pneg %p549
        %s736 = sand.u32 %s539, 1
        %s737 = scalar_lea.sflag [#allocation4], %s736
        %s738 = sand.u32 %s539, 1
        %s739 = scalar_lea.vmem [#allocation3], %s738
        %p740 = scmp.lt.s32.totalorder %s39, 1
        %s741 = scalar_select %p740, %s39, 1
        %s742 = smul.addr %s741, 32
        %s743 = smul.addr %s742, 4
        %s744 = scalar_lea.vmem %s0, %s743
        %p745 = scmp.lt.s32.totalorder %s39, 1
        %s746 = scalar_select %p745, %s39, 1
        %s747 = smul.addr %s746, 8
        %s748 = smul.addr %s747, 4
        %s749 = scalar_lea.vmem %s1, %s748
        %p750 = scmp.lt.s32.totalorder %s39, 1
        %s751 = scalar_select %p750, %s39, 1
        %s752 = smul.addr %s751, 2
        %s753 = smul.addr %s752, 4
        %s754 = scalar_lea.vmem %s2, %s753
        %p755 = scmp.lt.s32.totalorder %s39, 1
        %s756 = scalar_select %p755, %s39, 1
        %s757 = smul.addr %s756, 4
        %s758 = scalar_lea.vmem %s3, %s757
        %p759 = scmp.lt.s32.totalorder %s39, 1
        %s760 = scalar_select %p759, %s39, 1
        %s761 = smul.addr %s760, 4
        %s762 = scalar_lea.vmem %s4, %s761
        %p763 = scmp.lt.s32.totalorder %s39, 1
        %s764 = scalar_select %p763, %s39, 1
        %s765 = scalar_lea.vmem %s21, %s764
        %v766 = vld [vmem:[%s744] sm:$0xff]
        %v767 = vld [vmem:[%s744 + $0x8] sm:$0xff]
        %v768 = vld [vmem:[%s744 + $0x10] sm:$0xff]
        %v769 = vld [vmem:[%s744 + $0x18] sm:$0xff]
        %v770 = vld [vmem:[%s744 + $0x20] sm:$0xff]
        %v771 = vld [vmem:[%s744 + $0x28] sm:$0xff]
        %v772 = vld [vmem:[%s744 + $0x30] sm:$0xff]
        %v773 = vld [vmem:[%s744 + $0x38] sm:$0xff]
        %v774 = vld [vmem:[%s744 + $0x40] sm:$0xff]
        %v775 = vld [vmem:[%s744 + $0x48] sm:$0xff]
        %v776 = vld [vmem:[%s744 + $0x50] sm:$0xff]
        %v777 = vld [vmem:[%s744 + $0x58] sm:$0xff]
        %v778 = vld [vmem:[%s744 + $0x60] sm:$0xff]
        %v779 = vld [vmem:[%s744 + $0x68] sm:$0xff]
        %v780 = vld [vmem:[%s744 + $0x70] sm:$0xff]
        %v781 = vld [vmem:[%s744 + $0x78] sm:$0xff]
        %v782 = vld [vmem:[%s5] sm:$0xf]
        %s783 = scalar_lea.vmem %s5, 4
        %v784 = vld [vmem:[%s783] sm:$0xf]
        %v789 = vcombine.high %v770, %v770
        %v790 = vcombine.high %v771, %v771
        %v791 = vcombine.high %v772, %v772
        %v792 = vcombine.high %v773, %v773
        %vm793 = vcmask 31744
        %v795 = vsel %vm793, %v784, 0
        %vm797 = vcmask 1043456
        %v798 = vsel %vm797, %v770, 0
        %v800 = vsel %vm797, %v789, 0
        %v802 = vsel %vm797, %v771, 0
        %v804 = vsel %vm797, %v790, 0
        %v806 = vsel %vm797, %v772, 0
        %v808 = vsel %vm797, %v791, 0
        %v810 = vsel %vm797, %v773, 0
        %v812 = vsel %vm797, %v792, 0
        %814 = vmatprep.subr.mxu0 %v800
        %815 = vmatpush1.msra.mxu0 %v798
        %816 = vmatprep.subr.mxu0 0.0
        %817 = vmatpush1.msra.mxu0 0.0
        %818 = vmatprep.subr.mxu0 0.0
        %819 = vmatpush1.msra.mxu0 0.0
        %820 = vmatprep.subr.mxu0 0.0
        %821 = vmatpush1.msra.mxu0 0.0
        %822 = vmatprep.subr.mxu0 0.0
        %823 = vmatpush1.msra.mxu0 0.0
        %824 = vmatprep.subr.mxu0 0.0
        %825 = vmatpush1.msra.mxu0 0.0
        %826 = vmatprep.subr.mxu0 0.0
        %827 = vmatpush1.msra.mxu0 0.0
        %828 = vmatprep.subr.mxu0 0.0
        %829 = vmatpush1.msra.mxu0 0.0
        %830 = vmatprep.subr.mxu0 0.0
        %831 = vmatpush1.msra.mxu0 0.0
        %832 = vmatprep.subr.mxu0 0.0
        %833 = vmatpush1.msra.mxu0 0.0
        %834 = vmatprep.subr.mxu0 0.0
        %835 = vmatpush1.msra.mxu0 0.0
        %836 = vmatprep.subr.mxu0 0.0
        %837 = vmatpush1.msra.mxu0 0.0
        %838 = vmatprep.subr.mxu0 0.0
        %839 = vmatpush1.msra.mxu0 0.0
        %840 = vmatprep.subr.mxu0 0.0
        %841 = vmatpush1.msra.mxu0 0.0
        %842 = vmatprep.subr.mxu0 0.0
        %843 = vmatpush1.msra.mxu0 0.0
        %844 = vmatprep.subr.mxu0 0.0
        %845 = vmatpush1.msra.mxu0 0.0
        %846 = vmatprep.subr.mxu0 0.0
        %847 = vmatpush1.msra.mxu0 0.0
        %848 = vmatprep.subr.mxu0 0.0
        %849 = vmatpush1.msra.mxu0 0.0
        %850 = vmatprep.subr.mxu0 0.0
        %851 = vmatpush1.msra.mxu0 0.0
        %852 = vmatprep.subr.mxu0 0.0
        %853 = vmatpush1.msra.mxu0 0.0
        %854 = vmatprep.subr.mxu0 0.0
        %855 = vmatpush1.msra.mxu0 0.0
        %856 = vmatprep.subr.mxu0 0.0
        %857 = vmatpush1.msra.mxu0 0.0
        %858 = vmatprep.subr.mxu0 0.0
        %859 = vmatpush1.msra.mxu0 0.0
        %860 = vmatprep.subr.mxu0 0.0
        %861 = vmatpush1.msra.mxu0 0.0
        %862 = vmatprep.subr.mxu0 0.0
        %863 = vmatpush1.msra.mxu0 0.0
        %864 = vmatprep.subr.mxu0 0.0
        %865 = vmatpush1.msra.mxu0 0.0
        %866 = vmatprep.subr.mxu0 0.0
        %867 = vmatpush1.msra.mxu0 0.0
        %868 = vmatprep.subr.mxu0 0.0
        %869 = vmatpush1.msra.mxu0 0.0
        %870 = vmatprep.subr.mxu0 0.0
        %871 = vmatpush1.msra.mxu0 0.0
        %872 = vmatprep.subr.mxu0 0.0
        %873 = vmatpush1.msra.mxu0 0.0
        %874 = vmatprep.subr.mxu0 0.0
        %875 = vmatpush1.msra.mxu0 0.0
        %876 = vmatprep.subr.mxu0 0.0
        %877 = vmatpush1.msra.mxu0 0.0
        %878 = vmatprep.mubr.f32.mxu0 0.0
        %879 = vmatmul.mubr.f32.gmra.mrb[0].mxu0 %v795
        %v880 = vpop.f32.mrb[0].mxu0
        %v881 = vadd.f32 0.0, %v880
        %v882 = vpop.f32.mrb[0].mxu0
        %v883 = vadd.f32 0.0, %v882
        %884 = vdwg.mxu0
        %885 = vmatprep.subr.mxu0 %v804
        %886 = vmatpush1.msra.mxu0 %v802
        %887 = vmatprep.subr.mxu0 0.0
        %888 = vmatpush1.msra.mxu0 0.0
        %889 = vmatprep.subr.mxu0 0.0
        %890 = vmatpush1.msra.mxu0 0.0
        %891 = vmatprep.subr.mxu0 0.0
        %892 = vmatpush1.msra.mxu0 0.0
        %893 = vmatprep.subr.mxu0 0.0
        %894 = vmatpush1.msra.mxu0 0.0
        %895 = vmatprep.subr.mxu0 0.0
        %896 = vmatpush1.msra.mxu0 0.0
        %897 = vmatprep.subr.mxu0 0.0
        %898 = vmatpush1.msra.mxu0 0.0
        %899 = vmatprep.subr.mxu0 0.0
        %900 = vmatpush1.msra.mxu0 0.0
        %901 = vmatprep.subr.mxu0 0.0
        %902 = vmatpush1.msra.mxu0 0.0
        %903 = vmatprep.subr.mxu0 0.0
        %904 = vmatpush1.msra.mxu0 0.0
        %905 = vmatprep.subr.mxu0 0.0
        %906 = vmatpush1.msra.mxu0 0.0
        %907 = vmatprep.subr.mxu0 0.0
        %908 = vmatpush1.msra.mxu0 0.0
        %909 = vmatprep.subr.mxu0 0.0
        %910 = vmatpush1.msra.mxu0 0.0
        %911 = vmatprep.subr.mxu0 0.0
        %912 = vmatpush1.msra.mxu0 0.0
        %913 = vmatprep.subr.mxu0 0.0
        %914 = vmatpush1.msra.mxu0 0.0
        %915 = vmatprep.subr.mxu0 0.0
        %916 = vmatpush1.msra.mxu0 0.0
        %917 = vmatprep.subr.mxu0 0.0
        %918 = vmatpush1.msra.mxu0 0.0
        %919 = vmatprep.subr.mxu0 0.0
        %920 = vmatpush1.msra.mxu0 0.0
        %921 = vmatprep.subr.mxu0 0.0
        %922 = vmatpush1.msra.mxu0 0.0
        %923 = vmatprep.subr.mxu0 0.0
        %924 = vmatpush1.msra.mxu0 0.0
        %925 = vmatprep.subr.mxu0 0.0
        %926 = vmatpush1.msra.mxu0 0.0
        %927 = vmatprep.subr.mxu0 0.0
        %928 = vmatpush1.msra.mxu0 0.0
        %929 = vmatprep.subr.mxu0 0.0
        %930 = vmatpush1.msra.mxu0 0.0
        %931 = vmatprep.subr.mxu0 0.0
        %932 = vmatpush1.msra.mxu0 0.0
        %933 = vmatprep.subr.mxu0 0.0
        %934 = vmatpush1.msra.mxu0 0.0
        %935 = vmatprep.subr.mxu0 0.0
        %936 = vmatpush1.msra.mxu0 0.0
        %937 = vmatprep.subr.mxu0 0.0
        %938 = vmatpush1.msra.mxu0 0.0
        %939 = vmatprep.subr.mxu0 0.0
        %940 = vmatpush1.msra.mxu0 0.0
        %941 = vmatprep.subr.mxu0 0.0
        %942 = vmatpush1.msra.mxu0 0.0
        %943 = vmatprep.subr.mxu0 0.0
        %944 = vmatpush1.msra.mxu0 0.0
        %945 = vmatprep.subr.mxu0 0.0
        %946 = vmatpush1.msra.mxu0 0.0
        %947 = vmatprep.subr.mxu0 0.0
        %948 = vmatpush1.msra.mxu0 0.0
        %949 = vmatprep.mubr.f32.mxu0 0.0
        %950 = vmatmul.mubr.f32.gmra.mrb[0].mxu0 %v795
        %v951 = vpop.f32.mrb[0].mxu0
        %v952 = vadd.f32 0.0, %v951
        %v953 = vpop.f32.mrb[0].mxu0
        %v954 = vadd.f32 0.0, %v953
        %955 = vdwg.mxu0
        %956 = vmatprep.subr.mxu0 %v808
        %957 = vmatpush1.msra.mxu0 %v806
        %958 = vmatprep.subr.mxu0 0.0
        %959 = vmatpush1.msra.mxu0 0.0
        %960 = vmatprep.subr.mxu0 0.0
        %961 = vmatpush1.msra.mxu0 0.0
        %962 = vmatprep.subr.mxu0 0.0
        %963 = vmatpush1.msra.mxu0 0.0
        %964 = vmatprep.subr.mxu0 0.0
        %965 = vmatpush1.msra.mxu0 0.0
        %966 = vmatprep.subr.mxu0 0.0
        %967 = vmatpush1.msra.mxu0 0.0
        %968 = vmatprep.subr.mxu0 0.0
        %969 = vmatpush1.msra.mxu0 0.0
        %970 = vmatprep.subr.mxu0 0.0
        %971 = vmatpush1.msra.mxu0 0.0
        %972 = vmatprep.subr.mxu0 0.0
        %973 = vmatpush1.msra.mxu0 0.0
        %974 = vmatprep.subr.mxu0 0.0
        %975 = vmatpush1.msra.mxu0 0.0
        %976 = vmatprep.subr.mxu0 0.0
        %977 = vmatpush1.msra.mxu0 0.0
        %978 = vmatprep.subr.mxu0 0.0
        %979 = vmatpush1.msra.mxu0 0.0
        %980 = vmatprep.subr.mxu0 0.0
        %981 = vmatpush1.msra.mxu0 0.0
        %982 = vmatprep.subr.mxu0 0.0
        %983 = vmatpush1.msra.mxu0 0.0
        %984 = vmatprep.subr.mxu0 0.0
        %985 = vmatpush1.msra.mxu0 0.0
        %986 = vmatprep.subr.mxu0 0.0
        %987 = vmatpush1.msra.mxu0 0.0
        %988 = vmatprep.subr.mxu0 0.0
        %989 = vmatpush1.msra.mxu0 0.0
        %990 = vmatprep.subr.mxu0 0.0
        %991 = vmatpush1.msra.mxu0 0.0
        %992 = vmatprep.subr.mxu0 0.0
        %993 = vmatpush1.msra.mxu0 0.0
        %994 = vmatprep.subr.mxu0 0.0
        %995 = vmatpush1.msra.mxu0 0.0
        %996 = vmatprep.subr.mxu0 0.0
        %997 = vmatpush1.msra.mxu0 0.0
        %998 = vmatprep.subr.mxu0 0.0
        %999 = vmatpush1.msra.mxu0 0.0
        %1000 = vmatprep.subr.mxu0 0.0
        %1001 = vmatpush1.msra.mxu0 0.0
        %1002 = vmatprep.subr.mxu0 0.0
        %1003 = vmatpush1.msra.mxu0 0.0
        %1004 = vmatprep.subr.mxu0 0.0
        %1005 = vmatpush1.msra.mxu0 0.0
        %1006 = vmatprep.subr.mxu0 0.0
        %1007 = vmatpush1.msra.mxu0 0.0
        %1008 = vmatprep.subr.mxu0 0.0
        %1009 = vmatpush1.msra.mxu0 0.0
        %1010 = vmatprep.subr.mxu0 0.0
        %1011 = vmatpush1.msra.mxu0 0.0
        %1012 = vmatprep.subr.mxu0 0.0
        %1013 = vmatpush1.msra.mxu0 0.0
        %1014 = vmatprep.subr.mxu0 0.0
        %1015 = vmatpush1.msra.mxu0 0.0
        %1016 = vmatprep.subr.mxu0 0.0
        %1017 = vmatpush1.msra.mxu0 0.0
        %1018 = vmatprep.subr.mxu0 0.0
        %1019 = vmatpush1.msra.mxu0 0.0
        %1020 = vmatprep.mubr.f32.mxu0 0.0
        %1021 = vmatmul.mubr.f32.gmra.mrb[0].mxu0 %v795
        %v1022 = vpop.f32.mrb[0].mxu0
        %v1023 = vadd.f32 0.0, %v1022
        %v1024 = vpop.f32.mrb[0].mxu0
        %v1025 = vadd.f32 0.0, %v1024
        %1026 = vdwg.mxu0
        %1027 = vmatprep.subr.mxu0 %v812
        %1028 = vmatpush1.msra.mxu0 %v810
        %1029 = vmatprep.subr.mxu0 0.0
        %1030 = vmatpush1.msra.mxu0 0.0
        %1031 = vmatprep.subr.mxu0 0.0
        %1032 = vmatpush1.msra.mxu0 0.0
        %1033 = vmatprep.subr.mxu0 0.0
        %1034 = vmatpush1.msra.mxu0 0.0
        %1035 = vmatprep.subr.mxu0 0.0
        %1036 = vmatpush1.msra.mxu0 0.0
        %1037 = vmatprep.subr.mxu0 0.0
        %1038 = vmatpush1.msra.mxu0 0.0
        %1039 = vmatprep.subr.mxu0 0.0
        %1040 = vmatpush1.msra.mxu0 0.0
        %1041 = vmatprep.subr.mxu0 0.0
        %1042 = vmatpush1.msra.mxu0 0.0
        %1043 = vmatprep.subr.mxu0 0.0
        %1044 = vmatpush1.msra.mxu0 0.0
        %1045 = vmatprep.subr.mxu0 0.0
        %1046 = vmatpush1.msra.mxu0 0.0
        %1047 = vmatprep.subr.mxu0 0.0
        %1048 = vmatpush1.msra.mxu0 0.0
        %1049 = vmatprep.subr.mxu0 0.0
        %1050 = vmatpush1.msra.mxu0 0.0
        %1051 = vmatprep.subr.mxu0 0.0
        %1052 = vmatpush1.msra.mxu0 0.0
        %1053 = vmatprep.subr.mxu0 0.0
        %1054 = vmatpush1.msra.mxu0 0.0
        %1055 = vmatprep.subr.mxu0 0.0
        %1056 = vmatpush1.msra.mxu0 0.0
        %1057 = vmatprep.subr.mxu0 0.0
        %1058 = vmatpush1.msra.mxu0 0.0
        %1059 = vmatprep.subr.mxu0 0.0
        %1060 = vmatpush1.msra.mxu0 0.0
        %1061 = vmatprep.subr.mxu0 0.0
        %1062 = vmatpush1.msra.mxu0 0.0
        %1063 = vmatprep.subr.mxu0 0.0
        %1064 = vmatpush1.msra.mxu0 0.0
        %1065 = vmatprep.subr.mxu0 0.0
        %1066 = vmatpush1.msra.mxu0 0.0
        %1067 = vmatprep.subr.mxu0 0.0
        %1068 = vmatpush1.msra.mxu0 0.0
        %1069 = vmatprep.subr.mxu0 0.0
        %1070 = vmatpush1.msra.mxu0 0.0
        %1071 = vmatprep.subr.mxu0 0.0
        %1072 = vmatpush1.msra.mxu0 0.0
        %1073 = vmatprep.subr.mxu0 0.0
        %1074 = vmatpush1.msra.mxu0 0.0
        %1075 = vmatprep.subr.mxu0 0.0
        %1076 = vmatpush1.msra.mxu0 0.0
        %1077 = vmatprep.subr.mxu0 0.0
        %1078 = vmatpush1.msra.mxu0 0.0
        %1079 = vmatprep.subr.mxu0 0.0
        %1080 = vmatpush1.msra.mxu0 0.0
        %1081 = vmatprep.subr.mxu0 0.0
        %1082 = vmatpush1.msra.mxu0 0.0
        %1083 = vmatprep.subr.mxu0 0.0
        %1084 = vmatpush1.msra.mxu0 0.0
        %1085 = vmatprep.subr.mxu0 0.0
        %1086 = vmatpush1.msra.mxu0 0.0
        %1087 = vmatprep.subr.mxu0 0.0
        %1088 = vmatpush1.msra.mxu0 0.0
        %1089 = vmatprep.subr.mxu0 0.0
        %1090 = vmatpush1.msra.mxu0 0.0
        %1091 = vmatprep.mubr.f32.mxu0 0.0
        %1092 = vmatmul.mubr.f32.gmra.mrb[0].mxu0 %v795
        %v1093 = vpop.f32.mrb[0].mxu0
        %v1094 = vadd.f32 0.0, %v1093
        %v1095 = vpop.f32.mrb[0].mxu0
        %v1096 = vadd.f32 0.0, %v1095
        %1097 = vdwg.mxu0
        %v1102 = vcombine.high %v766, %v766
        %v1103 = vcombine.high %v767, %v767
        %v1104 = vcombine.high %v768, %v768
        %v1105 = vcombine.high %v769, %v769
        %v1107 = vsel %vm793, %v782, 0
        %v1109 = vsel %vm797, %v766, 0
        %v1111 = vsel %vm797, %v1102, 0
        %v1113 = vsel %vm797, %v767, 0
        %v1115 = vsel %vm797, %v1103, 0
        %v1117 = vsel %vm797, %v768, 0
        %v1119 = vsel %vm797, %v1104, 0
        %v1121 = vsel %vm797, %v769, 0
        %v1123 = vsel %vm797, %v1105, 0
        %1125 = vmatprep.subr.mxu0 %v1111
        %1126 = vmatpush1.msra.mxu0 %v1109
        %1127 = vmatprep.subr.mxu0 0.0
        %1128 = vmatpush1.msra.mxu0 0.0
        %1129 = vmatprep.subr.mxu0 0.0
        %1130 = vmatpush1.msra.mxu0 0.0
        %1131 = vmatprep.subr.mxu0 0.0
        %1132 = vmatpush1.msra.mxu0 0.0
        %1133 = vmatprep.subr.mxu0 0.0
        %1134 = vmatpush1.msra.mxu0 0.0
        %1135 = vmatprep.subr.mxu0 0.0
        %1136 = vmatpush1.msra.mxu0 0.0
        %1137 = vmatprep.subr.mxu0 0.0
        %1138 = vmatpush1.msra.mxu0 0.0
        %1139 = vmatprep.subr.mxu0 0.0
        %1140 = vmatpush1.msra.mxu0 0.0
        %1141 = vmatprep.subr.mxu0 0.0
        %1142 = vmatpush1.msra.mxu0 0.0
        %1143 = vmatprep.subr.mxu0 0.0
        %1144 = vmatpush1.msra.mxu0 0.0
        %1145 = vmatprep.subr.mxu0 0.0
        %1146 = vmatpush1.msra.mxu0 0.0
        %1147 = vmatprep.subr.mxu0 0.0
        %1148 = vmatpush1.msra.mxu0 0.0
        %1149 = vmatprep.subr.mxu0 0.0
        %1150 = vmatpush1.msra.mxu0 0.0
        %1151 = vmatprep.subr.mxu0 0.0
        %1152 = vmatpush1.msra.mxu0 0.0
        %1153 = vmatprep.subr.mxu0 0.0
        %1154 = vmatpush1.msra.mxu0 0.0
        %1155 = vmatprep.subr.mxu0 0.0
        %1156 = vmatpush1.msra.mxu0 0.0
        %1157 = vmatprep.subr.mxu0 0.0
        %1158 = vmatpush1.msra.mxu0 0.0
        %1159 = vmatprep.subr.mxu0 0.0
        %1160 = vmatpush1.msra.mxu0 0.0
        %1161 = vmatprep.subr.mxu0 0.0
        %1162 = vmatpush1.msra.mxu0 0.0
        %1163 = vmatprep.subr.mxu0 0.0
        %1164 = vmatpush1.msra.mxu0 0.0
        %1165 = vmatprep.subr.mxu0 0.0
        %1166 = vmatpush1.msra.mxu0 0.0
        %1167 = vmatprep.subr.mxu0 0.0
        %1168 = vmatpush1.msra.mxu0 0.0
        %1169 = vmatprep.subr.mxu0 0.0
        %1170 = vmatpush1.msra.mxu0 0.0
        %1171 = vmatprep.subr.mxu0 0.0
        %1172 = vmatpush1.msra.mxu0 0.0
        %1173 = vmatprep.subr.mxu0 0.0
        %1174 = vmatpush1.msra.mxu0 0.0
        %1175 = vmatprep.subr.mxu0 0.0
        %1176 = vmatpush1.msra.mxu0 0.0
        %1177 = vmatprep.subr.mxu0 0.0
        %1178 = vmatpush1.msra.mxu0 0.0
        %1179 = vmatprep.subr.mxu0 0.0
        %1180 = vmatpush1.msra.mxu0 0.0
        %1181 = vmatprep.subr.mxu0 0.0
        %1182 = vmatpush1.msra.mxu0 0.0
        %1183 = vmatprep.subr.mxu0 0.0
        %1184 = vmatpush1.msra.mxu0 0.0
        %1185 = vmatprep.subr.mxu0 0.0
        %1186 = vmatpush1.msra.mxu0 0.0
        %1187 = vmatprep.subr.mxu0 0.0
        %1188 = vmatpush1.msra.mxu0 0.0
        %1189 = vmatprep.mubr.f32.mxu0 0.0
        %1190 = vmatmul.mubr.f32.gmra.mrb[0].mxu0 %v1107
        %v1191 = vpop.f32.mrb[0].mxu0
        %v1192 = vadd.f32 %v881, %v1191
        %v1193 = vpop.f32.mrb[0].mxu0
        %v1194 = vadd.f32 %v883, %v1193
        %1195 = vdwg.mxu0
        %1196 = vmatprep.subr.mxu0 %v1115
        %1197 = vmatpush1.msra.mxu0 %v1113
        %1198 = vmatprep.subr.mxu0 0.0
        %1199 = vmatpush1.msra.mxu0 0.0
        %1200 = vmatprep.subr.mxu0 0.0
        %1201 = vmatpush1.msra.mxu0 0.0
        %1202 = vmatprep.subr.mxu0 0.0
        %1203 = vmatpush1.msra.mxu0 0.0
        %1204 = vmatprep.subr.mxu0 0.0
        %1205 = vmatpush1.msra.mxu0 0.0
        %1206 = vmatprep.subr.mxu0 0.0
        %1207 = vmatpush1.msra.mxu0 0.0
        %1208 = vmatprep.subr.mxu0 0.0
        %1209 = vmatpush1.msra.mxu0 0.0
        %1210 = vmatprep.subr.mxu0 0.0
        %1211 = vmatpush1.msra.mxu0 0.0
        %1212 = vmatprep.subr.mxu0 0.0
        %1213 = vmatpush1.msra.mxu0 0.0
        %1214 = vmatprep.subr.mxu0 0.0
        %1215 = vmatpush1.msra.mxu0 0.0
        %1216 = vmatprep.subr.mxu0 0.0
        %1217 = vmatpush1.msra.mxu0 0.0
        %1218 = vmatprep.subr.mxu0 0.0
        %1219 = vmatpush1.msra.mxu0 0.0
        %1220 = vmatprep.subr.mxu0 0.0
        %1221 = vmatpush1.msra.mxu0 0.0
        %1222 = vmatprep.subr.mxu0 0.0
        %1223 = vmatpush1.msra.mxu0 0.0
        %1224 = vmatprep.subr.mxu0 0.0
        %1225 = vmatpush1.msra.mxu0 0.0
        %1226 = vmatprep.subr.mxu0 0.0
        %1227 = vmatpush1.msra.mxu0 0.0
        %1228 = vmatprep.subr.mxu0 0.0
        %1229 = vmatpush1.msra.mxu0 0.0
        %1230 = vmatprep.subr.mxu0 0.0
        %1231 = vmatpush1.msra.mxu0 0.0
        %1232 = vmatprep.subr.mxu0 0.0
        %1233 = vmatpush1.msra.mxu0 0.0
        %1234 = vmatprep.subr.mxu0 0.0
        %1235 = vmatpush1.msra.mxu0 0.0
        %1236 = vmatprep.subr.mxu0 0.0
        %1237 = vmatpush1.msra.mxu0 0.0
        %1238 = vmatprep.subr.mxu0 0.0
        %1239 = vmatpush1.msra.mxu0 0.0
        %1240 = vmatprep.subr.mxu0 0.0
        %1241 = vmatpush1.msra.mxu0 0.0
        %1242 = vmatprep.subr.mxu0 0.0
        %1243 = vmatpush1.msra.mxu0 0.0
        %1244 = vmatprep.subr.mxu0 0.0
        %1245 = vmatpush1.msra.mxu0 0.0
        %1246 = vmatprep.subr.mxu0 0.0
        %1247 = vmatpush1.msra.mxu0 0.0
        %1248 = vmatprep.subr.mxu0 0.0
        %1249 = vmatpush1.msra.mxu0 0.0
        %1250 = vmatprep.subr.mxu0 0.0
        %1251 = vmatpush1.msra.mxu0 0.0
        %1252 = vmatprep.subr.mxu0 0.0
        %1253 = vmatpush1.msra.mxu0 0.0
        %1254 = vmatprep.subr.mxu0 0.0
        %1255 = vmatpush1.msra.mxu0 0.0
        %1256 = vmatprep.subr.mxu0 0.0
        %1257 = vmatpush1.msra.mxu0 0.0
        %1258 = vmatprep.subr.mxu0 0.0
        %1259 = vmatpush1.msra.mxu0 0.0
        %1260 = vmatprep.mubr.f32.mxu0 0.0
        %1261 = vmatmul.mubr.f32.gmra.mrb[0].mxu0 %v1107
        %v1262 = vpop.f32.mrb[0].mxu0
        %v1263 = vadd.f32 %v952, %v1262
        %v1264 = vpop.f32.mrb[0].mxu0
        %v1265 = vadd.f32 %v954, %v1264
        %1266 = vdwg.mxu0
        %1267 = vmatprep.subr.mxu0 %v1119
        %1268 = vmatpush1.msra.mxu0 %v1117
        %1269 = vmatprep.subr.mxu0 0.0
        %1270 = vmatpush1.msra.mxu0 0.0
        %1271 = vmatprep.subr.mxu0 0.0
        %1272 = vmatpush1.msra.mxu0 0.0
        %1273 = vmatprep.subr.mxu0 0.0
        %1274 = vmatpush1.msra.mxu0 0.0
        %1275 = vmatprep.subr.mxu0 0.0
        %1276 = vmatpush1.msra.mxu0 0.0
        %1277 = vmatprep.subr.mxu0 0.0
        %1278 = vmatpush1.msra.mxu0 0.0
        %1279 = vmatprep.subr.mxu0 0.0
        %1280 = vmatpush1.msra.mxu0 0.0
        %1281 = vmatprep.subr.mxu0 0.0
        %1282 = vmatpush1.msra.mxu0 0.0
        %1283 = vmatprep.subr.mxu0 0.0
        %1284 = vmatpush1.msra.mxu0 0.0
        %1285 = vmatprep.subr.mxu0 0.0
        %1286 = vmatpush1.msra.mxu0 0.0
        %1287 = vmatprep.subr.mxu0 0.0
        %1288 = vmatpush1.msra.mxu0 0.0
        %1289 = vmatprep.subr.mxu0 0.0
        %1290 = vmatpush1.msra.mxu0 0.0
        %1291 = vmatprep.subr.mxu0 0.0
        %1292 = vmatpush1.msra.mxu0 0.0
        %1293 = vmatprep.subr.mxu0 0.0
        %1294 = vmatpush1.msra.mxu0 0.0
        %1295 = vmatprep.subr.mxu0 0.0
        %1296 = vmatpush1.msra.mxu0 0.0
        %1297 = vmatprep.subr.mxu0 0.0
        %1298 = vmatpush1.msra.mxu0 0.0
        %1299 = vmatprep.subr.mxu0 0.0
        %1300 = vmatpush1.msra.mxu0 0.0
        %1301 = vmatprep.subr.mxu0 0.0
        %1302 = vmatpush1.msra.mxu0 0.0
        %1303 = vmatprep.subr.mxu0 0.0
        %1304 = vmatpush1.msra.mxu0 0.0
        %1305 = vmatprep.subr.mxu0 0.0
        %1306 = vmatpush1.msra.mxu0 0.0
        %1307 = vmatprep.subr.mxu0 0.0
        %1308 = vmatpush1.msra.mxu0 0.0
        %1309 = vmatprep.subr.mxu0 0.0
        %1310 = vmatpush1.msra.mxu0 0.0
        %1311 = vmatprep.subr.mxu0 0.0
        %1312 = vmatpush1.msra.mxu0 0.0
        %1313 = vmatprep.subr.mxu0 0.0
        %1314 = vmatpush1.msra.mxu0 0.0
        %1315 = vmatprep.subr.mxu0 0.0
        %1316 = vmatpush1.msra.mxu0 0.0
        %1317 = vmatprep.subr.mxu0 0.0
        %1318 = vmatpush1.msra.mxu0 0.0
        %1319 = vmatprep.subr.mxu0 0.0
        %1320 = vmatpush1.msra.mxu0 0.0
        %1321 = vmatprep.subr.mxu0 0.0
        %1322 = vmatpush1.msra.mxu0 0.0
        %1323 = vmatprep.subr.mxu0 0.0
        %1324 = vmatpush1.msra.mxu0 0.0
        %1325 = vmatprep.subr.mxu0 0.0
        %1326 = vmatpush1.msra.mxu0 0.0
        %1327 = vmatprep.subr.mxu0 0.0
        %1328 = vmatpush1.msra.mxu0 0.0
        %1329 = vmatprep.subr.mxu0 0.0
        %1330 = vmatpush1.msra.mxu0 0.0
        %1331 = vmatprep.mubr.f32.mxu0 0.0
        %1332 = vmatmul.mubr.f32.gmra.mrb[0].mxu0 %v1107
        %v1333 = vpop.f32.mrb[0].mxu0
        %v1334 = vadd.f32 %v1023, %v1333
        %v1335 = vpop.f32.mrb[0].mxu0
        %v1336 = vadd.f32 %v1025, %v1335
        %1337 = vdwg.mxu0
        %1338 = vmatprep.subr.mxu0 %v1123
        %1339 = vmatpush1.msra.mxu0 %v1121
        %1340 = vmatprep.subr.mxu0 0.0
        %1341 = vmatpush1.msra.mxu0 0.0
        %1342 = vmatprep.subr.mxu0 0.0
        %1343 = vmatpush1.msra.mxu0 0.0
        %1344 = vmatprep.subr.mxu0 0.0
        %1345 = vmatpush1.msra.mxu0 0.0
        %1346 = vmatprep.subr.mxu0 0.0
        %1347 = vmatpush1.msra.mxu0 0.0
        %1348 = vmatprep.subr.mxu0 0.0
        %1349 = vmatpush1.msra.mxu0 0.0
        %1350 = vmatprep.subr.mxu0 0.0
        %1351 = vmatpush1.msra.mxu0 0.0
        %1352 = vmatprep.subr.mxu0 0.0
        %1353 = vmatpush1.msra.mxu0 0.0
        %1354 = vmatprep.subr.mxu0 0.0
        %1355 = vmatpush1.msra.mxu0 0.0
        %1356 = vmatprep.subr.mxu0 0.0
        %1357 = vmatpush1.msra.mxu0 0.0
        %1358 = vmatprep.subr.mxu0 0.0
        %1359 = vmatpush1.msra.mxu0 0.0
        %1360 = vmatprep.subr.mxu0 0.0
        %1361 = vmatpush1.msra.mxu0 0.0
        %1362 = vmatprep.subr.mxu0 0.0
        %1363 = vmatpush1.msra.mxu0 0.0
        %1364 = vmatprep.subr.mxu0 0.0
        %1365 = vmatpush1.msra.mxu0 0.0
        %1366 = vmatprep.subr.mxu0 0.0
        %1367 = vmatpush1.msra.mxu0 0.0
        %1368 = vmatprep.subr.mxu0 0.0
        %1369 = vmatpush1.msra.mxu0 0.0
        %1370 = vmatprep.subr.mxu0 0.0
        %1371 = vmatpush1.msra.mxu0 0.0
        %1372 = vmatprep.subr.mxu0 0.0
        %1373 = vmatpush1.msra.mxu0 0.0
        %1374 = vmatprep.subr.mxu0 0.0
        %1375 = vmatpush1.msra.mxu0 0.0
        %1376 = vmatprep.subr.mxu0 0.0
        %1377 = vmatpush1.msra.mxu0 0.0
        %1378 = vmatprep.subr.mxu0 0.0
        %1379 = vmatpush1.msra.mxu0 0.0
        %1380 = vmatprep.subr.mxu0 0.0
        %1381 = vmatpush1.msra.mxu0 0.0
        %1382 = vmatprep.subr.mxu0 0.0
        %1383 = vmatpush1.msra.mxu0 0.0
        %1384 = vmatprep.subr.mxu0 0.0
        %1385 = vmatpush1.msra.mxu0 0.0
        %1386 = vmatprep.subr.mxu0 0.0
        %1387 = vmatpush1.msra.mxu0 0.0
        %1388 = vmatprep.subr.mxu0 0.0
        %1389 = vmatpush1.msra.mxu0 0.0
        %1390 = vmatprep.subr.mxu0 0.0
        %1391 = vmatpush1.msra.mxu0 0.0
        %1392 = vmatprep.subr.mxu0 0.0
        %1393 = vmatpush1.msra.mxu0 0.0
        %1394 = vmatprep.subr.mxu0 0.0
        %1395 = vmatpush1.msra.mxu0 0.0
        %1396 = vmatprep.subr.mxu0 0.0
        %1397 = vmatpush1.msra.mxu0 0.0
        %1398 = vmatprep.subr.mxu0 0.0
        %1399 = vmatpush1.msra.mxu0 0.0
        %1400 = vmatprep.subr.mxu0 0.0
        %1401 = vmatpush1.msra.mxu0 0.0
        %1402 = vmatprep.mubr.f32.mxu0 0.0
        %1403 = vmatmul.mubr.f32.gmra.mrb[0].mxu0 %v1107
        %v1404 = vpop.f32.mrb[0].mxu0
        %v1405 = vadd.f32 %v1094, %v1404
        %v1406 = vpop.f32.mrb[0].mxu0
        %v1407 = vadd.f32 %v1096, %v1406
        %1408 = vdwg.mxu0
        %s1409 = scalar_lea.vmem %s5, 8
        %v1410 = vld [vmem:[%s1409] sm:$0xf]
        %v1415 = vcombine.high %v774, %v774
        %v1416 = vcombine.high %v775, %v775
        %v1417 = vcombine.high %v776, %v776
        %v1418 = vcombine.high %v777, %v777
        %v1420 = vsel %vm793, %v1410, 0
        %v1422 = vsel %vm797, %v774, 0
        %v1424 = vsel %vm797, %v1415, 0
        %v1426 = vsel %vm797, %v775, 0
        %v1428 = vsel %vm797, %v1416, 0
        %v1430 = vsel %vm797, %v776, 0
        %v1432 = vsel %vm797, %v1417, 0
        %v1434 = vsel %vm797, %v777, 0
        %v1436 = vsel %vm797, %v1418, 0
        %1438 = vmatprep.subr.mxu0 %v1424
        %1439 = vmatpush1.msra.mxu0 %v1422
        %1440 = vmatprep.subr.mxu0 0.0
        %1441 = vmatpush1.msra.mxu0 0.0
        %1442 = vmatprep.subr.mxu0 0.0
        %1443 = vmatpush1.msra.mxu0 0.0
        %1444 = vmatprep.subr.mxu0 0.0
        %1445 = vmatpush1.msra.mxu0 0.0
        %1446 = vmatprep.subr.mxu0 0.0
        %1447 = vmatpush1.msra.mxu0 0.0
        %1448 = vmatprep.subr.mxu0 0.0
        %1449 = vmatpush1.msra.mxu0 0.0
        %1450 = vmatprep.subr.mxu0 0.0
        %1451 = vmatpush1.msra.mxu0 0.0
        %1452 = vmatprep.subr.mxu0 0.0
        %1453 = vmatpush1.msra.mxu0 0.0
        %1454 = vmatprep.subr.mxu0 0.0
        %1455 = vmatpush1.msra.mxu0 0.0
        %1456 = vmatprep.subr.mxu0 0.0
        %1457 = vmatpush1.msra.mxu0 0.0
        %1458 = vmatprep.subr.mxu0 0.0
        %1459 = vmatpush1.msra.mxu0 0.0
        %1460 = vmatprep.subr.mxu0 0.0
        %1461 = vmatpush1.msra.mxu0 0.0
        %1462 = vmatprep.subr.mxu0 0.0
        %1463 = vmatpush1.msra.mxu0 0.0
        %1464 = vmatprep.subr.mxu0 0.0
        %1465 = vmatpush1.msra.mxu0 0.0
        %1466 = vmatprep.subr.mxu0 0.0
        %1467 = vmatpush1.msra.mxu0 0.0
        %1468 = vmatprep.subr.mxu0 0.0
        %1469 = vmatpush1.msra.mxu0 0.0
        %1470 = vmatprep.subr.mxu0 0.0
        %1471 = vmatpush1.msra.mxu0 0.0
        %1472 = vmatprep.subr.mxu0 0.0
        %1473 = vmatpush1.msra.mxu0 0.0
        %1474 = vmatprep.subr.mxu0 0.0
        %1475 = vmatpush1.msra.mxu0 0.0
        %1476 = vmatprep.subr.mxu0 0.0
        %1477 = vmatpush1.msra.mxu0 0.0
        %1478 = vmatprep.subr.mxu0 0.0
        %1479 = vmatpush1.msra.mxu0 0.0
        %1480 = vmatprep.subr.mxu0 0.0
        %1481 = vmatpush1.msra.mxu0 0.0
        %1482 = vmatprep.subr.mxu0 0.0
        %1483 = vmatpush1.msra.mxu0 0.0
        %1484 = vmatprep.subr.mxu0 0.0
        %1485 = vmatpush1.msra.mxu0 0.0
        %1486 = vmatprep.subr.mxu0 0.0
        %1487 = vmatpush1.msra.mxu0 0.0
        %1488 = vmatprep.subr.mxu0 0.0
        %1489 = vmatpush1.msra.mxu0 0.0
        %1490 = vmatprep.subr.mxu0 0.0
        %1491 = vmatpush1.msra.mxu0 0.0
        %1492 = vmatprep.subr.mxu0 0.0
        %1493 = vmatpush1.msra.mxu0 0.0
        %1494 = vmatprep.subr.mxu0 0.0
        %1495 = vmatpush1.msra.mxu0 0.0
        %1496 = vmatprep.subr.mxu0 0.0
        %1497 = vmatpush1.msra.mxu0 0.0
        %1498 = vmatprep.subr.mxu0 0.0
        %1499 = vmatpush1.msra.mxu0 0.0
        %1500 = vmatprep.subr.mxu0 0.0
        %1501 = vmatpush1.msra.mxu0 0.0
        %1502 = vmatprep.mubr.f32.mxu0 0.0
        %1503 = vmatmul.mubr.f32.gmra.mrb[0].mxu0 %v1420
        %v1504 = vpop.f32.mrb[0].mxu0
        %v1505 = vadd.f32 0.0, %v1504
        %v1506 = vpop.f32.mrb[0].mxu0
        %v1507 = vadd.f32 0.0, %v1506
        %1508 = vdwg.mxu0
        %1509 = vmatprep.subr.mxu0 %v1428
        %1510 = vmatpush1.msra.mxu0 %v1426
        %1511 = vmatprep.subr.mxu0 0.0
        %1512 = vmatpush1.msra.mxu0 0.0
        %1513 = vmatprep.subr.mxu0 0.0
        %1514 = vmatpush1.msra.mxu0 0.0
        %1515 = vmatprep.subr.mxu0 0.0
        %1516 = vmatpush1.msra.mxu0 0.0
        %1517 = vmatprep.subr.mxu0 0.0
        %1518 = vmatpush1.msra.mxu0 0.0
        %1519 = vmatprep.subr.mxu0 0.0
        %1520 = vmatpush1.msra.mxu0 0.0
        %1521 = vmatprep.subr.mxu0 0.0
        %1522 = vmatpush1.msra.mxu0 0.0
        %1523 = vmatprep.subr.mxu0 0.0
        %1524 = vmatpush1.msra.mxu0 0.0
        %1525 = vmatprep.subr.mxu0 0.0
        %1526 = vmatpush1.msra.mxu0 0.0
        %1527 = vmatprep.subr.mxu0 0.0
        %1528 = vmatpush1.msra.mxu0 0.0
        %1529 = vmatprep.subr.mxu0 0.0
        %1530 = vmatpush1.msra.mxu0 0.0
        %1531 = vmatprep.subr.mxu0 0.0
        %1532 = vmatpush1.msra.mxu0 0.0
        %1533 = vmatprep.subr.mxu0 0.0
        %1534 = vmatpush1.msra.mxu0 0.0
        %1535 = vmatprep.subr.mxu0 0.0
        %1536 = vmatpush1.msra.mxu0 0.0
        %1537 = vmatprep.subr.mxu0 0.0
        %1538 = vmatpush1.msra.mxu0 0.0
        %1539 = vmatprep.subr.mxu0 0.0
        %1540 = vmatpush1.msra.mxu0 0.0
        %1541 = vmatprep.subr.mxu0 0.0
        %1542 = vmatpush1.msra.mxu0 0.0
        %1543 = vmatprep.subr.mxu0 0.0
        %1544 = vmatpush1.msra.mxu0 0.0
        %1545 = vmatprep.subr.mxu0 0.0
        %1546 = vmatpush1.msra.mxu0 0.0
        %1547 = vmatprep.subr.mxu0 0.0
        %1548 = vmatpush1.msra.mxu0 0.0
        %1549 = vmatprep.subr.mxu0 0.0
        %1550 = vmatpush1.msra.mxu0 0.0
        %1551 = vmatprep.subr.mxu0 0.0
        %1552 = vmatpush1.msra.mxu0 0.0
        %1553 = vmatprep.subr.mxu0 0.0
        %1554 = vmatpush1.msra.mxu0 0.0
        %1555 = vmatprep.subr.mxu0 0.0
        %1556 = vmatpush1.msra.mxu0 0.0
        %1557 = vmatprep.subr.mxu0 0.0
        %1558 = vmatpush1.msra.mxu0 0.0
        %1559 = vmatprep.subr.mxu0 0.0
        %1560 = vmatpush1.msra.mxu0 0.0
        %1561 = vmatprep.subr.mxu0 0.0
        %1562 = vmatpush1.msra.mxu0 0.0
        %1563 = vmatprep.subr.mxu0 0.0
        %1564 = vmatpush1.msra.mxu0 0.0
        %1565 = vmatprep.subr.mxu0 0.0
        %1566 = vmatpush1.msra.mxu0 0.0
        %1567 = vmatprep.subr.mxu0 0.0
        %1568 = vmatpush1.msra.mxu0 0.0
        %1569 = vmatprep.subr.mxu0 0.0
        %1570 = vmatpush1.msra.mxu0 0.0
        %1571 = vmatprep.subr.mxu0 0.0
        %1572 = vmatpush1.msra.mxu0 0.0
        %1573 = vmatprep.mubr.f32.mxu0 0.0
        %1574 = vmatmul.mubr.f32.gmra.mrb[0].mxu0 %v1420
        %v1575 = vpop.f32.mrb[0].mxu0
        %v1576 = vadd.f32 0.0, %v1575
        %v1577 = vpop.f32.mrb[0].mxu0
        %v1578 = vadd.f32 0.0, %v1577
        %1579 = vdwg.mxu0
        %1580 = vmatprep.subr.mxu0 %v1432
        %1581 = vmatpush1.msra.mxu0 %v1430
        %1582 = vmatprep.subr.mxu0 0.0
        %1583 = vmatpush1.msra.mxu0 0.0
        %1584 = vmatprep.subr.mxu0 0.0
        %1585 = vmatpush1.msra.mxu0 0.0
        %1586 = vmatprep.subr.mxu0 0.0
        %1587 = vmatpush1.msra.mxu0 0.0
        %1588 = vmatprep.subr.mxu0 0.0
        %1589 = vmatpush1.msra.mxu0 0.0
        %1590 = vmatprep.subr.mxu0 0.0
        %1591 = vmatpush1.msra.mxu0 0.0
        %1592 = vmatprep.subr.mxu0 0.0
        %1593 = vmatpush1.msra.mxu0 0.0
        %1594 = vmatprep.subr.mxu0 0.0
        %1595 = vmatpush1.msra.mxu0 0.0
        %1596 = vmatprep.subr.mxu0 0.0
        %1597 = vmatpush1.msra.mxu0 0.0
        %1598 = vmatprep.subr.mxu0 0.0
        %1599 = vmatpush1.msra.mxu0 0.0
        %1600 = vmatprep.subr.mxu0 0.0
        %1601 = vmatpush1.msra.mxu0 0.0
        %1602 = vmatprep.subr.mxu0 0.0
        %1603 = vmatpush1.msra.mxu0 0.0
        %1604 = vmatprep.subr.mxu0 0.0
        %1605 = vmatpush1.msra.mxu0 0.0
        %1606 = vmatprep.subr.mxu0 0.0
        %1607 = vmatpush1.msra.mxu0 0.0
        %1608 = vmatprep.subr.mxu0 0.0
        %1609 = vmatpush1.msra.mxu0 0.0
        %1610 = vmatprep.subr.mxu0 0.0
        %1611 = vmatpush1.msra.mxu0 0.0
        %1612 = vmatprep.subr.mxu0 0.0
        %1613 = vmatpush1.msra.mxu0 0.0
        %1614 = vmatprep.subr.mxu0 0.0
        %1615 = vmatpush1.msra.mxu0 0.0
        %1616 = vmatprep.subr.mxu0 0.0
        %1617 = vmatpush1.msra.mxu0 0.0
        %1618 = vmatprep.subr.mxu0 0.0
        %1619 = vmatpush1.msra.mxu0 0.0
        %1620 = vmatprep.subr.mxu0 0.0
        %1621 = vmatpush1.msra.mxu0 0.0
        %1622 = vmatprep.subr.mxu0 0.0
        %1623 = vmatpush1.msra.mxu0 0.0
        %1624 = vmatprep.subr.mxu0 0.0
        %1625 = vmatpush1.msra.mxu0 0.0
        %1626 = vmatprep.subr.mxu0 0.0
        %1627 = vmatpush1.msra.mxu0 0.0
        %1628 = vmatprep.subr.mxu0 0.0
        %1629 = vmatpush1.msra.mxu0 0.0
        %1630 = vmatprep.subr.mxu0 0.0
        %1631 = vmatpush1.msra.mxu0 0.0
        %1632 = vmatprep.subr.mxu0 0.0
        %1633 = vmatpush1.msra.mxu0 0.0
        %1634 = vmatprep.subr.mxu0 0.0
        %1635 = vmatpush1.msra.mxu0 0.0
        %1636 = vmatprep.subr.mxu0 0.0
        %1637 = vmatpush1.msra.mxu0 0.0
        %1638 = vmatprep.subr.mxu0 0.0
        %1639 = vmatpush1.msra.mxu0 0.0
        %1640 = vmatprep.subr.mxu0 0.0
        %1641 = vmatpush1.msra.mxu0 0.0
        %1642 = vmatprep.subr.mxu0 0.0
        %1643 = vmatpush1.msra.mxu0 0.0
        %1644 = vmatprep.mubr.f32.mxu0 0.0
        %1645 = vmatmul.mubr.f32.gmra.mrb[0].mxu0 %v1420
        %v1646 = vpop.f32.mrb[0].mxu0
        %v1647 = vadd.f32 0.0, %v1646
        %v1648 = vpop.f32.mrb[0].mxu0
        %v1649 = vadd.f32 0.0, %v1648
        %1650 = vdwg.mxu0
        %1651 = vmatprep.subr.mxu0 %v1436
        %1652 = vmatpush1.msra.mxu0 %v1434
        %1653 = vmatprep.subr.mxu0 0.0
        %1654 = vmatpush1.msra.mxu0 0.0
        %1655 = vmatprep.subr.mxu0 0.0
        %1656 = vmatpush1.msra.mxu0 0.0
        %1657 = vmatprep.subr.mxu0 0.0
        %1658 = vmatpush1.msra.mxu0 0.0
        %1659 = vmatprep.subr.mxu0 0.0
        %1660 = vmatpush1.msra.mxu0 0.0
        %1661 = vmatprep.subr.mxu0 0.0
        %1662 = vmatpush1.msra.mxu0 0.0
        %1663 = vmatprep.subr.mxu0 0.0
        %1664 = vmatpush1.msra.mxu0 0.0
        %1665 = vmatprep.subr.mxu0 0.0
        %1666 = vmatpush1.msra.mxu0 0.0
        %1667 = vmatprep.subr.mxu0 0.0
        %1668 = vmatpush1.msra.mxu0 0.0
        %1669 = vmatprep.subr.mxu0 0.0
        %1670 = vmatpush1.msra.mxu0 0.0
        %1671 = vmatprep.subr.mxu0 0.0
        %1672 = vmatpush1.msra.mxu0 0.0
        %1673 = vmatprep.subr.mxu0 0.0
        %1674 = vmatpush1.msra.mxu0 0.0
        %1675 = vmatprep.subr.mxu0 0.0
        %1676 = vmatpush1.msra.mxu0 0.0
        %1677 = vmatprep.subr.mxu0 0.0
        %1678 = vmatpush1.msra.mxu0 0.0
        %1679 = vmatprep.subr.mxu0 0.0
        %1680 = vmatpush1.msra.mxu0 0.0
        %1681 = vmatprep.subr.mxu0 0.0
        %1682 = vmatpush1.msra.mxu0 0.0
        %1683 = vmatprep.subr.mxu0 0.0
        %1684 = vmatpush1.msra.mxu0 0.0
        %1685 = vmatprep.subr.mxu0 0.0
        %1686 = vmatpush1.msra.mxu0 0.0
        %1687 = vmatprep.subr.mxu0 0.0
        %1688 = vmatpush1.msra.mxu0 0.0
        %1689 = vmatprep.subr.mxu0 0.0
        %1690 = vmatpush1.msra.mxu0 0.0
        %1691 = vmatprep.subr.mxu0 0.0
        %1692 = vmatpush1.msra.mxu0 0.0
        %1693 = vmatprep.subr.mxu0 0.0
        %1694 = vmatpush1.msra.mxu0 0.0
        %1695 = vmatprep.subr.mxu0 0.0
        %1696 = vmatpush1.msra.mxu0 0.0
        %1697 = vmatprep.subr.mxu0 0.0
        %1698 = vmatpush1.msra.mxu0 0.0
        %1699 = vmatprep.subr.mxu0 0.0
        %1700 = vmatpush1.msra.mxu0 0.0
        %1701 = vmatprep.subr.mxu0 0.0
        %1702 = vmatpush1.msra.mxu0 0.0
        %1703 = vmatprep.subr.mxu0 0.0
        %1704 = vmatpush1.msra.mxu0 0.0
        %1705 = vmatprep.subr.mxu0 0.0
        %1706 = vmatpush1.msra.mxu0 0.0
        %1707 = vmatprep.subr.mxu0 0.0
        %1708 = vmatpush1.msra.mxu0 0.0
        %1709 = vmatprep.subr.mxu0 0.0
        %1710 = vmatpush1.msra.mxu0 0.0
        %1711 = vmatprep.subr.mxu0 0.0
        %1712 = vmatpush1.msra.mxu0 0.0
        %1713 = vmatprep.subr.mxu0 0.0
        %1714 = vmatpush1.msra.mxu0 0.0
        %1715 = vmatprep.mubr.f32.mxu0 0.0
        %1716 = vmatmul.mubr.f32.gmra.mrb[0].mxu0 %v1420
        %v1717 = vpop.f32.mrb[0].mxu0
        %v1718 = vadd.f32 0.0, %v1717
        %v1719 = vpop.f32.mrb[0].mxu0
        %v1720 = vadd.f32 0.0, %v1719
        %1721 = vdwg.mxu0
        %v1722 = vadd.f32 %v1192, %v1505
        %v1723 = vadd.f32 %v1194, %v1507
        %v1724 = vadd.f32 %v1263, %v1576
        %v1725 = vadd.f32 %v1265, %v1578
        %v1726 = vadd.f32 %v1334, %v1647
        %v1727 = vadd.f32 %v1336, %v1649
        %v1728 = vadd.f32 %v1405, %v1718
        %v1729 = vadd.f32 %v1407, %v1720
        %s1730 = scalar_lea.vmem %s5, 12
        %v1731 = vld [vmem:[%s1730] sm:$0xf]
        %v1736 = vcombine.high %v778, %v778
        %v1737 = vcombine.high %v779, %v779
        %v1738 = vcombine.high %v780, %v780
        %v1739 = vcombine.high %v781, %v781
        %v1741 = vsel %vm793, %v1731, 0
        %v1743 = vsel %vm797, %v778, 0
        %v1745 = vsel %vm797, %v1736, 0
        %v1747 = vsel %vm797, %v779, 0
        %v1749 = vsel %vm797, %v1737, 0
        %v1751 = vsel %vm797, %v780, 0
        %v1753 = vsel %vm797, %v1738, 0
        %v1755 = vsel %vm797, %v781, 0
        %v1757 = vsel %vm797, %v1739, 0
        %1759 = vmatprep.subr.mxu0 %v1745
        %1760 = vmatpush1.msra.mxu0 %v1743
        %1761 = vmatprep.subr.mxu0 0.0
        %1762 = vmatpush1.msra.mxu0 0.0
        %1763 = vmatprep.subr.mxu0 0.0
        %1764 = vmatpush1.msra.mxu0 0.0
        %1765 = vmatprep.subr.mxu0 0.0
        %1766 = vmatpush1.msra.mxu0 0.0
        %1767 = vmatprep.subr.mxu0 0.0
        %1768 = vmatpush1.msra.mxu0 0.0
        %1769 = vmatprep.subr.mxu0 0.0
        %1770 = vmatpush1.msra.mxu0 0.0
        %1771 = vmatprep.subr.mxu0 0.0
        %1772 = vmatpush1.msra.mxu0 0.0
        %1773 = vmatprep.subr.mxu0 0.0
        %1774 = vmatpush1.msra.mxu0 0.0
        %1775 = vmatprep.subr.mxu0 0.0
        %1776 = vmatpush1.msra.mxu0 0.0
        %1777 = vmatprep.subr.mxu0 0.0
        %1778 = vmatpush1.msra.mxu0 0.0
        %1779 = vmatprep.subr.mxu0 0.0
        %1780 = vmatpush1.msra.mxu0 0.0
        %1781 = vmatprep.subr.mxu0 0.0
        %1782 = vmatpush1.msra.mxu0 0.0
        %1783 = vmatprep.subr.mxu0 0.0
        %1784 = vmatpush1.msra.mxu0 0.0
        %1785 = vmatprep.subr.mxu0 0.0
        %1786 = vmatpush1.msra.mxu0 0.0
        %1787 = vmatprep.subr.mxu0 0.0
        %1788 = vmatpush1.msra.mxu0 0.0
        %1789 = vmatprep.subr.mxu0 0.0
        %1790 = vmatpush1.msra.mxu0 0.0
        %1791 = vmatprep.subr.mxu0 0.0
        %1792 = vmatpush1.msra.mxu0 0.0
        %1793 = vmatprep.subr.mxu0 0.0
        %1794 = vmatpush1.msra.mxu0 0.0
        %1795 = vmatprep.subr.mxu0 0.0
        %1796 = vmatpush1.msra.mxu0 0.0
        %1797 = vmatprep.subr.mxu0 0.0
        %1798 = vmatpush1.msra.mxu0 0.0
        %1799 = vmatprep.subr.mxu0 0.0
        %1800 = vmatpush1.msra.mxu0 0.0
        %1801 = vmatprep.subr.mxu0 0.0
        %1802 = vmatpush1.msra.mxu0 0.0
        %1803 = vmatprep.subr.mxu0 0.0
        %1804 = vmatpush1.msra.mxu0 0.0
        %1805 = vmatprep.subr.mxu0 0.0
        %1806 = vmatpush1.msra.mxu0 0.0
        %1807 = vmatprep.subr.mxu0 0.0
        %1808 = vmatpush1.msra.mxu0 0.0
        %1809 = vmatprep.subr.mxu0 0.0
        %1810 = vmatpush1.msra.mxu0 0.0
        %1811 = vmatprep.subr.mxu0 0.0
        %1812 = vmatpush1.msra.mxu0 0.0
        %1813 = vmatprep.subr.mxu0 0.0
        %1814 = vmatpush1.msra.mxu0 0.0
        %1815 = vmatprep.subr.mxu0 0.0
        %1816 = vmatpush1.msra.mxu0 0.0
        %1817 = vmatprep.subr.mxu0 0.0
        %1818 = vmatpush1.msra.mxu0 0.0
        %1819 = vmatprep.subr.mxu0 0.0
        %1820 = vmatpush1.msra.mxu0 0.0
        %1821 = vmatprep.subr.mxu0 0.0
        %1822 = vmatpush1.msra.mxu0 0.0
        %1823 = vmatprep.mubr.f32.mxu0 0.0
        %1824 = vmatmul.mubr.f32.gmra.mrb[0].mxu0 %v1741
        %v1825 = vpop.f32.mrb[0].mxu0
        %v1826 = vadd.f32 0.0, %v1825
        %v1827 = vpop.f32.mrb[0].mxu0
        %v1828 = vadd.f32 0.0, %v1827
        %1829 = vdwg.mxu0
        %1830 = vmatprep.subr.mxu0 %v1749
        %1831 = vmatpush1.msra.mxu0 %v1747
        %1832 = vmatprep.subr.mxu0 0.0
        %1833 = vmatpush1.msra.mxu0 0.0
        %1834 = vmatprep.subr.mxu0 0.0
        %1835 = vmatpush1.msra.mxu0 0.0
        %1836 = vmatprep.subr.mxu0 0.0
        %1837 = vmatpush1.msra.mxu0 0.0
        %1838 = vmatprep.subr.mxu0 0.0
        %1839 = vmatpush1.msra.mxu0 0.0
        %1840 = vmatprep.subr.mxu0 0.0
        %1841 = vmatpush1.msra.mxu0 0.0
        %1842 = vmatprep.subr.mxu0 0.0
        %1843 = vmatpush1.msra.mxu0 0.0
        %1844 = vmatprep.subr.mxu0 0.0
        %1845 = vmatpush1.msra.mxu0 0.0
        %1846 = vmatprep.subr.mxu0 0.0
        %1847 = vmatpush1.msra.mxu0 0.0
        %1848 = vmatprep.subr.mxu0 0.0
        %1849 = vmatpush1.msra.mxu0 0.0
        %1850 = vmatprep.subr.mxu0 0.0
        %1851 = vmatpush1.msra.mxu0 0.0
        %1852 = vmatprep.subr.mxu0 0.0
        %1853 = vmatpush1.msra.mxu0 0.0
        %1854 = vmatprep.subr.mxu0 0.0
        %1855 = vmatpush1.msra.mxu0 0.0
        %1856 = vmatprep.subr.mxu0 0.0
        %1857 = vmatpush1.msra.mxu0 0.0
        %1858 = vmatprep.subr.mxu0 0.0
        %1859 = vmatpush1.msra.mxu0 0.0
        %1860 = vmatprep.subr.mxu0 0.0
        %1861 = vmatpush1.msra.mxu0 0.0
        %1862 = vmatprep.subr.mxu0 0.0
        %1863 = vmatpush1.msra.mxu0 0.0
        %1864 = vmatprep.subr.mxu0 0.0
        %1865 = vmatpush1.msra.mxu0 0.0
        %1866 = vmatprep.subr.mxu0 0.0
        %1867 = vmatpush1.msra.mxu0 0.0
        %1868 = vmatprep.subr.mxu0 0.0
        %1869 = vmatpush1.msra.mxu0 0.0
        %1870 = vmatprep.subr.mxu0 0.0
        %1871 = vmatpush1.msra.mxu0 0.0
        %1872 = vmatprep.subr.mxu0 0.0
        %1873 = vmatpush1.msra.mxu0 0.0
        %1874 = vmatprep.subr.mxu0 0.0
        %1875 = vmatpush1.msra.mxu0 0.0
        %1876 = vmatprep.subr.mxu0 0.0
        %1877 = vmatpush1.msra.mxu0 0.0
        %1878 = vmatprep.subr.mxu0 0.0
        %1879 = vmatpush1.msra.mxu0 0.0
        %1880 = vmatprep.subr.mxu0 0.0
        %1881 = vmatpush1.msra.mxu0 0.0
        %1882 = vmatprep.subr.mxu0 0.0
        %1883 = vmatpush1.msra.mxu0 0.0
        %1884 = vmatprep.subr.mxu0 0.0
        %1885 = vmatpush1.msra.mxu0 0.0
        %1886 = vmatprep.subr.mxu0 0.0
        %1887 = vmatpush1.msra.mxu0 0.0
        %1888 = vmatprep.subr.mxu0 0.0
        %1889 = vmatpush1.msra.mxu0 0.0
        %1890 = vmatprep.subr.mxu0 0.0
        %1891 = vmatpush1.msra.mxu0 0.0
        %1892 = vmatprep.subr.mxu0 0.0
        %1893 = vmatpush1.msra.mxu0 0.0
        %1894 = vmatprep.mubr.f32.mxu0 0.0
        %1895 = vmatmul.mubr.f32.gmra.mrb[0].mxu0 %v1741
        %v1896 = vpop.f32.mrb[0].mxu0
        %v1897 = vadd.f32 0.0, %v1896
        %v1898 = vpop.f32.mrb[0].mxu0
        %v1899 = vadd.f32 0.0, %v1898
        %1900 = vdwg.mxu0
        %1901 = vmatprep.subr.mxu0 %v1753
        %1902 = vmatpush1.msra.mxu0 %v1751
        %1903 = vmatprep.subr.mxu0 0.0
        %1904 = vmatpush1.msra.mxu0 0.0
        %1905 = vmatprep.subr.mxu0 0.0
        %1906 = vmatpush1.msra.mxu0 0.0
        %1907 = vmatprep.subr.mxu0 0.0
        %1908 = vmatpush1.msra.mxu0 0.0
        %1909 = vmatprep.subr.mxu0 0.0
        %1910 = vmatpush1.msra.mxu0 0.0
        %1911 = vmatprep.subr.mxu0 0.0
        %1912 = vmatpush1.msra.mxu0 0.0
        %1913 = vmatprep.subr.mxu0 0.0
        %1914 = vmatpush1.msra.mxu0 0.0
        %1915 = vmatprep.subr.mxu0 0.0
        %1916 = vmatpush1.msra.mxu0 0.0
        %1917 = vmatprep.subr.mxu0 0.0
        %1918 = vmatpush1.msra.mxu0 0.0
        %1919 = vmatprep.subr.mxu0 0.0
        %1920 = vmatpush1.msra.mxu0 0.0
        %1921 = vmatprep.subr.mxu0 0.0
        %1922 = vmatpush1.msra.mxu0 0.0
        %1923 = vmatprep.subr.mxu0 0.0
        %1924 = vmatpush1.msra.mxu0 0.0
        %1925 = vmatprep.subr.mxu0 0.0
        %1926 = vmatpush1.msra.mxu0 0.0
        %1927 = vmatprep.subr.mxu0 0.0
        %1928 = vmatpush1.msra.mxu0 0.0
        %1929 = vmatprep.subr.mxu0 0.0
        %1930 = vmatpush1.msra.mxu0 0.0
        %1931 = vmatprep.subr.mxu0 0.0
        %1932 = vmatpush1.msra.mxu0 0.0
        %1933 = vmatprep.subr.mxu0 0.0
        %1934 = vmatpush1.msra.mxu0 0.0
        %1935 = vmatprep.subr.mxu0 0.0
        %1936 = vmatpush1.msra.mxu0 0.0
        %1937 = vmatprep.subr.mxu0 0.0
        %1938 = vmatpush1.msra.mxu0 0.0
        %1939 = vmatprep.subr.mxu0 0.0
        %1940 = vmatpush1.msra.mxu0 0.0
        %1941 = vmatprep.subr.mxu0 0.0
        %1942 = vmatpush1.msra.mxu0 0.0
        %1943 = vmatprep.subr.mxu0 0.0
        %1944 = vmatpush1.msra.mxu0 0.0
        %1945 = vmatprep.subr.mxu0 0.0
        %1946 = vmatpush1.msra.mxu0 0.0
        %1947 = vmatprep.subr.mxu0 0.0
        %1948 = vmatpush1.msra.mxu0 0.0
        %1949 = vmatprep.subr.mxu0 0.0
        %1950 = vmatpush1.msra.mxu0 0.0
        %1951 = vmatprep.subr.mxu0 0.0
        %1952 = vmatpush1.msra.mxu0 0.0
        %1953 = vmatprep.subr.mxu0 0.0
        %1954 = vmatpush1.msra.mxu0 0.0
        %1955 = vmatprep.subr.mxu0 0.0
        %1956 = vmatpush1.msra.mxu0 0.0
        %1957 = vmatprep.subr.mxu0 0.0
        %1958 = vmatpush1.msra.mxu0 0.0
        %1959 = vmatprep.subr.mxu0 0.0
        %1960 = vmatpush1.msra.mxu0 0.0
        %1961 = vmatprep.subr.mxu0 0.0
        %1962 = vmatpush1.msra.mxu0 0.0
        %1963 = vmatprep.subr.mxu0 0.0
        %1964 = vmatpush1.msra.mxu0 0.0
        %1965 = vmatprep.mubr.f32.mxu0 0.0
        %1966 = vmatmul.mubr.f32.gmra.mrb[0].mxu0 %v1741
        %v1967 = vpop.f32.mrb[0].mxu0
        %v1968 = vadd.f32 0.0, %v1967
        %v1969 = vpop.f32.mrb[0].mxu0
        %v1970 = vadd.f32 0.0, %v1969
        %1971 = vdwg.mxu0
        %1972 = vmatprep.subr.mxu0 %v1757
        %1973 = vmatpush1.msra.mxu0 %v1755
        %1974 = vmatprep.subr.mxu0 0.0
        %1975 = vmatpush1.msra.mxu0 0.0
        %1976 = vmatprep.subr.mxu0 0.0
        %1977 = vmatpush1.msra.mxu0 0.0
        %1978 = vmatprep.subr.mxu0 0.0
        %1979 = vmatpush1.msra.mxu0 0.0
        %1980 = vmatprep.subr.mxu0 0.0
        %1981 = vmatpush1.msra.mxu0 0.0
        %1982 = vmatprep.subr.mxu0 0.0
        %1983 = vmatpush1.msra.mxu0 0.0
        %1984 = vmatprep.subr.mxu0 0.0
        %1985 = vmatpush1.msra.mxu0 0.0
        %1986 = vmatprep.subr.mxu0 0.0
        %1987 = vmatpush1.msra.mxu0 0.0
        %1988 = vmatprep.subr.mxu0 0.0
        %1989 = vmatpush1.msra.mxu0 0.0
        %1990 = vmatprep.subr.mxu0 0.0
        %1991 = vmatpush1.msra.mxu0 0.0
        %1992 = vmatprep.subr.mxu0 0.0
        %1993 = vmatpush1.msra.mxu0 0.0
        %1994 = vmatprep.subr.mxu0 0.0
        %1995 = vmatpush1.msra.mxu0 0.0
        %1996 = vmatprep.subr.mxu0 0.0
        %1997 = vmatpush1.msra.mxu0 0.0
        %1998 = vmatprep.subr.mxu0 0.0
        %1999 = vmatpush1.msra.mxu0 0.0
        %2000 = vmatprep.subr.mxu0 0.0
        %2001 = vmatpush1.msra.mxu0 0.0
        %2002 = vmatprep.subr.mxu0 0.0
        %2003 = vmatpush1.msra.mxu0 0.0
        %2004 = vmatprep.subr.mxu0 0.0
        %2005 = vmatpush1.msra.mxu0 0.0
        %2006 = vmatprep.subr.mxu0 0.0
        %2007 = vmatpush1.msra.mxu0 0.0
        %2008 = vmatprep.subr.mxu0 0.0
        %2009 = vmatpush1.msra.mxu0 0.0
        %2010 = vmatprep.subr.mxu0 0.0
        %2011 = vmatpush1.msra.mxu0 0.0
        %2012 = vmatprep.subr.mxu0 0.0
        %2013 = vmatpush1.msra.mxu0 0.0
        %2014 = vmatprep.subr.mxu0 0.0
        %2015 = vmatpush1.msra.mxu0 0.0
        %2016 = vmatprep.subr.mxu0 0.0
        %2017 = vmatpush1.msra.mxu0 0.0
        %2018 = vmatprep.subr.mxu0 0.0
        %2019 = vmatpush1.msra.mxu0 0.0
        %2020 = vmatprep.subr.mxu0 0.0
        %2021 = vmatpush1.msra.mxu0 0.0
        %2022 = vmatprep.subr.mxu0 0.0
        %2023 = vmatpush1.msra.mxu0 0.0
        %2024 = vmatprep.subr.mxu0 0.0
        %2025 = vmatpush1.msra.mxu0 0.0
        %2026 = vmatprep.subr.mxu0 0.0
        %2027 = vmatpush1.msra.mxu0 0.0
        %2028 = vmatprep.subr.mxu0 0.0
        %2029 = vmatpush1.msra.mxu0 0.0
        %2030 = vmatprep.subr.mxu0 0.0
        %2031 = vmatpush1.msra.mxu0 0.0
        %2032 = vmatprep.subr.mxu0 0.0
        %2033 = vmatpush1.msra.mxu0 0.0
        %2034 = vmatprep.subr.mxu0 0.0
        %2035 = vmatpush1.msra.mxu0 0.0
        %2036 = vmatprep.mubr.f32.mxu0 0.0
        %2037 = vmatmul.mubr.f32.gmra.mrb[0].mxu0 %v1741
        %v2038 = vpop.f32.mrb[0].mxu0
        %v2039 = vadd.f32 0.0, %v2038
        %v2040 = vpop.f32.mrb[0].mxu0
        %v2041 = vadd.f32 0.0, %v2040
        %2042 = vdwg.mxu0
        %v2043 = vadd.f32 %v1722, %v1826
        %v2044 = vadd.f32 %v1723, %v1828
        %v2045 = vadd.f32 %v1724, %v1897
        %v2046 = vadd.f32 %v1725, %v1899
        %v2047 = vadd.f32 %v1726, %v1968
        %v2048 = vadd.f32 %v1727, %v1970
        %v2049 = vadd.f32 %v1728, %v2039
        %v2050 = vadd.f32 %v1729, %v2041
        %v2051 = vld [vmem:[%s6] sm:$0xf]
        %2053 = vset.pattern.permute.xlu0 0
        %2054 = vperm.xlu0 %2053, %v2051
        %v2055 = vpop.permute.xlu0 %2054
        %v2057 = vadd.f32 %v2043, %v2055
        %v2058 = vadd.f32 %v2044, %v2055
        %v2059 = vadd.f32 %v2045, %v2055
        %v2060 = vadd.f32 %v2046, %v2055
        %v2061 = vadd.f32 %v2047, %v2055
        %v2062 = vadd.f32 %v2048, %v2055
        %v2063 = vadd.f32 %v2049, %v2055
        %v2064 = vadd.f32 %v2050, %v2055
        %v2065 = vmax.f32 %v2057, 0.0
        %v2066 = vmax.f32 %v2058, 0.0
        %v2067 = vmax.f32 %v2059, 0.0
        %v2068 = vmax.f32 %v2060, 0.0
        %v2069 = vmax.f32 %v2061, 0.0
        %v2070 = vmax.f32 %v2062, 0.0
        %v2071 = vmax.f32 %v2063, 0.0
        %v2072 = vmax.f32 %v2064, 0.0
        %v2073 = vld [vmem:[%s749] sm:$0xff]
        %v2074 = vld [vmem:[%s749 + $0x8] sm:$0xff]
        %v2075 = vld [vmem:[%s749 + $0x10] sm:$0xff]
        %v2076 = vld [vmem:[%s749 + $0x18] sm:$0xff]
        %v2085 = vcombine.low %v2065, %v2066
        %v2086 = vcombine.low %v2067, %v2068
        %v2087 = vcombine.low %v2069, %v2070
        %v2088 = vcombine.low %v2071, %v2072
        %v2093 = vadd.f32 %v2073, %v2085
        %v2094 = vadd.f32 %v2074, %v2086
        %v2095 = vadd.f32 %v2075, %v2087
        %v2096 = vadd.f32 %v2076, %v2088
        %s2097 = scalar_lea.vmem %s5, 16
        %v2098 = vld [vmem:[%s2097] sm:$0xf]
        %s2099 = scalar_lea.vmem %s5, 20
        %v2100 = vld [vmem:[%s2099] sm:$0xf]
        %v2102 = vcombine.high %v2094, %v2094
        %v2104 = vsel %vm793, %v2100, 0
        %v2106 = vsel %vm797, %v2094, 0
        %v2108 = vsel %vm797, %v2102, 0
        %2110 = vmatprep.subr.mxu0 %v2108
        %2111 = vmatpush1.msra.mxu0 %v2106
        %2112 = vmatprep.subr.mxu0 0.0
        %2113 = vmatpush1.msra.mxu0 0.0
        %2114 = vmatprep.subr.mxu0 0.0
        %2115 = vmatpush1.msra.mxu0 0.0
        %2116 = vmatprep.subr.mxu0 0.0
        %2117 = vmatpush1.msra.mxu0 0.0
        %2118 = vmatprep.subr.mxu0 0.0
        %2119 = vmatpush1.msra.mxu0 0.0
        %2120 = vmatprep.subr.mxu0 0.0
        %2121 = vmatpush1.msra.mxu0 0.0
        %2122 = vmatprep.subr.mxu0 0.0
        %2123 = vmatpush1.msra.mxu0 0.0
        %2124 = vmatprep.subr.mxu0 0.0
        %2125 = vmatpush1.msra.mxu0 0.0
        %2126 = vmatprep.subr.mxu0 0.0
        %2127 = vmatpush1.msra.mxu0 0.0
        %2128 = vmatprep.subr.mxu0 0.0
        %2129 = vmatpush1.msra.mxu0 0.0
        %2130 = vmatprep.subr.mxu0 0.0
        %2131 = vmatpush1.msra.mxu0 0.0
        %2132 = vmatprep.subr.mxu0 0.0
        %2133 = vmatpush1.msra.mxu0 0.0
        %2134 = vmatprep.subr.mxu0 0.0
        %2135 = vmatpush1.msra.mxu0 0.0
        %2136 = vmatprep.subr.mxu0 0.0
        %2137 = vmatpush1.msra.mxu0 0.0
        %2138 = vmatprep.subr.mxu0 0.0
        %2139 = vmatpush1.msra.mxu0 0.0
        %2140 = vmatprep.subr.mxu0 0.0
        %2141 = vmatpush1.msra.mxu0 0.0
        %2142 = vmatprep.subr.mxu0 0.0
        %2143 = vmatpush1.msra.mxu0 0.0
        %2144 = vmatprep.subr.mxu0 0.0
        %2145 = vmatpush1.msra.mxu0 0.0
        %2146 = vmatprep.subr.mxu0 0.0
        %2147 = vmatpush1.msra.mxu0 0.0
        %2148 = vmatprep.subr.mxu0 0.0
        %2149 = vmatpush1.msra.mxu0 0.0
        %2150 = vmatprep.subr.mxu0 0.0
        %2151 = vmatpush1.msra.mxu0 0.0
        %2152 = vmatprep.subr.mxu0 0.0
        %2153 = vmatpush1.msra.mxu0 0.0
        %2154 = vmatprep.subr.mxu0 0.0
        %2155 = vmatpush1.msra.mxu0 0.0
        %2156 = vmatprep.subr.mxu0 0.0
        %2157 = vmatpush1.msra.mxu0 0.0
        %2158 = vmatprep.subr.mxu0 0.0
        %2159 = vmatpush1.msra.mxu0 0.0
        %2160 = vmatprep.subr.mxu0 0.0
        %2161 = vmatpush1.msra.mxu0 0.0
        %2162 = vmatprep.subr.mxu0 0.0
        %2163 = vmatpush1.msra.mxu0 0.0
        %2164 = vmatprep.subr.mxu0 0.0
        %2165 = vmatpush1.msra.mxu0 0.0
        %2166 = vmatprep.subr.mxu0 0.0
        %2167 = vmatpush1.msra.mxu0 0.0
        %2168 = vmatprep.subr.mxu0 0.0
        %2169 = vmatpush1.msra.mxu0 0.0
        %2170 = vmatprep.subr.mxu0 0.0
        %2171 = vmatpush1.msra.mxu0 0.0
        %2172 = vmatprep.subr.mxu0 0.0
        %2173 = vmatpush1.msra.mxu0 0.0
        %2174 = vmatprep.mubr.f32.mxu0 0.0
        %2175 = vmatmul.mubr.f32.gmra.mrb[0].mxu0 %v2104
        %v2176 = vpop.f32.mrb[0].mxu0
        %v2177 = vadd.f32 0.0, %v2176
        %v2178 = vpop.f32.mrb[0].mxu0
        %v2179 = vadd.f32 0.0, %v2178
        %2180 = vdwg.mxu0
        %v2182 = vcombine.high %v2093, %v2093
        %v2184 = vsel %vm793, %v2098, 0
        %v2186 = vsel %vm797, %v2093, 0
        %v2188 = vsel %vm797, %v2182, 0
        %2190 = vmatprep.subr.mxu0 %v2188
        %2191 = vmatpush1.msra.mxu0 %v2186
        %2192 = vmatprep.subr.mxu0 0.0
        %2193 = vmatpush1.msra.mxu0 0.0
        %2194 = vmatprep.subr.mxu0 0.0
        %2195 = vmatpush1.msra.mxu0 0.0
        %2196 = vmatprep.subr.mxu0 0.0
        %2197 = vmatpush1.msra.mxu0 0.0
        %2198 = vmatprep.subr.mxu0 0.0
        %2199 = vmatpush1.msra.mxu0 0.0
        %2200 = vmatprep.subr.mxu0 0.0
        %2201 = vmatpush1.msra.mxu0 0.0
        %2202 = vmatprep.subr.mxu0 0.0
        %2203 = vmatpush1.msra.mxu0 0.0
        %2204 = vmatprep.subr.mxu0 0.0
        %2205 = vmatpush1.msra.mxu0 0.0
        %2206 = vmatprep.subr.mxu0 0.0
        %2207 = vmatpush1.msra.mxu0 0.0
        %2208 = vmatprep.subr.mxu0 0.0
        %2209 = vmatpush1.msra.mxu0 0.0
        %2210 = vmatprep.subr.mxu0 0.0
        %2211 = vmatpush1.msra.mxu0 0.0
        %2212 = vmatprep.subr.mxu0 0.0
        %2213 = vmatpush1.msra.mxu0 0.0
        %2214 = vmatprep.subr.mxu0 0.0
        %2215 = vmatpush1.msra.mxu0 0.0
        %2216 = vmatprep.subr.mxu0 0.0
        %2217 = vmatpush1.msra.mxu0 0.0
        %2218 = vmatprep.subr.mxu0 0.0
        %2219 = vmatpush1.msra.mxu0 0.0
        %2220 = vmatprep.subr.mxu0 0.0
        %2221 = vmatpush1.msra.mxu0 0.0
        %2222 = vmatprep.subr.mxu0 0.0
        %2223 = vmatpush1.msra.mxu0 0.0
        %2224 = vmatprep.subr.mxu0 0.0
        %2225 = vmatpush1.msra.mxu0 0.0
        %2226 = vmatprep.subr.mxu0 0.0
        %2227 = vmatpush1.msra.mxu0 0.0
        %2228 = vmatprep.subr.mxu0 0.0
        %2229 = vmatpush1.msra.mxu0 0.0
        %2230 = vmatprep.subr.mxu0 0.0
        %2231 = vmatpush1.msra.mxu0 0.0
        %2232 = vmatprep.subr.mxu0 0.0
        %2233 = vmatpush1.msra.mxu0 0.0
        %2234 = vmatprep.subr.mxu0 0.0
        %2235 = vmatpush1.msra.mxu0 0.0
        %2236 = vmatprep.subr.mxu0 0.0
        %2237 = vmatpush1.msra.mxu0 0.0
        %2238 = vmatprep.subr.mxu0 0.0
        %2239 = vmatpush1.msra.mxu0 0.0
        %2240 = vmatprep.subr.mxu0 0.0
        %2241 = vmatpush1.msra.mxu0 0.0
        %2242 = vmatprep.subr.mxu0 0.0
        %2243 = vmatpush1.msra.mxu0 0.0
        %2244 = vmatprep.subr.mxu0 0.0
        %2245 = vmatpush1.msra.mxu0 0.0
        %2246 = vmatprep.subr.mxu0 0.0
        %2247 = vmatpush1.msra.mxu0 0.0
        %2248 = vmatprep.subr.mxu0 0.0
        %2249 = vmatpush1.msra.mxu0 0.0
        %2250 = vmatprep.subr.mxu0 0.0
        %2251 = vmatpush1.msra.mxu0 0.0
        %2252 = vmatprep.subr.mxu0 0.0
        %2253 = vmatpush1.msra.mxu0 0.0
        %2254 = vmatprep.mubr.f32.mxu0 0.0
        %2255 = vmatmul.mubr.f32.gmra.mrb[0].mxu0 %v2184
        %v2256 = vpop.f32.mrb[0].mxu0
        %v2257 = vadd.f32 %v2177, %v2256
        %v2258 = vpop.f32.mrb[0].mxu0
        %v2259 = vadd.f32 %v2179, %v2258
        %2260 = vdwg.mxu0
        %s2261 = scalar_lea.vmem %s5, 24
        %v2262 = vld [vmem:[%s2261] sm:$0xf]
        %v2264 = vcombine.high %v2095, %v2095
        %v2266 = vsel %vm793, %v2262, 0
        %v2268 = vsel %vm797, %v2095, 0
        %v2270 = vsel %vm797, %v2264, 0
        %2272 = vmatprep.subr.mxu0 %v2270
        %2273 = vmatpush1.msra.mxu0 %v2268
        %2274 = vmatprep.subr.mxu0 0.0
        %2275 = vmatpush1.msra.mxu0 0.0
        %2276 = vmatprep.subr.mxu0 0.0
        %2277 = vmatpush1.msra.mxu0 0.0
        %2278 = vmatprep.subr.mxu0 0.0
        %2279 = vmatpush1.msra.mxu0 0.0
        %2280 = vmatprep.subr.mxu0 0.0
        %2281 = vmatpush1.msra.mxu0 0.0
        %2282 = vmatprep.subr.mxu0 0.0
        %2283 = vmatpush1.msra.mxu0 0.0
        %2284 = vmatprep.subr.mxu0 0.0
        %2285 = vmatpush1.msra.mxu0 0.0
        %2286 = vmatprep.subr.mxu0 0.0
        %2287 = vmatpush1.msra.mxu0 0.0
        %2288 = vmatprep.subr.mxu0 0.0
        %2289 = vmatpush1.msra.mxu0 0.0
        %2290 = vmatprep.subr.mxu0 0.0
        %2291 = vmatpush1.msra.mxu0 0.0
        %2292 = vmatprep.subr.mxu0 0.0
        %2293 = vmatpush1.msra.mxu0 0.0
        %2294 = vmatprep.subr.mxu0 0.0
        %2295 = vmatpush1.msra.mxu0 0.0
        %2296 = vmatprep.subr.mxu0 0.0
        %2297 = vmatpush1.msra.mxu0 0.0
        %2298 = vmatprep.subr.mxu0 0.0
        %2299 = vmatpush1.msra.mxu0 0.0
        %2300 = vmatprep.subr.mxu0 0.0
        %2301 = vmatpush1.msra.mxu0 0.0
        %2302 = vmatprep.subr.mxu0 0.0
        %2303 = vmatpush1.msra.mxu0 0.0
        %2304 = vmatprep.subr.mxu0 0.0
        %2305 = vmatpush1.msra.mxu0 0.0
        %2306 = vmatprep.subr.mxu0 0.0
        %2307 = vmatpush1.msra.mxu0 0.0
        %2308 = vmatprep.subr.mxu0 0.0
        %2309 = vmatpush1.msra.mxu0 0.0
        %2310 = vmatprep.subr.mxu0 0.0
        %2311 = vmatpush1.msra.mxu0 0.0
        %2312 = vmatprep.subr.mxu0 0.0
        %2313 = vmatpush1.msra.mxu0 0.0
        %2314 = vmatprep.subr.mxu0 0.0
        %2315 = vmatpush1.msra.mxu0 0.0
        %2316 = vmatprep.subr.mxu0 0.0
        %2317 = vmatpush1.msra.mxu0 0.0
        %2318 = vmatprep.subr.mxu0 0.0
        %2319 = vmatpush1.msra.mxu0 0.0
        %2320 = vmatprep.subr.mxu0 0.0
        %2321 = vmatpush1.msra.mxu0 0.0
        %2322 = vmatprep.subr.mxu0 0.0
        %2323 = vmatpush1.msra.mxu0 0.0
        %2324 = vmatprep.subr.mxu0 0.0
        %2325 = vmatpush1.msra.mxu0 0.0
        %2326 = vmatprep.subr.mxu0 0.0
        %2327 = vmatpush1.msra.mxu0 0.0
        %2328 = vmatprep.subr.mxu0 0.0
        %2329 = vmatpush1.msra.mxu0 0.0
        %2330 = vmatprep.subr.mxu0 0.0
        %2331 = vmatpush1.msra.mxu0 0.0
        %2332 = vmatprep.subr.mxu0 0.0
        %2333 = vmatpush1.msra.mxu0 0.0
        %2334 = vmatprep.subr.mxu0 0.0
        %2335 = vmatpush1.msra.mxu0 0.0
        %2336 = vmatprep.mubr.f32.mxu0 0.0
        %2337 = vmatmul.mubr.f32.gmra.mrb[0].mxu0 %v2266
        %v2338 = vpop.f32.mrb[0].mxu0
        %v2339 = vadd.f32 0.0, %v2338
        %v2340 = vpop.f32.mrb[0].mxu0
        %v2341 = vadd.f32 0.0, %v2340
        %2342 = vdwg.mxu0
        %v2343 = vadd.f32 %v2257, %v2339
        %v2344 = vadd.f32 %v2259, %v2341
        %s2345 = scalar_lea.vmem %s5, 28
        %v2346 = vld [vmem:[%s2345] sm:$0xf]
        %v2348 = vcombine.high %v2096, %v2096
        %v2350 = vsel %vm793, %v2346, 0
        %v2352 = vsel %vm797, %v2096, 0
        %v2354 = vsel %vm797, %v2348, 0
        %2356 = vmatprep.subr.mxu0 %v2354
        %2357 = vmatpush1.msra.mxu0 %v2352
        %2358 = vmatprep.subr.mxu0 0.0
        %2359 = vmatpush1.msra.mxu0 0.0
        %2360 = vmatprep.subr.mxu0 0.0
        %2361 = vmatpush1.msra.mxu0 0.0
        %2362 = vmatprep.subr.mxu0 0.0
        %2363 = vmatpush1.msra.mxu0 0.0
        %2364 = vmatprep.subr.mxu0 0.0
        %2365 = vmatpush1.msra.mxu0 0.0
        %2366 = vmatprep.subr.mxu0 0.0
        %2367 = vmatpush1.msra.mxu0 0.0
        %2368 = vmatprep.subr.mxu0 0.0
        %2369 = vmatpush1.msra.mxu0 0.0
        %2370 = vmatprep.subr.mxu0 0.0
        %2371 = vmatpush1.msra.mxu0 0.0
        %2372 = vmatprep.subr.mxu0 0.0
        %2373 = vmatpush1.msra.mxu0 0.0
        %2374 = vmatprep.subr.mxu0 0.0
        %2375 = vmatpush1.msra.mxu0 0.0
        %2376 = vmatprep.subr.mxu0 0.0
        %2377 = vmatpush1.msra.mxu0 0.0
        %2378 = vmatprep.subr.mxu0 0.0
        %2379 = vmatpush1.msra.mxu0 0.0
        %2380 = vmatprep.subr.mxu0 0.0
        %2381 = vmatpush1.msra.mxu0 0.0
        %2382 = vmatprep.subr.mxu0 0.0
        %2383 = vmatpush1.msra.mxu0 0.0
        %2384 = vmatprep.subr.mxu0 0.0
        %2385 = vmatpush1.msra.mxu0 0.0
        %2386 = vmatprep.subr.mxu0 0.0
        %2387 = vmatpush1.msra.mxu0 0.0
        %2388 = vmatprep.subr.mxu0 0.0
        %2389 = vmatpush1.msra.mxu0 0.0
        %2390 = vmatprep.subr.mxu0 0.0
        %2391 = vmatpush1.msra.mxu0 0.0
        %2392 = vmatprep.subr.mxu0 0.0
        %2393 = vmatpush1.msra.mxu0 0.0
        %2394 = vmatprep.subr.mxu0 0.0
        %2395 = vmatpush1.msra.mxu0 0.0
        %2396 = vmatprep.subr.mxu0 0.0
        %2397 = vmatpush1.msra.mxu0 0.0
        %2398 = vmatprep.subr.mxu0 0.0
        %2399 = vmatpush1.msra.mxu0 0.0
        %2400 = vmatprep.subr.mxu0 0.0
        %2401 = vmatpush1.msra.mxu0 0.0
        %2402 = vmatprep.subr.mxu0 0.0
        %2403 = vmatpush1.msra.mxu0 0.0
        %2404 = vmatprep.subr.mxu0 0.0
        %2405 = vmatpush1.msra.mxu0 0.0
        %2406 = vmatprep.subr.mxu0 0.0
        %2407 = vmatpush1.msra.mxu0 0.0
        %2408 = vmatprep.subr.mxu0 0.0
        %2409 = vmatpush1.msra.mxu0 0.0
        %2410 = vmatprep.subr.mxu0 0.0
        %2411 = vmatpush1.msra.mxu0 0.0
        %2412 = vmatprep.subr.mxu0 0.0
        %2413 = vmatpush1.msra.mxu0 0.0
        %2414 = vmatprep.subr.mxu0 0.0
        %2415 = vmatpush1.msra.mxu0 0.0
        %2416 = vmatprep.subr.mxu0 0.0
        %2417 = vmatpush1.msra.mxu0 0.0
        %2418 = vmatprep.subr.mxu0 0.0
        %2419 = vmatpush1.msra.mxu0 0.0
        %2420 = vmatprep.mubr.f32.mxu0 0.0
        %2421 = vmatmul.mubr.f32.gmra.mrb[0].mxu0 %v2350
        %v2422 = vpop.f32.mrb[0].mxu0
        %v2423 = vadd.f32 0.0, %v2422
        %v2424 = vpop.f32.mrb[0].mxu0
        %v2425 = vadd.f32 0.0, %v2424
        %2426 = vdwg.mxu0
        %v2427 = vadd.f32 %v2343, %v2423
        %v2428 = vadd.f32 %v2344, %v2425
        %s2429 = scalar_lea.vmem %s6, 4
        %v2430 = vld [vmem:[%s2429] sm:$0xf]
        %2432 = vset.pattern.permute.xlu0 0
        %2433 = vperm.xlu0 %2432, %v2430
        %v2434 = vpop.permute.xlu0 %2433
        %v2436 = vadd.f32 %v2427, %v2434
        %v2437 = vadd.f32 %v2428, %v2434
        %v2438 = vmax.f32 %v2436, 0.0
        %v2439 = vmax.f32 %v2437, 0.0
        %v2440 = vld [vmem:[%s754] sm:$0xff]
        %v2443 = vcombine.low %v2438, %v2439
        %v2445 = vadd.f32 %v2440, %v2443
        %v2446 = vlaneseq
        %v2447 = vshrl.u32 %v2446, 7
        %v2448 = vadd.s32 %v2447, 8
        %v2449 = vadd.s32 %v2447, 16
        %v2450 = vadd.s32 %v2447, 24
        %v2451 = vadd.s32 %v2447, 32
        %v2452 = vadd.s32 %v2447, 40
        %v2453 = vadd.s32 %v2447, 48
        %v2454 = vadd.s32 %v2447, 56
        %v2455 = vadd.s32 %v2447, 64
        %v2456 = vadd.s32 %v2447, 72
        %v2457 = vadd.s32 %v2447, 80
        %v2458 = vadd.s32 %v2447, 88
        %v2459 = vadd.s32 %v2447, 96
        %v2460 = vadd.s32 %v2447, 104
        %v2461 = vadd.s32 %v2447, 112
        %v2462 = vadd.s32 %v2447, 120
        %v2463 = vadd.s32 %v2447, 128
        %v2464 = vadd.s32 %v2447, 136
        %v2465 = vadd.s32 %v2447, 144
        %v2466 = vadd.s32 %v2447, 152
        %v2467 = vadd.s32 %v2447, 160
        %v2468 = vadd.s32 %v2447, 168
        %v2469 = vadd.s32 %v2447, 176
        %v2470 = vadd.s32 %v2447, 184
        %v2471 = vadd.s32 %v2447, 192
        %v2472 = vadd.s32 %v2447, 200
        %v2473 = vadd.s32 %v2447, 208
        %v2474 = vadd.s32 %v2447, 216
        %v2475 = vadd.s32 %v2447, 224
        %v2476 = vadd.s32 %v2447, 232
        %v2477 = vadd.s32 %v2447, 240
        %v2478 = vadd.s32 %v2447, 248
        %v2479 = vlaneseq
        %v2480 = vand.u32 %v2479, 127
        %vm2481 = vcmp.eq.s32.totalorder %v2447, %v2480
        %vm2482 = vcmp.eq.s32.totalorder %v2448, %v2480
        %vm2483 = vcmp.eq.s32.totalorder %v2449, %v2480
        %vm2484 = vcmp.eq.s32.totalorder %v2450, %v2480
        %vm2485 = vcmp.eq.s32.totalorder %v2451, %v2480
        %vm2486 = vcmp.eq.s32.totalorder %v2452, %v2480
        %vm2487 = vcmp.eq.s32.totalorder %v2453, %v2480
        %vm2488 = vcmp.eq.s32.totalorder %v2454, %v2480
        %vm2489 = vcmp.eq.s32.totalorder %v2455, %v2480
        %vm2490 = vcmp.eq.s32.totalorder %v2456, %v2480
        %vm2491 = vcmp.eq.s32.totalorder %v2457, %v2480
        %vm2492 = vcmp.eq.s32.totalorder %v2458, %v2480
        %vm2493 = vcmp.eq.s32.totalorder %v2459, %v2480
        %vm2494 = vcmp.eq.s32.totalorder %v2460, %v2480
        %vm2495 = vcmp.eq.s32.totalorder %v2461, %v2480
        %vm2496 = vcmp.eq.s32.totalorder %v2462, %v2480
        %vm2497 = vcmp.eq.s32.totalorder %v2463, %v2480
        %vm2498 = vcmp.eq.s32.totalorder %v2464, %v2480
        %vm2499 = vcmp.eq.s32.totalorder %v2465, %v2480
        %vm2500 = vcmp.eq.s32.totalorder %v2466, %v2480
        %vm2501 = vcmp.eq.s32.totalorder %v2467, %v2480
        %vm2502 = vcmp.eq.s32.totalorder %v2468, %v2480
        %vm2503 = vcmp.eq.s32.totalorder %v2469, %v2480
        %vm2504 = vcmp.eq.s32.totalorder %v2470, %v2480
        %vm2505 = vcmp.eq.s32.totalorder %v2471, %v2480
        %vm2506 = vcmp.eq.s32.totalorder %v2472, %v2480
        %vm2507 = vcmp.eq.s32.totalorder %v2473, %v2480
        %vm2508 = vcmp.eq.s32.totalorder %v2474, %v2480
        %vm2509 = vcmp.eq.s32.totalorder %v2475, %v2480
        %vm2510 = vcmp.eq.s32.totalorder %v2476, %v2480
        %vm2511 = vcmp.eq.s32.totalorder %v2477, %v2480
        %vm2512 = vcmp.eq.s32.totalorder %v2478, %v2480
        %v2513 = vsel %vm2481, 1, 0
        %v2514 = vsel %vm2482, 1, 0
        %v2515 = vsel %vm2483, 1, 0
        %v2516 = vsel %vm2484, 1, 0
        %v2517 = vsel %vm2485, 1, 0
        %v2518 = vsel %vm2486, 1, 0
        %v2519 = vsel %vm2487, 1, 0
        %v2520 = vsel %vm2488, 1, 0
        %v2521 = vsel %vm2489, 1, 0
        %v2522 = vsel %vm2490, 1, 0
        %v2523 = vsel %vm2491, 1, 0
        %v2524 = vsel %vm2492, 1, 0
        %v2525 = vsel %vm2493, 1, 0
        %v2526 = vsel %vm2494, 1, 0
        %v2527 = vsel %vm2495, 1, 0
        %v2528 = vsel %vm2496, 1, 0
        %v2529 = vsel %vm2497, 1, 0
        %v2530 = vsel %vm2498, 1, 0
        %v2531 = vsel %vm2499, 1, 0
        %v2532 = vsel %vm2500, 1, 0
        %v2533 = vsel %vm2501, 1, 0
        %v2534 = vsel %vm2502, 1, 0
        %v2535 = vsel %vm2503, 1, 0
        %v2536 = vsel %vm2504, 1, 0
        %v2537 = vsel %vm2505, 1, 0
        %v2538 = vsel %vm2506, 1, 0
        %v2539 = vsel %vm2507, 1, 0
        %v2540 = vsel %vm2508, 1, 0
        %v2541 = vsel %vm2509, 1, 0
        %v2542 = vsel %vm2510, 1, 0
        %v2543 = vsel %vm2511, 1, 0
        %v2544 = vsel %vm2512, 1, 0
        %v2545 = vcvt.s32.f32 %v2513
        %v2546 = vcvt.s32.f32 %v2514
        %v2547 = vcvt.s32.f32 %v2515
        %v2548 = vcvt.s32.f32 %v2516
        %v2549 = vcvt.s32.f32 %v2517
        %v2550 = vcvt.s32.f32 %v2518
        %v2551 = vcvt.s32.f32 %v2519
        %v2552 = vcvt.s32.f32 %v2520
        %v2553 = vcvt.s32.f32 %v2521
        %v2554 = vcvt.s32.f32 %v2522
        %v2555 = vcvt.s32.f32 %v2523
        %v2556 = vcvt.s32.f32 %v2524
        %v2557 = vcvt.s32.f32 %v2525
        %v2558 = vcvt.s32.f32 %v2526
        %v2559 = vcvt.s32.f32 %v2527
        %v2560 = vcvt.s32.f32 %v2528
        %v2561 = vcvt.s32.f32 %v2529
        %v2562 = vcvt.s32.f32 %v2530
        %v2563 = vcvt.s32.f32 %v2531
        %v2564 = vcvt.s32.f32 %v2532
        %v2565 = vcvt.s32.f32 %v2533
        %v2566 = vcvt.s32.f32 %v2534
        %v2567 = vcvt.s32.f32 %v2535
        %v2568 = vcvt.s32.f32 %v2536
        %v2569 = vcvt.s32.f32 %v2537
        %v2570 = vcvt.s32.f32 %v2538
        %v2571 = vcvt.s32.f32 %v2539
        %v2572 = vcvt.s32.f32 %v2540
        %v2573 = vcvt.s32.f32 %v2541
        %v2574 = vcvt.s32.f32 %v2542
        %v2575 = vcvt.s32.f32 %v2543
        %v2576 = vcvt.s32.f32 %v2544
        %v2578 = vcombine.high %v2445, %v2445
        %2580 = vmatprep.subr.mxu0 0.0
        %2581 = vmatpush1.msra.mxu0 %v2545
        %2582 = vmatprep.subr.mxu0 0.0
        %2583 = vmatpush1.msra.mxu0 %v2546
        %2584 = vmatprep.subr.mxu0 0.0
        %2585 = vmatpush1.msra.mxu0 %v2547
        %2586 = vmatprep.subr.mxu0 0.0
        %2587 = vmatpush1.msra.mxu0 %v2548
        %2588 = vmatprep.subr.mxu0 0.0
        %2589 = vmatpush1.msra.mxu0 %v2549
        %2590 = vmatprep.subr.mxu0 0.0
        %2591 = vmatpush1.msra.mxu0 %v2550
        %2592 = vmatprep.subr.mxu0 0.0
        %2593 = vmatpush1.msra.mxu0 %v2551
        %2594 = vmatprep.subr.mxu0 0.0
        %2595 = vmatpush1.msra.mxu0 %v2552
        %2596 = vmatprep.subr.mxu0 0.0
        %2597 = vmatpush1.msra.mxu0 %v2553
        %2598 = vmatprep.subr.mxu0 0.0
        %2599 = vmatpush1.msra.mxu0 %v2554
        %2600 = vmatprep.subr.mxu0 0.0
        %2601 = vmatpush1.msra.mxu0 %v2555
        %2602 = vmatprep.subr.mxu0 0.0
        %2603 = vmatpush1.msra.mxu0 %v2556
        %2604 = vmatprep.subr.mxu0 0.0
        %2605 = vmatpush1.msra.mxu0 %v2557
        %2606 = vmatprep.subr.mxu0 0.0
        %2607 = vmatpush1.msra.mxu0 %v2558
        %2608 = vmatprep.subr.mxu0 0.0
        %2609 = vmatpush1.msra.mxu0 %v2559
        %2610 = vmatprep.subr.mxu0 0.0
        %2611 = vmatpush1.msra.mxu0 %v2560
        %2612 = vmatprep.subr.mxu0 0.0
        %2613 = vmatpush1.msra.mxu0 %v2561
        %2614 = vmatprep.subr.mxu0 0.0
        %2615 = vmatpush1.msra.mxu0 %v2562
        %2616 = vmatprep.subr.mxu0 0.0
        %2617 = vmatpush1.msra.mxu0 %v2563
        %2618 = vmatprep.subr.mxu0 0.0
        %2619 = vmatpush1.msra.mxu0 %v2564
        %2620 = vmatprep.subr.mxu0 0.0
        %2621 = vmatpush1.msra.mxu0 %v2565
        %2622 = vmatprep.subr.mxu0 0.0
        %2623 = vmatpush1.msra.mxu0 %v2566
        %2624 = vmatprep.subr.mxu0 0.0
        %2625 = vmatpush1.msra.mxu0 %v2567
        %2626 = vmatprep.subr.mxu0 0.0
        %2627 = vmatpush1.msra.mxu0 %v2568
        %2628 = vmatprep.subr.mxu0 0.0
        %2629 = vmatpush1.msra.mxu0 %v2569
        %2630 = vmatprep.subr.mxu0 0.0
        %2631 = vmatpush1.msra.mxu0 %v2570
        %2632 = vmatprep.subr.mxu0 0.0
        %2633 = vmatpush1.msra.mxu0 %v2571
        %2634 = vmatprep.subr.mxu0 0.0
        %2635 = vmatpush1.msra.mxu0 %v2572
        %2636 = vmatprep.subr.mxu0 0.0
        %2637 = vmatpush1.msra.mxu0 %v2573
        %2638 = vmatprep.subr.mxu0 0.0
        %2639 = vmatpush1.msra.mxu0 %v2574
        %2640 = vmatprep.subr.mxu0 0.0
        %2641 = vmatpush1.msra.mxu0 %v2575
        %2642 = vmatprep.subr.mxu0 0.0
        %2643 = vmatpush1.msra.mxu0 %v2576
        %2644 = vmatprep.mubr.f32.mxu0 %v2578
        %2645 = vmatmul.mubr.f32.gmra.mrb[0].mxu0 %v2445
        %v2646 = vpop.f32.mrb[0].mxu0
        %v2647 = vadd.f32 0.0, %v2646
        %v2648 = vpop.f32.mrb[0].mxu0
        %2649 = vdwg.mxu0
        %s2650 = scalar_lea.vmem %s5, 32
        %v2651 = vld [vmem:[%s2650] sm:$0xf]
        %v2652 = vadd.s32 %v2480, 64
        %vm2653 = vcmp.eq.s32.totalorder %v2447, %v2652
        %vm2654 = vcmp.eq.s32.totalorder %v2448, %v2652
        %vm2655 = vcmp.eq.s32.totalorder %v2449, %v2652
        %vm2656 = vcmp.eq.s32.totalorder %v2450, %v2652
        %vm2657 = vcmp.eq.s32.totalorder %v2451, %v2652
        %vm2658 = vcmp.eq.s32.totalorder %v2452, %v2652
        %vm2659 = vcmp.eq.s32.totalorder %v2453, %v2652
        %vm2660 = vcmp.eq.s32.totalorder %v2454, %v2652
        %vm2661 = vcmp.eq.s32.totalorder %v2455, %v2652
        %vm2662 = vcmp.eq.s32.totalorder %v2456, %v2652
        %vm2663 = vcmp.eq.s32.totalorder %v2457, %v2652
        %vm2664 = vcmp.eq.s32.totalorder %v2458, %v2652
        %vm2665 = vcmp.eq.s32.totalorder %v2459, %v2652
        %vm2666 = vcmp.eq.s32.totalorder %v2460, %v2652
        %vm2667 = vcmp.eq.s32.totalorder %v2461, %v2652
        %vm2668 = vcmp.eq.s32.totalorder %v2462, %v2652
        %vm2669 = vcmp.eq.s32.totalorder %v2463, %v2652
        %vm2670 = vcmp.eq.s32.totalorder %v2464, %v2652
        %vm2671 = vcmp.eq.s32.totalorder %v2465, %v2652
        %vm2672 = vcmp.eq.s32.totalorder %v2466, %v2652
        %vm2673 = vcmp.eq.s32.totalorder %v2467, %v2652
        %vm2674 = vcmp.eq.s32.totalorder %v2468, %v2652
        %vm2675 = vcmp.eq.s32.totalorder %v2469, %v2652
        %vm2676 = vcmp.eq.s32.totalorder %v2470, %v2652
        %vm2677 = vcmp.eq.s32.totalorder %v2471, %v2652
        %vm2678 = vcmp.eq.s32.totalorder %v2472, %v2652
        %vm2679 = vcmp.eq.s32.totalorder %v2473, %v2652
        %vm2680 = vcmp.eq.s32.totalorder %v2474, %v2652
        %vm2681 = vcmp.eq.s32.totalorder %v2475, %v2652
        %vm2682 = vcmp.eq.s32.totalorder %v2476, %v2652
        %vm2683 = vcmp.eq.s32.totalorder %v2477, %v2652
        %vm2684 = vcmp.eq.s32.totalorder %v2478, %v2652
        %v2685 = vsel %vm2653, 1, 0
        %v2686 = vsel %vm2654, 1, 0
        %v2687 = vsel %vm2655, 1, 0
        %v2688 = vsel %vm2656, 1, 0
        %v2689 = vsel %vm2657, 1, 0
        %v2690 = vsel %vm2658, 1, 0
        %v2691 = vsel %vm2659, 1, 0
        %v2692 = vsel %vm2660, 1, 0
        %v2693 = vsel %vm2661, 1, 0
        %v2694 = vsel %vm2662, 1, 0
        %v2695 = vsel %vm2663, 1, 0
        %v2696 = vsel %vm2664, 1, 0
        %v2697 = vsel %vm2665, 1, 0
        %v2698 = vsel %vm2666, 1, 0
        %v2699 = vsel %vm2667, 1, 0
        %v2700 = vsel %vm2668, 1, 0
        %v2701 = vsel %vm2669, 1, 0
        %v2702 = vsel %vm2670, 1, 0
        %v2703 = vsel %vm2671, 1, 0
        %v2704 = vsel %vm2672, 1, 0
        %v2705 = vsel %vm2673, 1, 0
        %v2706 = vsel %vm2674, 1, 0
        %v2707 = vsel %vm2675, 1, 0
        %v2708 = vsel %vm2676, 1, 0
        %v2709 = vsel %vm2677, 1, 0
        %v2710 = vsel %vm2678, 1, 0
        %v2711 = vsel %vm2679, 1, 0
        %v2712 = vsel %vm2680, 1, 0
        %v2713 = vsel %vm2681, 1, 0
        %v2714 = vsel %vm2682, 1, 0
        %v2715 = vsel %vm2683, 1, 0
        %v2716 = vsel %vm2684, 1, 0
        %v2717 = vcvt.s32.f32 %v2685
        %v2718 = vcvt.s32.f32 %v2686
        %v2719 = vcvt.s32.f32 %v2687
        %v2720 = vcvt.s32.f32 %v2688
        %v2721 = vcvt.s32.f32 %v2689
        %v2722 = vcvt.s32.f32 %v2690
        %v2723 = vcvt.s32.f32 %v2691
        %v2724 = vcvt.s32.f32 %v2692
        %v2725 = vcvt.s32.f32 %v2693
        %v2726 = vcvt.s32.f32 %v2694
        %v2727 = vcvt.s32.f32 %v2695
        %v2728 = vcvt.s32.f32 %v2696
        %v2729 = vcvt.s32.f32 %v2697
        %v2730 = vcvt.s32.f32 %v2698
        %v2731 = vcvt.s32.f32 %v2699
        %v2732 = vcvt.s32.f32 %v2700
        %v2733 = vcvt.s32.f32 %v2701
        %v2734 = vcvt.s32.f32 %v2702
        %v2735 = vcvt.s32.f32 %v2703
        %v2736 = vcvt.s32.f32 %v2704
        %v2737 = vcvt.s32.f32 %v2705
        %v2738 = vcvt.s32.f32 %v2706
        %v2739 = vcvt.s32.f32 %v2707
        %v2740 = vcvt.s32.f32 %v2708
        %v2741 = vcvt.s32.f32 %v2709
        %v2742 = vcvt.s32.f32 %v2710
        %v2743 = vcvt.s32.f32 %v2711
        %v2744 = vcvt.s32.f32 %v2712
        %v2745 = vcvt.s32.f32 %v2713
        %v2746 = vcvt.s32.f32 %v2714
        %v2747 = vcvt.s32.f32 %v2715
        %v2748 = vcvt.s32.f32 %v2716
        %2749 = vmatprep.subr.mxu0 0.0
        %2750 = vmatpush1.msra.mxu0 %v2717
        %2751 = vmatprep.subr.mxu0 0.0
        %2752 = vmatpush1.msra.mxu0 %v2718
        %2753 = vmatprep.subr.mxu0 0.0
        %2754 = vmatpush1.msra.mxu0 %v2719
        %2755 = vmatprep.subr.mxu0 0.0
        %2756 = vmatpush1.msra.mxu0 %v2720
        %2757 = vmatprep.subr.mxu0 0.0
        %2758 = vmatpush1.msra.mxu0 %v2721
        %2759 = vmatprep.subr.mxu0 0.0
        %2760 = vmatpush1.msra.mxu0 %v2722
        %2761 = vmatprep.subr.mxu0 0.0
        %2762 = vmatpush1.msra.mxu0 %v2723
        %2763 = vmatprep.subr.mxu0 0.0
        %2764 = vmatpush1.msra.mxu0 %v2724
        %2765 = vmatprep.subr.mxu0 0.0
        %2766 = vmatpush1.msra.mxu0 %v2725
        %2767 = vmatprep.subr.mxu0 0.0
        %2768 = vmatpush1.msra.mxu0 %v2726
        %2769 = vmatprep.subr.mxu0 0.0
        %2770 = vmatpush1.msra.mxu0 %v2727
        %2771 = vmatprep.subr.mxu0 0.0
        %2772 = vmatpush1.msra.mxu0 %v2728
        %2773 = vmatprep.subr.mxu0 0.0
        %2774 = vmatpush1.msra.mxu0 %v2729
        %2775 = vmatprep.subr.mxu0 0.0
        %2776 = vmatpush1.msra.mxu0 %v2730
        %2777 = vmatprep.subr.mxu0 0.0
        %2778 = vmatpush1.msra.mxu0 %v2731
        %2779 = vmatprep.subr.mxu0 0.0
        %2780 = vmatpush1.msra.mxu0 %v2732
        %2781 = vmatprep.subr.mxu0 0.0
        %2782 = vmatpush1.msra.mxu0 %v2733
        %2783 = vmatprep.subr.mxu0 0.0
        %2784 = vmatpush1.msra.mxu0 %v2734
        %2785 = vmatprep.subr.mxu0 0.0
        %2786 = vmatpush1.msra.mxu0 %v2735
        %2787 = vmatprep.subr.mxu0 0.0
        %2788 = vmatpush1.msra.mxu0 %v2736
        %2789 = vmatprep.subr.mxu0 0.0
        %2790 = vmatpush1.msra.mxu0 %v2737
        %2791 = vmatprep.subr.mxu0 0.0
        %2792 = vmatpush1.msra.mxu0 %v2738
        %2793 = vmatprep.subr.mxu0 0.0
        %2794 = vmatpush1.msra.mxu0 %v2739
        %2795 = vmatprep.subr.mxu0 0.0
        %2796 = vmatpush1.msra.mxu0 %v2740
        %2797 = vmatprep.subr.mxu0 0.0
        %2798 = vmatpush1.msra.mxu0 %v2741
        %2799 = vmatprep.subr.mxu0 0.0
        %2800 = vmatpush1.msra.mxu0 %v2742
        %2801 = vmatprep.subr.mxu0 0.0
        %2802 = vmatpush1.msra.mxu0 %v2743
        %2803 = vmatprep.subr.mxu0 0.0
        %2804 = vmatpush1.msra.mxu0 %v2744
        %2805 = vmatprep.subr.mxu0 0.0
        %2806 = vmatpush1.msra.mxu0 %v2745
        %2807 = vmatprep.subr.mxu0 0.0
        %2808 = vmatpush1.msra.mxu0 %v2746
        %2809 = vmatprep.subr.mxu0 0.0
        %2810 = vmatpush1.msra.mxu0 %v2747
        %2811 = vmatprep.subr.mxu0 0.0
        %2812 = vmatpush1.msra.mxu0 %v2748
        %2813 = vmatprep.mubr.f32.mxu0 %v2578
        %2814 = vmatmul.mubr.f32.gmra.mrb[0].mxu0 %v2445
        %v2815 = vpop.f32.mrb[0].mxu0
        %v2816 = vadd.f32 0.0, %v2815
        %v2817 = vpop.f32.mrb[0].mxu0
        %2818 = vdwg.mxu0
        %s2819 = scalar_lea.vmem %s5, 36
        %v2820 = vld [vmem:[%s2819] sm:$0xf]
        %v2822 = vsel %vm793, %v2820, 0
        %v2825 = vsel %vm797, %v2816, 0
        %2827 = vmatprep.subr.mxu0 0.0
        %2828 = vmatpush1.msra.mxu0 %v2825
        %2829 = vmatprep.subr.mxu0 0.0
        %2830 = vmatpush1.msra.mxu0 0.0
        %2831 = vmatprep.subr.mxu0 0.0
        %2832 = vmatpush1.msra.mxu0 0.0
        %2833 = vmatprep.subr.mxu0 0.0
        %2834 = vmatpush1.msra.mxu0 0.0
        %2835 = vmatprep.subr.mxu0 0.0
        %2836 = vmatpush1.msra.mxu0 0.0
        %2837 = vmatprep.subr.mxu0 0.0
        %2838 = vmatpush1.msra.mxu0 0.0
        %2839 = vmatprep.subr.mxu0 0.0
        %2840 = vmatpush1.msra.mxu0 0.0
        %2841 = vmatprep.subr.mxu0 0.0
        %2842 = vmatpush1.msra.mxu0 0.0
        %2843 = vmatprep.subr.mxu0 0.0
        %2844 = vmatpush1.msra.mxu0 0.0
        %2845 = vmatprep.subr.mxu0 0.0
        %2846 = vmatpush1.msra.mxu0 0.0
        %2847 = vmatprep.subr.mxu0 0.0
        %2848 = vmatpush1.msra.mxu0 0.0
        %2849 = vmatprep.subr.mxu0 0.0
        %2850 = vmatpush1.msra.mxu0 0.0
        %2851 = vmatprep.subr.mxu0 0.0
        %2852 = vmatpush1.msra.mxu0 0.0
        %2853 = vmatprep.subr.mxu0 0.0
        %2854 = vmatpush1.msra.mxu0 0.0
        %2855 = vmatprep.subr.mxu0 0.0
        %2856 = vmatpush1.msra.mxu0 0.0
        %2857 = vmatprep.subr.mxu0 0.0
        %2858 = vmatpush1.msra.mxu0 0.0
        %2859 = vmatprep.subr.mxu0 0.0
        %2860 = vmatpush1.msra.mxu0 0.0
        %2861 = vmatprep.subr.mxu0 0.0
        %2862 = vmatpush1.msra.mxu0 0.0
        %2863 = vmatprep.subr.mxu0 0.0
        %2864 = vmatpush1.msra.mxu0 0.0
        %2865 = vmatprep.subr.mxu0 0.0
        %2866 = vmatpush1.msra.mxu0 0.0
        %2867 = vmatprep.subr.mxu0 0.0
        %2868 = vmatpush1.msra.mxu0 0.0
        %2869 = vmatprep.subr.mxu0 0.0
        %2870 = vmatpush1.msra.mxu0 0.0
        %2871 = vmatprep.subr.mxu0 0.0
        %2872 = vmatpush1.msra.mxu0 0.0
        %2873 = vmatprep.subr.mxu0 0.0
        %2874 = vmatpush1.msra.mxu0 0.0
        %2875 = vmatprep.subr.mxu0 0.0
        %2876 = vmatpush1.msra.mxu0 0.0
        %2877 = vmatprep.subr.mxu0 0.0
        %2878 = vmatpush1.msra.mxu0 0.0
        %2879 = vmatprep.subr.mxu0 0.0
        %2880 = vmatpush1.msra.mxu0 0.0
        %2881 = vmatprep.subr.mxu0 0.0
        %2882 = vmatpush1.msra.mxu0 0.0
        %2883 = vmatprep.subr.mxu0 0.0
        %2884 = vmatpush1.msra.mxu0 0.0
        %2885 = vmatprep.subr.mxu0 0.0
        %2886 = vmatpush1.msra.mxu0 0.0
        %2887 = vmatprep.subr.mxu0 0.0
        %2888 = vmatpush1.msra.mxu0 0.0
        %2889 = vmatprep.subr.mxu0 0.0
        %2890 = vmatpush1.msra.mxu0 0.0
        %2891 = vmatprep.mubr.f32.mxu0 0.0
        %2892 = vmatmul.mubr.f32.gmra.mrb[0].mxu0 %v2822
        %v2893 = vpop.f32.mrb[0].mxu0
        %v2894 = vadd.f32 0.0, %v2893
        %v2895 = vpop.f32.mrb[0].mxu0
        %2896 = vdwg.mxu0
        %v2898 = vsel %vm793, %v2651, 0
        %v2901 = vsel %vm797, %v2647, 0
        %2903 = vmatprep.subr.mxu0 0.0
        %2904 = vmatpush1.msra.mxu0 %v2901
        %2905 = vmatprep.subr.mxu0 0.0
        %2906 = vmatpush1.msra.mxu0 0.0
        %2907 = vmatprep.subr.mxu0 0.0
        %2908 = vmatpush1.msra.mxu0 0.0
        %2909 = vmatprep.subr.mxu0 0.0
        %2910 = vmatpush1.msra.mxu0 0.0
        %2911 = vmatprep.subr.mxu0 0.0
        %2912 = vmatpush1.msra.mxu0 0.0
        %2913 = vmatprep.subr.mxu0 0.0
        %2914 = vmatpush1.msra.mxu0 0.0
        %2915 = vmatprep.subr.mxu0 0.0
        %2916 = vmatpush1.msra.mxu0 0.0
        %2917 = vmatprep.subr.mxu0 0.0
        %2918 = vmatpush1.msra.mxu0 0.0
        %2919 = vmatprep.subr.mxu0 0.0
        %2920 = vmatpush1.msra.mxu0 0.0
        %2921 = vmatprep.subr.mxu0 0.0
        %2922 = vmatpush1.msra.mxu0 0.0
        %2923 = vmatprep.subr.mxu0 0.0
        %2924 = vmatpush1.msra.mxu0 0.0
        %2925 = vmatprep.subr.mxu0 0.0
        %2926 = vmatpush1.msra.mxu0 0.0
        %2927 = vmatprep.subr.mxu0 0.0
        %2928 = vmatpush1.msra.mxu0 0.0
        %2929 = vmatprep.subr.mxu0 0.0
        %2930 = vmatpush1.msra.mxu0 0.0
        %2931 = vmatprep.subr.mxu0 0.0
        %2932 = vmatpush1.msra.mxu0 0.0
        %2933 = vmatprep.subr.mxu0 0.0
        %2934 = vmatpush1.msra.mxu0 0.0
        %2935 = vmatprep.subr.mxu0 0.0
        %2936 = vmatpush1.msra.mxu0 0.0
        %2937 = vmatprep.subr.mxu0 0.0
        %2938 = vmatpush1.msra.mxu0 0.0
        %2939 = vmatprep.subr.mxu0 0.0
        %2940 = vmatpush1.msra.mxu0 0.0
        %2941 = vmatprep.subr.mxu0 0.0
        %2942 = vmatpush1.msra.mxu0 0.0
        %2943 = vmatprep.subr.mxu0 0.0
        %2944 = vmatpush1.msra.mxu0 0.0
        %2945 = vmatprep.subr.mxu0 0.0
        %2946 = vmatpush1.msra.mxu0 0.0
        %2947 = vmatprep.subr.mxu0 0.0
        %2948 = vmatpush1.msra.mxu0 0.0
        %2949 = vmatprep.subr.mxu0 0.0
        %2950 = vmatpush1.msra.mxu0 0.0
        %2951 = vmatprep.subr.mxu0 0.0
        %2952 = vmatpush1.msra.mxu0 0.0
        %2953 = vmatprep.subr.mxu0 0.0
        %2954 = vmatpush1.msra.mxu0 0.0
        %2955 = vmatprep.subr.mxu0 0.0
        %2956 = vmatpush1.msra.mxu0 0.0
        %2957 = vmatprep.subr.mxu0 0.0
        %2958 = vmatpush1.msra.mxu0 0.0
        %2959 = vmatprep.subr.mxu0 0.0
        %2960 = vmatpush1.msra.mxu0 0.0
        %2961 = vmatprep.subr.mxu0 0.0
        %2962 = vmatpush1.msra.mxu0 0.0
        %2963 = vmatprep.subr.mxu0 0.0
        %2964 = vmatpush1.msra.mxu0 0.0
        %2965 = vmatprep.subr.mxu0 0.0
        %2966 = vmatpush1.msra.mxu0 0.0
        %2967 = vmatprep.mubr.f32.mxu0 0.0
        %2968 = vmatmul.mubr.f32.gmra.mrb[0].mxu0 %v2898
        %v2969 = vpop.f32.mrb[0].mxu0
        %v2970 = vadd.f32 %v2894, %v2969
        %v2971 = vpop.f32.mrb[0].mxu0
        %2972 = vdwg.mxu0
        %v2973 = vadd.s32 %v2480, 128
        %vm2974 = vcmp.eq.s32.totalorder %v2447, %v2973
        %vm2975 = vcmp.eq.s32.totalorder %v2448, %v2973
        %vm2976 = vcmp.eq.s32.totalorder %v2449, %v2973
        %vm2977 = vcmp.eq.s32.totalorder %v2450, %v2973
        %vm2978 = vcmp.eq.s32.totalorder %v2451, %v2973
        %vm2979 = vcmp.eq.s32.totalorder %v2452, %v2973
        %vm2980 = vcmp.eq.s32.totalorder %v2453, %v2973
        %vm2981 = vcmp.eq.s32.totalorder %v2454, %v2973
        %vm2982 = vcmp.eq.s32.totalorder %v2455, %v2973
        %vm2983 = vcmp.eq.s32.totalorder %v2456, %v2973
        %vm2984 = vcmp.eq.s32.totalorder %v2457, %v2973
        %vm2985 = vcmp.eq.s32.totalorder %v2458, %v2973
        %vm2986 = vcmp.eq.s32.totalorder %v2459, %v2973
        %vm2987 = vcmp.eq.s32.totalorder %v2460, %v2973
        %vm2988 = vcmp.eq.s32.totalorder %v2461, %v2973
        %vm2989 = vcmp.eq.s32.totalorder %v2462, %v2973
        %vm2990 = vcmp.eq.s32.totalorder %v2463, %v2973
        %vm2991 = vcmp.eq.s32.totalorder %v2464, %v2973
        %vm2992 = vcmp.eq.s32.totalorder %v2465, %v2973
        %vm2993 = vcmp.eq.s32.totalorder %v2466, %v2973
        %vm2994 = vcmp.eq.s32.totalorder %v2467, %v2973
        %vm2995 = vcmp.eq.s32.totalorder %v2468, %v2973
        %vm2996 = vcmp.eq.s32.totalorder %v2469, %v2973
        %vm2997 = vcmp.eq.s32.totalorder %v2470, %v2973
        %vm2998 = vcmp.eq.s32.totalorder %v2471, %v2973
        %vm2999 = vcmp.eq.s32.totalorder %v2472, %v2973
        %vm3000 = vcmp.eq.s32.totalorder %v2473, %v2973
        %vm3001 = vcmp.eq.s32.totalorder %v2474, %v2973
        %vm3002 = vcmp.eq.s32.totalorder %v2475, %v2973
        %vm3003 = vcmp.eq.s32.totalorder %v2476, %v2973
        %vm3004 = vcmp.eq.s32.totalorder %v2477, %v2973
        %vm3005 = vcmp.eq.s32.totalorder %v2478, %v2973
        %v3006 = vsel %vm2974, 1, 0
        %v3007 = vsel %vm2975, 1, 0
        %v3008 = vsel %vm2976, 1, 0
        %v3009 = vsel %vm2977, 1, 0
        %v3010 = vsel %vm2978, 1, 0
        %v3011 = vsel %vm2979, 1, 0
        %v3012 = vsel %vm2980, 1, 0
        %v3013 = vsel %vm2981, 1, 0
        %v3014 = vsel %vm2982, 1, 0
        %v3015 = vsel %vm2983, 1, 0
        %v3016 = vsel %vm2984, 1, 0
        %v3017 = vsel %vm2985, 1, 0
        %v3018 = vsel %vm2986, 1, 0
        %v3019 = vsel %vm2987, 1, 0
        %v3020 = vsel %vm2988, 1, 0
        %v3021 = vsel %vm2989, 1, 0
        %v3022 = vsel %vm2990, 1, 0
        %v3023 = vsel %vm2991, 1, 0
        %v3024 = vsel %vm2992, 1, 0
        %v3025 = vsel %vm2993, 1, 0
        %v3026 = vsel %vm2994, 1, 0
        %v3027 = vsel %vm2995, 1, 0
        %v3028 = vsel %vm2996, 1, 0
        %v3029 = vsel %vm2997, 1, 0
        %v3030 = vsel %vm2998, 1, 0
        %v3031 = vsel %vm2999, 1, 0
        %v3032 = vsel %vm3000, 1, 0
        %v3033 = vsel %vm3001, 1, 0
        %v3034 = vsel %vm3002, 1, 0
        %v3035 = vsel %vm3003, 1, 0
        %v3036 = vsel %vm3004, 1, 0
        %v3037 = vsel %vm3005, 1, 0
        %v3038 = vcvt.s32.f32 %v3006
        %v3039 = vcvt.s32.f32 %v3007
        %v3040 = vcvt.s32.f32 %v3008
        %v3041 = vcvt.s32.f32 %v3009
        %v3042 = vcvt.s32.f32 %v3010
        %v3043 = vcvt.s32.f32 %v3011
        %v3044 = vcvt.s32.f32 %v3012
        %v3045 = vcvt.s32.f32 %v3013
        %v3046 = vcvt.s32.f32 %v3014
        %v3047 = vcvt.s32.f32 %v3015
        %v3048 = vcvt.s32.f32 %v3016
        %v3049 = vcvt.s32.f32 %v3017
        %v3050 = vcvt.s32.f32 %v3018
        %v3051 = vcvt.s32.f32 %v3019
        %v3052 = vcvt.s32.f32 %v3020
        %v3053 = vcvt.s32.f32 %v3021
        %v3054 = vcvt.s32.f32 %v3022
        %v3055 = vcvt.s32.f32 %v3023
        %v3056 = vcvt.s32.f32 %v3024
        %v3057 = vcvt.s32.f32 %v3025
        %v3058 = vcvt.s32.f32 %v3026
        %v3059 = vcvt.s32.f32 %v3027
        %v3060 = vcvt.s32.f32 %v3028
        %v3061 = vcvt.s32.f32 %v3029
        %v3062 = vcvt.s32.f32 %v3030
        %v3063 = vcvt.s32.f32 %v3031
        %v3064 = vcvt.s32.f32 %v3032
        %v3065 = vcvt.s32.f32 %v3033
        %v3066 = vcvt.s32.f32 %v3034
        %v3067 = vcvt.s32.f32 %v3035
        %v3068 = vcvt.s32.f32 %v3036
        %v3069 = vcvt.s32.f32 %v3037
        %3070 = vmatprep.subr.mxu0 0.0
        %3071 = vmatpush1.msra.mxu0 %v3038
        %3072 = vmatprep.subr.mxu0 0.0
        %3073 = vmatpush1.msra.mxu0 %v3039
        %3074 = vmatprep.subr.mxu0 0.0
        %3075 = vmatpush1.msra.mxu0 %v3040
        %3076 = vmatprep.subr.mxu0 0.0
        %3077 = vmatpush1.msra.mxu0 %v3041
        %3078 = vmatprep.subr.mxu0 0.0
        %3079 = vmatpush1.msra.mxu0 %v3042
        %3080 = vmatprep.subr.mxu0 0.0
        %3081 = vmatpush1.msra.mxu0 %v3043
        %3082 = vmatprep.subr.mxu0 0.0
        %3083 = vmatpush1.msra.mxu0 %v3044
        %3084 = vmatprep.subr.mxu0 0.0
        %3085 = vmatpush1.msra.mxu0 %v3045
        %3086 = vmatprep.subr.mxu0 0.0
        %3087 = vmatpush1.msra.mxu0 %v3046
        %3088 = vmatprep.subr.mxu0 0.0
        %3089 = vmatpush1.msra.mxu0 %v3047
        %3090 = vmatprep.subr.mxu0 0.0
        %3091 = vmatpush1.msra.mxu0 %v3048
        %3092 = vmatprep.subr.mxu0 0.0
        %3093 = vmatpush1.msra.mxu0 %v3049
        %3094 = vmatprep.subr.mxu0 0.0
        %3095 = vmatpush1.msra.mxu0 %v3050
        %3096 = vmatprep.subr.mxu0 0.0
        %3097 = vmatpush1.msra.mxu0 %v3051
        %3098 = vmatprep.subr.mxu0 0.0
        %3099 = vmatpush1.msra.mxu0 %v3052
        %3100 = vmatprep.subr.mxu0 0.0
        %3101 = vmatpush1.msra.mxu0 %v3053
        %3102 = vmatprep.subr.mxu0 0.0
        %3103 = vmatpush1.msra.mxu0 %v3054
        %3104 = vmatprep.subr.mxu0 0.0
        %3105 = vmatpush1.msra.mxu0 %v3055
        %3106 = vmatprep.subr.mxu0 0.0
        %3107 = vmatpush1.msra.mxu0 %v3056
        %3108 = vmatprep.subr.mxu0 0.0
        %3109 = vmatpush1.msra.mxu0 %v3057
        %3110 = vmatprep.subr.mxu0 0.0
        %3111 = vmatpush1.msra.mxu0 %v3058
        %3112 = vmatprep.subr.mxu0 0.0
        %3113 = vmatpush1.msra.mxu0 %v3059
        %3114 = vmatprep.subr.mxu0 0.0
        %3115 = vmatpush1.msra.mxu0 %v3060
        %3116 = vmatprep.subr.mxu0 0.0
        %3117 = vmatpush1.msra.mxu0 %v3061
        %3118 = vmatprep.subr.mxu0 0.0
        %3119 = vmatpush1.msra.mxu0 %v3062
        %3120 = vmatprep.subr.mxu0 0.0
        %3121 = vmatpush1.msra.mxu0 %v3063
        %3122 = vmatprep.subr.mxu0 0.0
        %3123 = vmatpush1.msra.mxu0 %v3064
        %3124 = vmatprep.subr.mxu0 0.0
        %3125 = vmatpush1.msra.mxu0 %v3065
        %3126 = vmatprep.subr.mxu0 0.0
        %3127 = vmatpush1.msra.mxu0 %v3066
        %3128 = vmatprep.subr.mxu0 0.0
        %3129 = vmatpush1.msra.mxu0 %v3067
        %3130 = vmatprep.subr.mxu0 0.0
        %3131 = vmatpush1.msra.mxu0 %v3068
        %3132 = vmatprep.subr.mxu0 0.0
        %3133 = vmatpush1.msra.mxu0 %v3069
        %3134 = vmatprep.mubr.f32.mxu0 %v2578
        %3135 = vmatmul.mubr.f32.gmra.mrb[0].mxu0 %v2445
        %v3136 = vpop.f32.mrb[0].mxu0
        %v3137 = vadd.f32 0.0, %v3136
        %v3138 = vpop.f32.mrb[0].mxu0
        %3139 = vdwg.mxu0
        %s3140 = scalar_lea.vmem %s5, 40
        %v3141 = vld [vmem:[%s3140] sm:$0xf]
        %v3143 = vsel %vm793, %v3141, 0
        %v3146 = vsel %vm797, %v3137, 0
        %3148 = vmatprep.subr.mxu0 0.0
        %3149 = vmatpush1.msra.mxu0 %v3146
        %3150 = vmatprep.subr.mxu0 0.0
        %3151 = vmatpush1.msra.mxu0 0.0
        %3152 = vmatprep.subr.mxu0 0.0
        %3153 = vmatpush1.msra.mxu0 0.0
        %3154 = vmatprep.subr.mxu0 0.0
        %3155 = vmatpush1.msra.mxu0 0.0
        %3156 = vmatprep.subr.mxu0 0.0
        %3157 = vmatpush1.msra.mxu0 0.0
        %3158 = vmatprep.subr.mxu0 0.0
        %3159 = vmatpush1.msra.mxu0 0.0
        %3160 = vmatprep.subr.mxu0 0.0
        %3161 = vmatpush1.msra.mxu0 0.0
        %3162 = vmatprep.subr.mxu0 0.0
        %3163 = vmatpush1.msra.mxu0 0.0
        %3164 = vmatprep.subr.mxu0 0.0
        %3165 = vmatpush1.msra.mxu0 0.0
        %3166 = vmatprep.subr.mxu0 0.0
        %3167 = vmatpush1.msra.mxu0 0.0
        %3168 = vmatprep.subr.mxu0 0.0
        %3169 = vmatpush1.msra.mxu0 0.0
        %3170 = vmatprep.subr.mxu0 0.0
        %3171 = vmatpush1.msra.mxu0 0.0
        %3172 = vmatprep.subr.mxu0 0.0
        %3173 = vmatpush1.msra.mxu0 0.0
        %3174 = vmatprep.subr.mxu0 0.0
        %3175 = vmatpush1.msra.mxu0 0.0
        %3176 = vmatprep.subr.mxu0 0.0
        %3177 = vmatpush1.msra.mxu0 0.0
        %3178 = vmatprep.subr.mxu0 0.0
        %3179 = vmatpush1.msra.mxu0 0.0
        %3180 = vmatprep.subr.mxu0 0.0
        %3181 = vmatpush1.msra.mxu0 0.0
        %3182 = vmatprep.subr.mxu0 0.0
        %3183 = vmatpush1.msra.mxu0 0.0
        %3184 = vmatprep.subr.mxu0 0.0
        %3185 = vmatpush1.msra.mxu0 0.0
        %3186 = vmatprep.subr.mxu0 0.0
        %3187 = vmatpush1.msra.mxu0 0.0
        %3188 = vmatprep.subr.mxu0 0.0
        %3189 = vmatpush1.msra.mxu0 0.0
        %3190 = vmatprep.subr.mxu0 0.0
        %3191 = vmatpush1.msra.mxu0 0.0
        %3192 = vmatprep.subr.mxu0 0.0
        %3193 = vmatpush1.msra.mxu0 0.0
        %3194 = vmatprep.subr.mxu0 0.0
        %3195 = vmatpush1.msra.mxu0 0.0
        %3196 = vmatprep.subr.mxu0 0.0
        %3197 = vmatpush1.msra.mxu0 0.0
        %3198 = vmatprep.subr.mxu0 0.0
        %3199 = vmatpush1.msra.mxu0 0.0
        %3200 = vmatprep.subr.mxu0 0.0
        %3201 = vmatpush1.msra.mxu0 0.0
        %3202 = vmatprep.subr.mxu0 0.0
        %3203 = vmatpush1.msra.mxu0 0.0
        %3204 = vmatprep.subr.mxu0 0.0
        %3205 = vmatpush1.msra.mxu0 0.0
        %3206 = vmatprep.subr.mxu0 0.0
        %3207 = vmatpush1.msra.mxu0 0.0
        %3208 = vmatprep.subr.mxu0 0.0
        %3209 = vmatpush1.msra.mxu0 0.0
        %3210 = vmatprep.subr.mxu0 0.0
        %3211 = vmatpush1.msra.mxu0 0.0
        %3212 = vmatprep.mubr.f32.mxu0 0.0
        %3213 = vmatmul.mubr.f32.gmra.mrb[0].mxu0 %v3143
        %v3214 = vpop.f32.mrb[0].mxu0
        %v3215 = vadd.f32 0.0, %v3214
        %v3216 = vpop.f32.mrb[0].mxu0
        %3217 = vdwg.mxu0
        %v3218 = vadd.f32 %v2970, %v3215
        %v3219 = vadd.s32 %v2480, 192
        %vm3220 = vcmp.eq.s32.totalorder %v2447, %v3219
        %vm3221 = vcmp.eq.s32.totalorder %v2448, %v3219
        %vm3222 = vcmp.eq.s32.totalorder %v2449, %v3219
        %vm3223 = vcmp.eq.s32.totalorder %v2450, %v3219
        %vm3224 = vcmp.eq.s32.totalorder %v2451, %v3219
        %vm3225 = vcmp.eq.s32.totalorder %v2452, %v3219
        %vm3226 = vcmp.eq.s32.totalorder %v2453, %v3219
        %vm3227 = vcmp.eq.s32.totalorder %v2454, %v3219
        %vm3228 = vcmp.eq.s32.totalorder %v2455, %v3219
        %vm3229 = vcmp.eq.s32.totalorder %v2456, %v3219
        %vm3230 = vcmp.eq.s32.totalorder %v2457, %v3219
        %vm3231 = vcmp.eq.s32.totalorder %v2458, %v3219
        %vm3232 = vcmp.eq.s32.totalorder %v2459, %v3219
        %vm3233 = vcmp.eq.s32.totalorder %v2460, %v3219
        %vm3234 = vcmp.eq.s32.totalorder %v2461, %v3219
        %vm3235 = vcmp.eq.s32.totalorder %v2462, %v3219
        %vm3236 = vcmp.eq.s32.totalorder %v2463, %v3219
        %vm3237 = vcmp.eq.s32.totalorder %v2464, %v3219
        %vm3238 = vcmp.eq.s32.totalorder %v2465, %v3219
        %vm3239 = vcmp.eq.s32.totalorder %v2466, %v3219
        %vm3240 = vcmp.eq.s32.totalorder %v2467, %v3219
        %vm3241 = vcmp.eq.s32.totalorder %v2468, %v3219
        %vm3242 = vcmp.eq.s32.totalorder %v2469, %v3219
        %vm3243 = vcmp.eq.s32.totalorder %v2470, %v3219
        %vm3244 = vcmp.eq.s32.totalorder %v2471, %v3219
        %vm3245 = vcmp.eq.s32.totalorder %v2472, %v3219
        %vm3246 = vcmp.eq.s32.totalorder %v2473, %v3219
        %vm3247 = vcmp.eq.s32.totalorder %v2474, %v3219
        %vm3248 = vcmp.eq.s32.totalorder %v2475, %v3219
        %vm3249 = vcmp.eq.s32.totalorder %v2476, %v3219
        %vm3250 = vcmp.eq.s32.totalorder %v2477, %v3219
        %vm3251 = vcmp.eq.s32.totalorder %v2478, %v3219
        %v3252 = vsel %vm3220, 1, 0
        %v3253 = vsel %vm3221, 1, 0
        %v3254 = vsel %vm3222, 1, 0
        %v3255 = vsel %vm3223, 1, 0
        %v3256 = vsel %vm3224, 1, 0
        %v3257 = vsel %vm3225, 1, 0
        %v3258 = vsel %vm3226, 1, 0
        %v3259 = vsel %vm3227, 1, 0
        %v3260 = vsel %vm3228, 1, 0
        %v3261 = vsel %vm3229, 1, 0
        %v3262 = vsel %vm3230, 1, 0
        %v3263 = vsel %vm3231, 1, 0
        %v3264 = vsel %vm3232, 1, 0
        %v3265 = vsel %vm3233, 1, 0
        %v3266 = vsel %vm3234, 1, 0
        %v3267 = vsel %vm3235, 1, 0
        %v3268 = vsel %vm3236, 1, 0
        %v3269 = vsel %vm3237, 1, 0
        %v3270 = vsel %vm3238, 1, 0
        %v3271 = vsel %vm3239, 1, 0
        %v3272 = vsel %vm3240, 1, 0
        %v3273 = vsel %vm3241, 1, 0
        %v3274 = vsel %vm3242, 1, 0
        %v3275 = vsel %vm3243, 1, 0
        %v3276 = vsel %vm3244, 1, 0
        %v3277 = vsel %vm3245, 1, 0
        %v3278 = vsel %vm3246, 1, 0
        %v3279 = vsel %vm3247, 1, 0
        %v3280 = vsel %vm3248, 1, 0
        %v3281 = vsel %vm3249, 1, 0
        %v3282 = vsel %vm3250, 1, 0
        %v3283 = vsel %vm3251, 1, 0
        %v3284 = vcvt.s32.f32 %v3252
        %v3285 = vcvt.s32.f32 %v3253
        %v3286 = vcvt.s32.f32 %v3254
        %v3287 = vcvt.s32.f32 %v3255
        %v3288 = vcvt.s32.f32 %v3256
        %v3289 = vcvt.s32.f32 %v3257
        %v3290 = vcvt.s32.f32 %v3258
        %v3291 = vcvt.s32.f32 %v3259
        %v3292 = vcvt.s32.f32 %v3260
        %v3293 = vcvt.s32.f32 %v3261
        %v3294 = vcvt.s32.f32 %v3262
        %v3295 = vcvt.s32.f32 %v3263
        %v3296 = vcvt.s32.f32 %v3264
        %v3297 = vcvt.s32.f32 %v3265
        %v3298 = vcvt.s32.f32 %v3266
        %v3299 = vcvt.s32.f32 %v3267
        %v3300 = vcvt.s32.f32 %v3268
        %v3301 = vcvt.s32.f32 %v3269
        %v3302 = vcvt.s32.f32 %v3270
        %v3303 = vcvt.s32.f32 %v3271
        %v3304 = vcvt.s32.f32 %v3272
        %v3305 = vcvt.s32.f32 %v3273
        %v3306 = vcvt.s32.f32 %v3274
        %v3307 = vcvt.s32.f32 %v3275
        %v3308 = vcvt.s32.f32 %v3276
        %v3309 = vcvt.s32.f32 %v3277
        %v3310 = vcvt.s32.f32 %v3278
        %v3311 = vcvt.s32.f32 %v3279
        %v3312 = vcvt.s32.f32 %v3280
        %v3313 = vcvt.s32.f32 %v3281
        %v3314 = vcvt.s32.f32 %v3282
        %v3315 = vcvt.s32.f32 %v3283
        %3316 = vmatprep.subr.mxu0 0.0
        %3317 = vmatpush1.msra.mxu0 %v3284
        %3318 = vmatprep.subr.mxu0 0.0
        %3319 = vmatpush1.msra.mxu0 %v3285
        %3320 = vmatprep.subr.mxu0 0.0
        %3321 = vmatpush1.msra.mxu0 %v3286
        %3322 = vmatprep.subr.mxu0 0.0
        %3323 = vmatpush1.msra.mxu0 %v3287
        %3324 = vmatprep.subr.mxu0 0.0
        %3325 = vmatpush1.msra.mxu0 %v3288
        %3326 = vmatprep.subr.mxu0 0.0
        %3327 = vmatpush1.msra.mxu0 %v3289
        %3328 = vmatprep.subr.mxu0 0.0
        %3329 = vmatpush1.msra.mxu0 %v3290
        %3330 = vmatprep.subr.mxu0 0.0
        %3331 = vmatpush1.msra.mxu0 %v3291
        %3332 = vmatprep.subr.mxu0 0.0
        %3333 = vmatpush1.msra.mxu0 %v3292
        %3334 = vmatprep.subr.mxu0 0.0
        %3335 = vmatpush1.msra.mxu0 %v3293
        %3336 = vmatprep.subr.mxu0 0.0
        %3337 = vmatpush1.msra.mxu0 %v3294
        %3338 = vmatprep.subr.mxu0 0.0
        %3339 = vmatpush1.msra.mxu0 %v3295
        %3340 = vmatprep.subr.mxu0 0.0
        %3341 = vmatpush1.msra.mxu0 %v3296
        %3342 = vmatprep.subr.mxu0 0.0
        %3343 = vmatpush1.msra.mxu0 %v3297
        %3344 = vmatprep.subr.mxu0 0.0
        %3345 = vmatpush1.msra.mxu0 %v3298
        %3346 = vmatprep.subr.mxu0 0.0
        %3347 = vmatpush1.msra.mxu0 %v3299
        %3348 = vmatprep.subr.mxu0 0.0
        %3349 = vmatpush1.msra.mxu0 %v3300
        %3350 = vmatprep.subr.mxu0 0.0
        %3351 = vmatpush1.msra.mxu0 %v3301
        %3352 = vmatprep.subr.mxu0 0.0
        %3353 = vmatpush1.msra.mxu0 %v3302
        %3354 = vmatprep.subr.mxu0 0.0
        %3355 = vmatpush1.msra.mxu0 %v3303
        %3356 = vmatprep.subr.mxu0 0.0
        %3357 = vmatpush1.msra.mxu0 %v3304
        %3358 = vmatprep.subr.mxu0 0.0
        %3359 = vmatpush1.msra.mxu0 %v3305
        %3360 = vmatprep.subr.mxu0 0.0
        %3361 = vmatpush1.msra.mxu0 %v3306
        %3362 = vmatprep.subr.mxu0 0.0
        %3363 = vmatpush1.msra.mxu0 %v3307
        %3364 = vmatprep.subr.mxu0 0.0
        %3365 = vmatpush1.msra.mxu0 %v3308
        %3366 = vmatprep.subr.mxu0 0.0
        %3367 = vmatpush1.msra.mxu0 %v3309
        %3368 = vmatprep.subr.mxu0 0.0
        %3369 = vmatpush1.msra.mxu0 %v3310
        %3370 = vmatprep.subr.mxu0 0.0
        %3371 = vmatpush1.msra.mxu0 %v3311
        %3372 = vmatprep.subr.mxu0 0.0
        %3373 = vmatpush1.msra.mxu0 %v3312
        %3374 = vmatprep.subr.mxu0 0.0
        %3375 = vmatpush1.msra.mxu0 %v3313
        %3376 = vmatprep.subr.mxu0 0.0
        %3377 = vmatpush1.msra.mxu0 %v3314
        %3378 = vmatprep.subr.mxu0 0.0
        %3379 = vmatpush1.msra.mxu0 %v3315
        %3380 = vmatprep.mubr.f32.mxu0 %v2578
        %3381 = vmatmul.mubr.f32.gmra.mrb[0].mxu0 %v2445
        %v3382 = vpop.f32.mrb[0].mxu0
        %v3383 = vadd.f32 0.0, %v3382
        %v3384 = vpop.f32.mrb[0].mxu0
        %3385 = vdwg.mxu0
        %s3386 = scalar_lea.vmem %s5, 44
        %v3387 = vld [vmem:[%s3386] sm:$0xf]
        %v3389 = vsel %vm793, %v3387, 0
        %v3392 = vsel %vm797, %v3383, 0
        %3394 = vmatprep.subr.mxu0 0.0
        %3395 = vmatpush1.msra.mxu0 %v3392
        %3396 = vmatprep.subr.mxu0 0.0
        %3397 = vmatpush1.msra.mxu0 0.0
        %3398 = vmatprep.subr.mxu0 0.0
        %3399 = vmatpush1.msra.mxu0 0.0
        %3400 = vmatprep.subr.mxu0 0.0
        %3401 = vmatpush1.msra.mxu0 0.0
        %3402 = vmatprep.subr.mxu0 0.0
        %3403 = vmatpush1.msra.mxu0 0.0
        %3404 = vmatprep.subr.mxu0 0.0
        %3405 = vmatpush1.msra.mxu0 0.0
        %3406 = vmatprep.subr.mxu0 0.0
        %3407 = vmatpush1.msra.mxu0 0.0
        %3408 = vmatprep.subr.mxu0 0.0
        %3409 = vmatpush1.msra.mxu0 0.0
        %3410 = vmatprep.subr.mxu0 0.0
        %3411 = vmatpush1.msra.mxu0 0.0
        %3412 = vmatprep.subr.mxu0 0.0
        %3413 = vmatpush1.msra.mxu0 0.0
        %3414 = vmatprep.subr.mxu0 0.0
        %3415 = vmatpush1.msra.mxu0 0.0
        %3416 = vmatprep.subr.mxu0 0.0
        %3417 = vmatpush1.msra.mxu0 0.0
        %3418 = vmatprep.subr.mxu0 0.0
        %3419 = vmatpush1.msra.mxu0 0.0
        %3420 = vmatprep.subr.mxu0 0.0
        %3421 = vmatpush1.msra.mxu0 0.0
        %3422 = vmatprep.subr.mxu0 0.0
        %3423 = vmatpush1.msra.mxu0 0.0
        %3424 = vmatprep.subr.mxu0 0.0
        %3425 = vmatpush1.msra.mxu0 0.0
        %3426 = vmatprep.subr.mxu0 0.0
        %3427 = vmatpush1.msra.mxu0 0.0
        %3428 = vmatprep.subr.mxu0 0.0
        %3429 = vmatpush1.msra.mxu0 0.0
        %3430 = vmatprep.subr.mxu0 0.0
        %3431 = vmatpush1.msra.mxu0 0.0
        %3432 = vmatprep.subr.mxu0 0.0
        %3433 = vmatpush1.msra.mxu0 0.0
        %3434 = vmatprep.subr.mxu0 0.0
        %3435 = vmatpush1.msra.mxu0 0.0
        %3436 = vmatprep.subr.mxu0 0.0
        %3437 = vmatpush1.msra.mxu0 0.0
        %3438 = vmatprep.subr.mxu0 0.0
        %3439 = vmatpush1.msra.mxu0 0.0
        %3440 = vmatprep.subr.mxu0 0.0
        %3441 = vmatpush1.msra.mxu0 0.0
        %3442 = vmatprep.subr.mxu0 0.0
        %3443 = vmatpush1.msra.mxu0 0.0
        %3444 = vmatprep.subr.mxu0 0.0
        %3445 = vmatpush1.msra.mxu0 0.0
        %3446 = vmatprep.subr.mxu0 0.0
        %3447 = vmatpush1.msra.mxu0 0.0
        %3448 = vmatprep.subr.mxu0 0.0
        %3449 = vmatpush1.msra.mxu0 0.0
        %3450 = vmatprep.subr.mxu0 0.0
        %3451 = vmatpush1.msra.mxu0 0.0
        %3452 = vmatprep.subr.mxu0 0.0
        %3453 = vmatpush1.msra.mxu0 0.0
        %3454 = vmatprep.subr.mxu0 0.0
        %3455 = vmatpush1.msra.mxu0 0.0
        %3456 = vmatprep.subr.mxu0 0.0
        %3457 = vmatpush1.msra.mxu0 0.0
        %3458 = vmatprep.mubr.f32.mxu0 0.0
        %3459 = vmatmul.mubr.f32.gmra.mrb[0].mxu0 %v3389
        %v3460 = vpop.f32.mrb[0].mxu0
        %v3461 = vadd.f32 0.0, %v3460
        %v3462 = vpop.f32.mrb[0].mxu0
        %3463 = vdwg.mxu0
        %v3464 = vadd.f32 %v3218, %v3461
        %s3465 = scalar_lea.vmem %s6, 8
        %v3466 = vld [vmem:[%s3465] sm:$0xf]
        %3468 = vset.pattern.permute.xlu0 0
        %3469 = vperm.xlu0 %3468, %v3466
        %v3470 = vpop.permute.xlu0 %3469
        %v3472 = vadd.f32 %v3464, %v3470
        %v3473 = vmax.f32 %v3472, 0.0
        %v3474 = vld [vmem:[%s758] sm:$0xf]
        %v3475 = vadd.f32 %v3474, %v3473
        %vm3476 = vcmask 523264
        %v3478 = vsel %vm3476, %v3475, 0
        %3480 = vmatprep.subr.mxu0 0.0
        %3481 = vmatpush1.msra.mxu0 %v2545
        %3482 = vmatprep.subr.mxu0 0.0
        %3483 = vmatpush1.msra.mxu0 %v2546
        %3484 = vmatprep.subr.mxu0 0.0
        %3485 = vmatpush1.msra.mxu0 %v2547
        %3486 = vmatprep.subr.mxu0 0.0
        %3487 = vmatpush1.msra.mxu0 %v2548
        %3488 = vmatprep.subr.mxu0 0.0
        %3489 = vmatpush1.msra.mxu0 %v2549
        %3490 = vmatprep.subr.mxu0 0.0
        %3491 = vmatpush1.msra.mxu0 %v2550
        %3492 = vmatprep.subr.mxu0 0.0
        %3493 = vmatpush1.msra.mxu0 %v2551
        %3494 = vmatprep.subr.mxu0 0.0
        %3495 = vmatpush1.msra.mxu0 %v2552
        %3496 = vmatprep.subr.mxu0 0.0
        %3497 = vmatpush1.msra.mxu0 0.0
        %3498 = vmatprep.subr.mxu0 0.0
        %3499 = vmatpush1.msra.mxu0 0.0
        %3500 = vmatprep.subr.mxu0 0.0
        %3501 = vmatpush1.msra.mxu0 0.0
        %3502 = vmatprep.subr.mxu0 0.0
        %3503 = vmatpush1.msra.mxu0 0.0
        %3504 = vmatprep.subr.mxu0 0.0
        %3505 = vmatpush1.msra.mxu0 0.0
        %3506 = vmatprep.subr.mxu0 0.0
        %3507 = vmatpush1.msra.mxu0 0.0
        %3508 = vmatprep.subr.mxu0 0.0
        %3509 = vmatpush1.msra.mxu0 0.0
        %3510 = vmatprep.subr.mxu0 0.0
        %3511 = vmatpush1.msra.mxu0 0.0
        %3512 = vmatprep.subr.mxu0 0.0
        %3513 = vmatpush1.msra.mxu0 0.0
        %3514 = vmatprep.subr.mxu0 0.0
        %3515 = vmatpush1.msra.mxu0 0.0
        %3516 = vmatprep.subr.mxu0 0.0
        %3517 = vmatpush1.msra.mxu0 0.0
        %3518 = vmatprep.subr.mxu0 0.0
        %3519 = vmatpush1.msra.mxu0 0.0
        %3520 = vmatprep.subr.mxu0 0.0
        %3521 = vmatpush1.msra.mxu0 0.0
        %3522 = vmatprep.subr.mxu0 0.0
        %3523 = vmatpush1.msra.mxu0 0.0
        %3524 = vmatprep.subr.mxu0 0.0
        %3525 = vmatpush1.msra.mxu0 0.0
        %3526 = vmatprep.subr.mxu0 0.0
        %3527 = vmatpush1.msra.mxu0 0.0
        %3528 = vmatprep.subr.mxu0 0.0
        %3529 = vmatpush1.msra.mxu0 0.0
        %3530 = vmatprep.subr.mxu0 0.0
        %3531 = vmatpush1.msra.mxu0 0.0
        %3532 = vmatprep.subr.mxu0 0.0
        %3533 = vmatpush1.msra.mxu0 0.0
        %3534 = vmatprep.subr.mxu0 0.0
        %3535 = vmatpush1.msra.mxu0 0.0
        %3536 = vmatprep.subr.mxu0 0.0
        %3537 = vmatpush1.msra.mxu0 0.0
        %3538 = vmatprep.subr.mxu0 0.0
        %3539 = vmatpush1.msra.mxu0 0.0
        %3540 = vmatprep.subr.mxu0 0.0
        %3541 = vmatpush1.msra.mxu0 0.0
        %3542 = vmatprep.subr.mxu0 0.0
        %3543 = vmatpush1.msra.mxu0 0.0
        %3544 = vmatprep.mubr.f32.mxu0 0.0
        %3545 = vmatmul.mubr.f32.gmra.mrb[0].mxu0 %v3478
        %v3546 = vpop.f32.mrb[0].mxu0
        %v3547 = vadd.f32 0.0, %v3546
        %v3548 = vpop.f32.mrb[0].mxu0
        %3549 = vdwg.mxu0
        %s3550 = scalar_lea.vmem %s5, 48
        %v3551 = vld [vmem:[%s3550] sm:$0xf]
        %v3552 = vadd.s32 %v2480, 16
        %vm3553 = vcmp.eq.s32.totalorder %v2447, %v3552
        %vm3554 = vcmp.eq.s32.totalorder %v2448, %v3552
        %vm3555 = vcmp.eq.s32.totalorder %v2449, %v3552
        %vm3556 = vcmp.eq.s32.totalorder %v2450, %v3552
        %vm3557 = vcmp.eq.s32.totalorder %v2451, %v3552
        %vm3558 = vcmp.eq.s32.totalorder %v2452, %v3552
        %vm3559 = vcmp.eq.s32.totalorder %v2453, %v3552
        %vm3560 = vcmp.eq.s32.totalorder %v2454, %v3552
        %v3561 = vsel %vm3553, 1, 0
        %v3562 = vsel %vm3554, 1, 0
        %v3563 = vsel %vm3555, 1, 0
        %v3564 = vsel %vm3556, 1, 0
        %v3565 = vsel %vm3557, 1, 0
        %v3566 = vsel %vm3558, 1, 0
        %v3567 = vsel %vm3559, 1, 0
        %v3568 = vsel %vm3560, 1, 0
        %v3569 = vcvt.s32.f32 %v3561
        %v3570 = vcvt.s32.f32 %v3562
        %v3571 = vcvt.s32.f32 %v3563
        %v3572 = vcvt.s32.f32 %v3564
        %v3573 = vcvt.s32.f32 %v3565
        %v3574 = vcvt.s32.f32 %v3566
        %v3575 = vcvt.s32.f32 %v3567
        %v3576 = vcvt.s32.f32 %v3568
        %3577 = vmatprep.subr.mxu0 0.0
        %3578 = vmatpush1.msra.mxu0 %v3569
        %3579 = vmatprep.subr.mxu0 0.0
        %3580 = vmatpush1.msra.mxu0 %v3570
        %3581 = vmatprep.subr.mxu0 0.0
        %3582 = vmatpush1.msra.mxu0 %v3571
        %3583 = vmatprep.subr.mxu0 0.0
        %3584 = vmatpush1.msra.mxu0 %v3572
        %3585 = vmatprep.subr.mxu0 0.0
        %3586 = vmatpush1.msra.mxu0 %v3573
        %3587 = vmatprep.subr.mxu0 0.0
        %3588 = vmatpush1.msra.mxu0 %v3574
        %3589 = vmatprep.subr.mxu0 0.0
        %3590 = vmatpush1.msra.mxu0 %v3575
        %3591 = vmatprep.subr.mxu0 0.0
        %3592 = vmatpush1.msra.mxu0 %v3576
        %3593 = vmatprep.subr.mxu0 0.0
        %3594 = vmatpush1.msra.mxu0 0.0
        %3595 = vmatprep.subr.mxu0 0.0
        %3596 = vmatpush1.msra.mxu0 0.0
        %3597 = vmatprep.subr.mxu0 0.0
        %3598 = vmatpush1.msra.mxu0 0.0
        %3599 = vmatprep.subr.mxu0 0.0
        %3600 = vmatpush1.msra.mxu0 0.0
        %3601 = vmatprep.subr.mxu0 0.0
        %3602 = vmatpush1.msra.mxu0 0.0
        %3603 = vmatprep.subr.mxu0 0.0
        %3604 = vmatpush1.msra.mxu0 0.0
        %3605 = vmatprep.subr.mxu0 0.0
        %3606 = vmatpush1.msra.mxu0 0.0
        %3607 = vmatprep.subr.mxu0 0.0
        %3608 = vmatpush1.msra.mxu0 0.0
        %3609 = vmatprep.subr.mxu0 0.0
        %3610 = vmatpush1.msra.mxu0 0.0
        %3611 = vmatprep.subr.mxu0 0.0
        %3612 = vmatpush1.msra.mxu0 0.0
        %3613 = vmatprep.subr.mxu0 0.0
        %3614 = vmatpush1.msra.mxu0 0.0
        %3615 = vmatprep.subr.mxu0 0.0
        %3616 = vmatpush1.msra.mxu0 0.0
        %3617 = vmatprep.subr.mxu0 0.0
        %3618 = vmatpush1.msra.mxu0 0.0
        %3619 = vmatprep.subr.mxu0 0.0
        %3620 = vmatpush1.msra.mxu0 0.0
        %3621 = vmatprep.subr.mxu0 0.0
        %3622 = vmatpush1.msra.mxu0 0.0
        %3623 = vmatprep.subr.mxu0 0.0
        %3624 = vmatpush1.msra.mxu0 0.0
        %3625 = vmatprep.subr.mxu0 0.0
        %3626 = vmatpush1.msra.mxu0 0.0
        %3627 = vmatprep.subr.mxu0 0.0
        %3628 = vmatpush1.msra.mxu0 0.0
        %3629 = vmatprep.subr.mxu0 0.0
        %3630 = vmatpush1.msra.mxu0 0.0
        %3631 = vmatprep.subr.mxu0 0.0
        %3632 = vmatpush1.msra.mxu0 0.0
        %3633 = vmatprep.subr.mxu0 0.0
        %3634 = vmatpush1.msra.mxu0 0.0
        %3635 = vmatprep.subr.mxu0 0.0
        %3636 = vmatpush1.msra.mxu0 0.0
        %3637 = vmatprep.subr.mxu0 0.0
        %3638 = vmatpush1.msra.mxu0 0.0
        %3639 = vmatprep.subr.mxu0 0.0
        %3640 = vmatpush1.msra.mxu0 0.0
        %3641 = vmatprep.mubr.f32.mxu0 0.0
        %3642 = vmatmul.mubr.f32.gmra.mrb[0].mxu0 %v3478
        %v3643 = vpop.f32.mrb[0].mxu0
        %v3644 = vadd.f32 0.0, %v3643
        %v3645 = vpop.f32.mrb[0].mxu0
        %3646 = vdwg.mxu0
        %s3647 = scalar_lea.vmem %s5, 52
        %v3648 = vld [vmem:[%s3647] sm:$0xf]
        %v3650 = vsel %vm793, %v3648, 0
        %v3653 = vsel %vm797, %v3644, 0
        %3655 = vmatprep.subr.mxu0 0.0
        %3656 = vmatpush1.msra.mxu0 %v3653
        %3657 = vmatprep.subr.mxu0 0.0
        %3658 = vmatpush1.msra.mxu0 0.0
        %3659 = vmatprep.subr.mxu0 0.0
        %3660 = vmatpush1.msra.mxu0 0.0
        %3661 = vmatprep.subr.mxu0 0.0
        %3662 = vmatpush1.msra.mxu0 0.0
        %3663 = vmatprep.subr.mxu0 0.0
        %3664 = vmatpush1.msra.mxu0 0.0
        %3665 = vmatprep.subr.mxu0 0.0
        %3666 = vmatpush1.msra.mxu0 0.0
        %3667 = vmatprep.subr.mxu0 0.0
        %3668 = vmatpush1.msra.mxu0 0.0
        %3669 = vmatprep.subr.mxu0 0.0
        %3670 = vmatpush1.msra.mxu0 0.0
        %3671 = vmatprep.subr.mxu0 0.0
        %3672 = vmatpush1.msra.mxu0 0.0
        %3673 = vmatprep.subr.mxu0 0.0
        %3674 = vmatpush1.msra.mxu0 0.0
        %3675 = vmatprep.subr.mxu0 0.0
        %3676 = vmatpush1.msra.mxu0 0.0
        %3677 = vmatprep.subr.mxu0 0.0
        %3678 = vmatpush1.msra.mxu0 0.0
        %3679 = vmatprep.subr.mxu0 0.0
        %3680 = vmatpush1.msra.mxu0 0.0
        %3681 = vmatprep.subr.mxu0 0.0
        %3682 = vmatpush1.msra.mxu0 0.0
        %3683 = vmatprep.subr.mxu0 0.0
        %3684 = vmatpush1.msra.mxu0 0.0
        %3685 = vmatprep.subr.mxu0 0.0
        %3686 = vmatpush1.msra.mxu0 0.0
        %3687 = vmatprep.subr.mxu0 0.0
        %3688 = vmatpush1.msra.mxu0 0.0
        %3689 = vmatprep.subr.mxu0 0.0
        %3690 = vmatpush1.msra.mxu0 0.0
        %3691 = vmatprep.subr.mxu0 0.0
        %3692 = vmatpush1.msra.mxu0 0.0
        %3693 = vmatprep.subr.mxu0 0.0
        %3694 = vmatpush1.msra.mxu0 0.0
        %3695 = vmatprep.subr.mxu0 0.0
        %3696 = vmatpush1.msra.mxu0 0.0
        %3697 = vmatprep.subr.mxu0 0.0
        %3698 = vmatpush1.msra.mxu0 0.0
        %3699 = vmatprep.subr.mxu0 0.0
        %3700 = vmatpush1.msra.mxu0 0.0
        %3701 = vmatprep.subr.mxu0 0.0
        %3702 = vmatpush1.msra.mxu0 0.0
        %3703 = vmatprep.subr.mxu0 0.0
        %3704 = vmatpush1.msra.mxu0 0.0
        %3705 = vmatprep.subr.mxu0 0.0
        %3706 = vmatpush1.msra.mxu0 0.0
        %3707 = vmatprep.subr.mxu0 0.0
        %3708 = vmatpush1.msra.mxu0 0.0
        %3709 = vmatprep.subr.mxu0 0.0
        %3710 = vmatpush1.msra.mxu0 0.0
        %3711 = vmatprep.subr.mxu0 0.0
        %3712 = vmatpush1.msra.mxu0 0.0
        %3713 = vmatprep.subr.mxu0 0.0
        %3714 = vmatpush1.msra.mxu0 0.0
        %3715 = vmatprep.subr.mxu0 0.0
        %3716 = vmatpush1.msra.mxu0 0.0
        %3717 = vmatprep.subr.mxu0 0.0
        %3718 = vmatpush1.msra.mxu0 0.0
        %3719 = vmatprep.mubr.f32.mxu0 0.0
        %3720 = vmatmul.mubr.f32.gmra.mrb[0].mxu0 %v3650
        %v3721 = vpop.f32.mrb[0].mxu0
        %v3722 = vadd.f32 0.0, %v3721
        %v3723 = vpop.f32.mrb[0].mxu0
        %3724 = vdwg.mxu0
        %v3726 = vsel %vm793, %v3551, 0
        %v3729 = vsel %vm797, %v3547, 0
        %3731 = vmatprep.subr.mxu0 0.0
        %3732 = vmatpush1.msra.mxu0 %v3729
        %3733 = vmatprep.subr.mxu0 0.0
        %3734 = vmatpush1.msra.mxu0 0.0
        %3735 = vmatprep.subr.mxu0 0.0
        %3736 = vmatpush1.msra.mxu0 0.0
        %3737 = vmatprep.subr.mxu0 0.0
        %3738 = vmatpush1.msra.mxu0 0.0
        %3739 = vmatprep.subr.mxu0 0.0
        %3740 = vmatpush1.msra.mxu0 0.0
        %3741 = vmatprep.subr.mxu0 0.0
        %3742 = vmatpush1.msra.mxu0 0.0
        %3743 = vmatprep.subr.mxu0 0.0
        %3744 = vmatpush1.msra.mxu0 0.0
        %3745 = vmatprep.subr.mxu0 0.0
        %3746 = vmatpush1.msra.mxu0 0.0
        %3747 = vmatprep.subr.mxu0 0.0
        %3748 = vmatpush1.msra.mxu0 0.0
        %3749 = vmatprep.subr.mxu0 0.0
        %3750 = vmatpush1.msra.mxu0 0.0
        %3751 = vmatprep.subr.mxu0 0.0
        %3752 = vmatpush1.msra.mxu0 0.0
        %3753 = vmatprep.subr.mxu0 0.0
        %3754 = vmatpush1.msra.mxu0 0.0
        %3755 = vmatprep.subr.mxu0 0.0
        %3756 = vmatpush1.msra.mxu0 0.0
        %3757 = vmatprep.subr.mxu0 0.0
        %3758 = vmatpush1.msra.mxu0 0.0
        %3759 = vmatprep.subr.mxu0 0.0
        %3760 = vmatpush1.msra.mxu0 0.0
        %3761 = vmatprep.subr.mxu0 0.0
        %3762 = vmatpush1.msra.mxu0 0.0
        %3763 = vmatprep.subr.mxu0 0.0
        %3764 = vmatpush1.msra.mxu0 0.0
        %3765 = vmatprep.subr.mxu0 0.0
        %3766 = vmatpush1.msra.mxu0 0.0
        %3767 = vmatprep.subr.mxu0 0.0
        %3768 = vmatpush1.msra.mxu0 0.0
        %3769 = vmatprep.subr.mxu0 0.0
        %3770 = vmatpush1.msra.mxu0 0.0
        %3771 = vmatprep.subr.mxu0 0.0
        %3772 = vmatpush1.msra.mxu0 0.0
        %3773 = vmatprep.subr.mxu0 0.0
        %3774 = vmatpush1.msra.mxu0 0.0
        %3775 = vmatprep.subr.mxu0 0.0
        %3776 = vmatpush1.msra.mxu0 0.0
        %3777 = vmatprep.subr.mxu0 0.0
        %3778 = vmatpush1.msra.mxu0 0.0
        %3779 = vmatprep.subr.mxu0 0.0
        %3780 = vmatpush1.msra.mxu0 0.0
        %3781 = vmatprep.subr.mxu0 0.0
        %3782 = vmatpush1.msra.mxu0 0.0
        %3783 = vmatprep.subr.mxu0 0.0
        %3784 = vmatpush1.msra.mxu0 0.0
        %3785 = vmatprep.subr.mxu0 0.0
        %3786 = vmatpush1.msra.mxu0 0.0
        %3787 = vmatprep.subr.mxu0 0.0
        %3788 = vmatpush1.msra.mxu0 0.0
        %3789 = vmatprep.subr.mxu0 0.0
        %3790 = vmatpush1.msra.mxu0 0.0
        %3791 = vmatprep.subr.mxu0 0.0
        %3792 = vmatpush1.msra.mxu0 0.0
        %3793 = vmatprep.subr.mxu0 0.0
        %3794 = vmatpush1.msra.mxu0 0.0
        %3795 = vmatprep.mubr.f32.mxu0 0.0
        %3796 = vmatmul.mubr.f32.gmra.mrb[0].mxu0 %v3726
        %v3797 = vpop.f32.mrb[0].mxu0
        %v3798 = vadd.f32 %v3722, %v3797
        %v3799 = vpop.f32.mrb[0].mxu0
        %3800 = vdwg.mxu0
        %v3801 = vadd.s32 %v2480, 32
        %vm3802 = vcmp.eq.s32.totalorder %v2447, %v3801
        %vm3803 = vcmp.eq.s32.totalorder %v2448, %v3801
        %vm3804 = vcmp.eq.s32.totalorder %v2449, %v3801
        %vm3805 = vcmp.eq.s32.totalorder %v2450, %v3801
        %vm3806 = vcmp.eq.s32.totalorder %v2451, %v3801
        %vm3807 = vcmp.eq.s32.totalorder %v2452, %v3801
        %vm3808 = vcmp.eq.s32.totalorder %v2453, %v3801
        %vm3809 = vcmp.eq.s32.totalorder %v2454, %v3801
        %v3810 = vsel %vm3802, 1, 0
        %v3811 = vsel %vm3803, 1, 0
        %v3812 = vsel %vm3804, 1, 0
        %v3813 = vsel %vm3805, 1, 0
        %v3814 = vsel %vm3806, 1, 0
        %v3815 = vsel %vm3807, 1, 0
        %v3816 = vsel %vm3808, 1, 0
        %v3817 = vsel %vm3809, 1, 0
        %v3818 = vcvt.s32.f32 %v3810
        %v3819 = vcvt.s32.f32 %v3811
        %v3820 = vcvt.s32.f32 %v3812
        %v3821 = vcvt.s32.f32 %v3813
        %v3822 = vcvt.s32.f32 %v3814
        %v3823 = vcvt.s32.f32 %v3815
        %v3824 = vcvt.s32.f32 %v3816
        %v3825 = vcvt.s32.f32 %v3817
        %3826 = vmatprep.subr.mxu0 0.0
        %3827 = vmatpush1.msra.mxu0 %v3818
        %3828 = vmatprep.subr.mxu0 0.0
        %3829 = vmatpush1.msra.mxu0 %v3819
        %3830 = vmatprep.subr.mxu0 0.0
        %3831 = vmatpush1.msra.mxu0 %v3820
        %3832 = vmatprep.subr.mxu0 0.0
        %3833 = vmatpush1.msra.mxu0 %v3821
        %3834 = vmatprep.subr.mxu0 0.0
        %3835 = vmatpush1.msra.mxu0 %v3822
        %3836 = vmatprep.subr.mxu0 0.0
        %3837 = vmatpush1.msra.mxu0 %v3823
        %3838 = vmatprep.subr.mxu0 0.0
        %3839 = vmatpush1.msra.mxu0 %v3824
        %3840 = vmatprep.subr.mxu0 0.0
        %3841 = vmatpush1.msra.mxu0 %v3825
        %3842 = vmatprep.subr.mxu0 0.0
        %3843 = vmatpush1.msra.mxu0 0.0
        %3844 = vmatprep.subr.mxu0 0.0
        %3845 = vmatpush1.msra.mxu0 0.0
        %3846 = vmatprep.subr.mxu0 0.0
        %3847 = vmatpush1.msra.mxu0 0.0
        %3848 = vmatprep.subr.mxu0 0.0
        %3849 = vmatpush1.msra.mxu0 0.0
        %3850 = vmatprep.subr.mxu0 0.0
        %3851 = vmatpush1.msra.mxu0 0.0
        %3852 = vmatprep.subr.mxu0 0.0
        %3853 = vmatpush1.msra.mxu0 0.0
        %3854 = vmatprep.subr.mxu0 0.0
        %3855 = vmatpush1.msra.mxu0 0.0
        %3856 = vmatprep.subr.mxu0 0.0
        %3857 = vmatpush1.msra.mxu0 0.0
        %3858 = vmatprep.subr.mxu0 0.0
        %3859 = vmatpush1.msra.mxu0 0.0
        %3860 = vmatprep.subr.mxu0 0.0
        %3861 = vmatpush1.msra.mxu0 0.0
        %3862 = vmatprep.subr.mxu0 0.0
        %3863 = vmatpush1.msra.mxu0 0.0
        %3864 = vmatprep.subr.mxu0 0.0
        %3865 = vmatpush1.msra.mxu0 0.0
        %3866 = vmatprep.subr.mxu0 0.0
        %3867 = vmatpush1.msra.mxu0 0.0
        %3868 = vmatprep.subr.mxu0 0.0
        %3869 = vmatpush1.msra.mxu0 0.0
        %3870 = vmatprep.subr.mxu0 0.0
        %3871 = vmatpush1.msra.mxu0 0.0
        %3872 = vmatprep.subr.mxu0 0.0
        %3873 = vmatpush1.msra.mxu0 0.0
        %3874 = vmatprep.subr.mxu0 0.0
        %3875 = vmatpush1.msra.mxu0 0.0
        %3876 = vmatprep.subr.mxu0 0.0
        %3877 = vmatpush1.msra.mxu0 0.0
        %3878 = vmatprep.subr.mxu0 0.0
        %3879 = vmatpush1.msra.mxu0 0.0
        %3880 = vmatprep.subr.mxu0 0.0
        %3881 = vmatpush1.msra.mxu0 0.0
        %3882 = vmatprep.subr.mxu0 0.0
        %3883 = vmatpush1.msra.mxu0 0.0
        %3884 = vmatprep.subr.mxu0 0.0
        %3885 = vmatpush1.msra.mxu0 0.0
        %3886 = vmatprep.subr.mxu0 0.0
        %3887 = vmatpush1.msra.mxu0 0.0
        %3888 = vmatprep.subr.mxu0 0.0
        %3889 = vmatpush1.msra.mxu0 0.0
        %3890 = vmatprep.mubr.f32.mxu0 0.0
        %3891 = vmatmul.mubr.f32.gmra.mrb[0].mxu0 %v3478
        %v3892 = vpop.f32.mrb[0].mxu0
        %v3893 = vadd.f32 0.0, %v3892
        %v3894 = vpop.f32.mrb[0].mxu0
        %3895 = vdwg.mxu0
        %s3896 = scalar_lea.vmem %s5, 56
        %v3897 = vld [vmem:[%s3896] sm:$0xf]
        %v3899 = vsel %vm793, %v3897, 0
        %v3902 = vsel %vm797, %v3893, 0
        %3904 = vmatprep.subr.mxu0 0.0
        %3905 = vmatpush1.msra.mxu0 %v3902
        %3906 = vmatprep.subr.mxu0 0.0
        %3907 = vmatpush1.msra.mxu0 0.0
        %3908 = vmatprep.subr.mxu0 0.0
        %3909 = vmatpush1.msra.mxu0 0.0
        %3910 = vmatprep.subr.mxu0 0.0
        %3911 = vmatpush1.msra.mxu0 0.0
        %3912 = vmatprep.subr.mxu0 0.0
        %3913 = vmatpush1.msra.mxu0 0.0
        %3914 = vmatprep.subr.mxu0 0.0
        %3915 = vmatpush1.msra.mxu0 0.0
        %3916 = vmatprep.subr.mxu0 0.0
        %3917 = vmatpush1.msra.mxu0 0.0
        %3918 = vmatprep.subr.mxu0 0.0
        %3919 = vmatpush1.msra.mxu0 0.0
        %3920 = vmatprep.subr.mxu0 0.0
        %3921 = vmatpush1.msra.mxu0 0.0
        %3922 = vmatprep.subr.mxu0 0.0
        %3923 = vmatpush1.msra.mxu0 0.0
        %3924 = vmatprep.subr.mxu0 0.0
        %3925 = vmatpush1.msra.mxu0 0.0
        %3926 = vmatprep.subr.mxu0 0.0
        %3927 = vmatpush1.msra.mxu0 0.0
        %3928 = vmatprep.subr.mxu0 0.0
        %3929 = vmatpush1.msra.mxu0 0.0
        %3930 = vmatprep.subr.mxu0 0.0
        %3931 = vmatpush1.msra.mxu0 0.0
        %3932 = vmatprep.subr.mxu0 0.0
        %3933 = vmatpush1.msra.mxu0 0.0
        %3934 = vmatprep.subr.mxu0 0.0
        %3935 = vmatpush1.msra.mxu0 0.0
        %3936 = vmatprep.subr.mxu0 0.0
        %3937 = vmatpush1.msra.mxu0 0.0
        %3938 = vmatprep.subr.mxu0 0.0
        %3939 = vmatpush1.msra.mxu0 0.0
        %3940 = vmatprep.subr.mxu0 0.0
        %3941 = vmatpush1.msra.mxu0 0.0
        %3942 = vmatprep.subr.mxu0 0.0
        %3943 = vmatpush1.msra.mxu0 0.0
        %3944 = vmatprep.subr.mxu0 0.0
        %3945 = vmatpush1.msra.mxu0 0.0
        %3946 = vmatprep.subr.mxu0 0.0
        %3947 = vmatpush1.msra.mxu0 0.0
        %3948 = vmatprep.subr.mxu0 0.0
        %3949 = vmatpush1.msra.mxu0 0.0
        %3950 = vmatprep.subr.mxu0 0.0
        %3951 = vmatpush1.msra.mxu0 0.0
        %3952 = vmatprep.subr.mxu0 0.0
        %3953 = vmatpush1.msra.mxu0 0.0
        %3954 = vmatprep.subr.mxu0 0.0
        %3955 = vmatpush1.msra.mxu0 0.0
        %3956 = vmatprep.subr.mxu0 0.0
        %3957 = vmatpush1.msra.mxu0 0.0
        %3958 = vmatprep.subr.mxu0 0.0
        %3959 = vmatpush1.msra.mxu0 0.0
        %3960 = vmatprep.subr.mxu0 0.0
        %3961 = vmatpush1.msra.mxu0 0.0
        %3962 = vmatprep.subr.mxu0 0.0
        %3963 = vmatpush1.msra.mxu0 0.0
        %3964 = vmatprep.subr.mxu0 0.0
        %3965 = vmatpush1.msra.mxu0 0.0
        %3966 = vmatprep.subr.mxu0 0.0
        %3967 = vmatpush1.msra.mxu0 0.0
        %3968 = vmatprep.mubr.f32.mxu0 0.0
        %3969 = vmatmul.mubr.f32.gmra.mrb[0].mxu0 %v3899
        %v3970 = vpop.f32.mrb[0].mxu0
        %v3971 = vadd.f32 0.0, %v3970
        %v3972 = vpop.f32.mrb[0].mxu0
        %3973 = vdwg.mxu0
        %v3974 = vadd.f32 %v3798, %v3971
        %v3975 = vadd.s32 %v2480, 48
        %vm3976 = vcmp.eq.s32.totalorder %v2447, %v3975
        %vm3977 = vcmp.eq.s32.totalorder %v2448, %v3975
        %vm3978 = vcmp.eq.s32.totalorder %v2449, %v3975
        %vm3979 = vcmp.eq.s32.totalorder %v2450, %v3975
        %vm3980 = vcmp.eq.s32.totalorder %v2451, %v3975
        %vm3981 = vcmp.eq.s32.totalorder %v2452, %v3975
        %vm3982 = vcmp.eq.s32.totalorder %v2453, %v3975
        %vm3983 = vcmp.eq.s32.totalorder %v2454, %v3975
        %v3984 = vsel %vm3976, 1, 0
        %v3985 = vsel %vm3977, 1, 0
        %v3986 = vsel %vm3978, 1, 0
        %v3987 = vsel %vm3979, 1, 0
        %v3988 = vsel %vm3980, 1, 0
        %v3989 = vsel %vm3981, 1, 0
        %v3990 = vsel %vm3982, 1, 0
        %v3991 = vsel %vm3983, 1, 0
        %v3992 = vcvt.s32.f32 %v3984
        %v3993 = vcvt.s32.f32 %v3985
        %v3994 = vcvt.s32.f32 %v3986
        %v3995 = vcvt.s32.f32 %v3987
        %v3996 = vcvt.s32.f32 %v3988
        %v3997 = vcvt.s32.f32 %v3989
        %v3998 = vcvt.s32.f32 %v3990
        %v3999 = vcvt.s32.f32 %v3991
        %4000 = vmatprep.subr.mxu0 0.0
        %4001 = vmatpush1.msra.mxu0 %v3992
        %4002 = vmatprep.subr.mxu0 0.0
        %4003 = vmatpush1.msra.mxu0 %v3993
        %4004 = vmatprep.subr.mxu0 0.0
        %4005 = vmatpush1.msra.mxu0 %v3994
        %4006 = vmatprep.subr.mxu0 0.0
        %4007 = vmatpush1.msra.mxu0 %v3995
        %4008 = vmatprep.subr.mxu0 0.0
        %4009 = vmatpush1.msra.mxu0 %v3996
        %4010 = vmatprep.subr.mxu0 0.0
        %4011 = vmatpush1.msra.mxu0 %v3997
        %4012 = vmatprep.subr.mxu0 0.0
        %4013 = vmatpush1.msra.mxu0 %v3998
        %4014 = vmatprep.subr.mxu0 0.0
        %4015 = vmatpush1.msra.mxu0 %v3999
        %4016 = vmatprep.subr.mxu0 0.0
        %4017 = vmatpush1.msra.mxu0 0.0
        %4018 = vmatprep.subr.mxu0 0.0
        %4019 = vmatpush1.msra.mxu0 0.0
        %4020 = vmatprep.subr.mxu0 0.0
        %4021 = vmatpush1.msra.mxu0 0.0
        %4022 = vmatprep.subr.mxu0 0.0
        %4023 = vmatpush1.msra.mxu0 0.0
        %4024 = vmatprep.subr.mxu0 0.0
        %4025 = vmatpush1.msra.mxu0 0.0
        %4026 = vmatprep.subr.mxu0 0.0
        %4027 = vmatpush1.msra.mxu0 0.0
        %4028 = vmatprep.subr.mxu0 0.0
        %4029 = vmatpush1.msra.mxu0 0.0
        %4030 = vmatprep.subr.mxu0 0.0
        %4031 = vmatpush1.msra.mxu0 0.0
        %4032 = vmatprep.subr.mxu0 0.0
        %4033 = vmatpush1.msra.mxu0 0.0
        %4034 = vmatprep.subr.mxu0 0.0
        %4035 = vmatpush1.msra.mxu0 0.0
        %4036 = vmatprep.subr.mxu0 0.0
        %4037 = vmatpush1.msra.mxu0 0.0
        %4038 = vmatprep.subr.mxu0 0.0
        %4039 = vmatpush1.msra.mxu0 0.0
        %4040 = vmatprep.subr.mxu0 0.0
        %4041 = vmatpush1.msra.mxu0 0.0
        %4042 = vmatprep.subr.mxu0 0.0
        %4043 = vmatpush1.msra.mxu0 0.0
        %4044 = vmatprep.subr.mxu0 0.0
        %4045 = vmatpush1.msra.mxu0 0.0
        %4046 = vmatprep.subr.mxu0 0.0
        %4047 = vmatpush1.msra.mxu0 0.0
        %4048 = vmatprep.subr.mxu0 0.0
        %4049 = vmatpush1.msra.mxu0 0.0
        %4050 = vmatprep.subr.mxu0 0.0
        %4051 = vmatpush1.msra.mxu0 0.0
        %4052 = vmatprep.subr.mxu0 0.0
        %4053 = vmatpush1.msra.mxu0 0.0
        %4054 = vmatprep.subr.mxu0 0.0
        %4055 = vmatpush1.msra.mxu0 0.0
        %4056 = vmatprep.subr.mxu0 0.0
        %4057 = vmatpush1.msra.mxu0 0.0
        %4058 = vmatprep.subr.mxu0 0.0
        %4059 = vmatpush1.msra.mxu0 0.0
        %4060 = vmatprep.subr.mxu0 0.0
        %4061 = vmatpush1.msra.mxu0 0.0
        %4062 = vmatprep.subr.mxu0 0.0
        %4063 = vmatpush1.msra.mxu0 0.0
        %4064 = vmatprep.mubr.f32.mxu0 0.0
        %4065 = vmatmul.mubr.f32.gmra.mrb[0].mxu0 %v3478
        %v4066 = vpop.f32.mrb[0].mxu0
        %v4067 = vadd.f32 0.0, %v4066
        %v4068 = vpop.f32.mrb[0].mxu0
        %4069 = vdwg.mxu0
        %s4070 = scalar_lea.vmem %s5, 60
        %v4071 = vld [vmem:[%s4070] sm:$0xf]
        %v4073 = vsel %vm793, %v4071, 0
        %v4076 = vsel %vm797, %v4067, 0
        %4078 = vmatprep.subr.mxu0 0.0
        %4079 = vmatpush1.msra.mxu0 %v4076
        %4080 = vmatprep.subr.mxu0 0.0
        %4081 = vmatpush1.msra.mxu0 0.0
        %4082 = vmatprep.subr.mxu0 0.0
        %4083 = vmatpush1.msra.mxu0 0.0
        %4084 = vmatprep.subr.mxu0 0.0
        %4085 = vmatpush1.msra.mxu0 0.0
        %4086 = vmatprep.subr.mxu0 0.0
        %4087 = vmatpush1.msra.mxu0 0.0
        %4088 = vmatprep.subr.mxu0 0.0
        %4089 = vmatpush1.msra.mxu0 0.0
        %4090 = vmatprep.subr.mxu0 0.0
        %4091 = vmatpush1.msra.mxu0 0.0
        %4092 = vmatprep.subr.mxu0 0.0
        %4093 = vmatpush1.msra.mxu0 0.0
        %4094 = vmatprep.subr.mxu0 0.0
        %4095 = vmatpush1.msra.mxu0 0.0
        %4096 = vmatprep.subr.mxu0 0.0
        %4097 = vmatpush1.msra.mxu0 0.0
        %4098 = vmatprep.subr.mxu0 0.0
        %4099 = vmatpush1.msra.mxu0 0.0
        %4100 = vmatprep.subr.mxu0 0.0
        %4101 = vmatpush1.msra.mxu0 0.0
        %4102 = vmatprep.subr.mxu0 0.0
        %4103 = vmatpush1.msra.mxu0 0.0
        %4104 = vmatprep.subr.mxu0 0.0
        %4105 = vmatpush1.msra.mxu0 0.0
        %4106 = vmatprep.subr.mxu0 0.0
        %4107 = vmatpush1.msra.mxu0 0.0
        %4108 = vmatprep.subr.mxu0 0.0
        %4109 = vmatpush1.msra.mxu0 0.0
        %4110 = vmatprep.subr.mxu0 0.0
        %4111 = vmatpush1.msra.mxu0 0.0
        %4112 = vmatprep.subr.mxu0 0.0
        %4113 = vmatpush1.msra.mxu0 0.0
        %4114 = vmatprep.subr.mxu0 0.0
        %4115 = vmatpush1.msra.mxu0 0.0
        %4116 = vmatprep.subr.mxu0 0.0
        %4117 = vmatpush1.msra.mxu0 0.0
        %4118 = vmatprep.subr.mxu0 0.0
        %4119 = vmatpush1.msra.mxu0 0.0
        %4120 = vmatprep.subr.mxu0 0.0
        %4121 = vmatpush1.msra.mxu0 0.0
        %4122 = vmatprep.subr.mxu0 0.0
        %4123 = vmatpush1.msra.mxu0 0.0
        %4124 = vmatprep.subr.mxu0 0.0
        %4125 = vmatpush1.msra.mxu0 0.0
        %4126 = vmatprep.subr.mxu0 0.0
        %4127 = vmatpush1.msra.mxu0 0.0
        %4128 = vmatprep.subr.mxu0 0.0
        %4129 = vmatpush1.msra.mxu0 0.0
        %4130 = vmatprep.subr.mxu0 0.0
        %4131 = vmatpush1.msra.mxu0 0.0
        %4132 = vmatprep.subr.mxu0 0.0
        %4133 = vmatpush1.msra.mxu0 0.0
        %4134 = vmatprep.subr.mxu0 0.0
        %4135 = vmatpush1.msra.mxu0 0.0
        %4136 = vmatprep.subr.mxu0 0.0
        %4137 = vmatpush1.msra.mxu0 0.0
        %4138 = vmatprep.subr.mxu0 0.0
        %4139 = vmatpush1.msra.mxu0 0.0
        %4140 = vmatprep.subr.mxu0 0.0
        %4141 = vmatpush1.msra.mxu0 0.0
        %4142 = vmatprep.mubr.f32.mxu0 0.0
        %4143 = vmatmul.mubr.f32.gmra.mrb[0].mxu0 %v4073
        %v4144 = vpop.f32.mrb[0].mxu0
        %v4145 = vadd.f32 0.0, %v4144
        %v4146 = vpop.f32.mrb[0].mxu0
        %4147 = vdwg.mxu0
        %v4148 = vadd.f32 %v3974, %v4145
        %s4149 = scalar_lea.vmem %s6, 12
        %v4150 = vld [vmem:[%s4149] sm:$0xf]
        %4152 = vset.pattern.permute.xlu0 0
        %4153 = vperm.xlu0 %4152, %v4150
        %v4154 = vpop.permute.xlu0 %4153
        %v4156 = vadd.f32 %v4148, %v4154
        %v4157 = vmax.f32 %v4156, 0.0
        %v4158 = vld [vmem:[%s762] sm:$0xf]
        %v4159 = vadd.f32 %v4158, %v4157
        %vm4160 = vcmp.eq.s32.totalorder %v2480, 0
        %v4161 = vsel %vm4160, 1, 0
        %v4162 = vcvt.s32.f32 %v4161
        %v4164 = vsel %vm793, %v4162, 0
        %v4167 = vsel %vm797, %v4159, 0
        %4169 = vmatprep.subr.mxu0 0.0
        %4170 = vmatpush1.msra.mxu0 %v4167
        %4171 = vmatprep.subr.mxu0 0.0
        %4172 = vmatpush1.msra.mxu0 0.0
        %4173 = vmatprep.subr.mxu0 0.0
        %4174 = vmatpush1.msra.mxu0 0.0
        %4175 = vmatprep.subr.mxu0 0.0
        %4176 = vmatpush1.msra.mxu0 0.0
        %4177 = vmatprep.subr.mxu0 0.0
        %4178 = vmatpush1.msra.mxu0 0.0
        %4179 = vmatprep.subr.mxu0 0.0
        %4180 = vmatpush1.msra.mxu0 0.0
        %4181 = vmatprep.subr.mxu0 0.0
        %4182 = vmatpush1.msra.mxu0 0.0
        %4183 = vmatprep.subr.mxu0 0.0
        %4184 = vmatpush1.msra.mxu0 0.0
        %4185 = vmatprep.subr.mxu0 0.0
        %4186 = vmatpush1.msra.mxu0 0.0
        %4187 = vmatprep.subr.mxu0 0.0
        %4188 = vmatpush1.msra.mxu0 0.0
        %4189 = vmatprep.subr.mxu0 0.0
        %4190 = vmatpush1.msra.mxu0 0.0
        %4191 = vmatprep.subr.mxu0 0.0
        %4192 = vmatpush1.msra.mxu0 0.0
        %4193 = vmatprep.subr.mxu0 0.0
        %4194 = vmatpush1.msra.mxu0 0.0
        %4195 = vmatprep.subr.mxu0 0.0
        %4196 = vmatpush1.msra.mxu0 0.0
        %4197 = vmatprep.subr.mxu0 0.0
        %4198 = vmatpush1.msra.mxu0 0.0
        %4199 = vmatprep.subr.mxu0 0.0
        %4200 = vmatpush1.msra.mxu0 0.0
        %4201 = vmatprep.subr.mxu0 0.0
        %4202 = vmatpush1.msra.mxu0 0.0
        %4203 = vmatprep.subr.mxu0 0.0
        %4204 = vmatpush1.msra.mxu0 0.0
        %4205 = vmatprep.subr.mxu0 0.0
        %4206 = vmatpush1.msra.mxu0 0.0
        %4207 = vmatprep.subr.mxu0 0.0
        %4208 = vmatpush1.msra.mxu0 0.0
        %4209 = vmatprep.subr.mxu0 0.0
        %4210 = vmatpush1.msra.mxu0 0.0
        %4211 = vmatprep.subr.mxu0 0.0
        %4212 = vmatpush1.msra.mxu0 0.0
        %4213 = vmatprep.subr.mxu0 0.0
        %4214 = vmatpush1.msra.mxu0 0.0
        %4215 = vmatprep.subr.mxu0 0.0
        %4216 = vmatpush1.msra.mxu0 0.0
        %4217 = vmatprep.subr.mxu0 0.0
        %4218 = vmatpush1.msra.mxu0 0.0
        %4219 = vmatprep.subr.mxu0 0.0
        %4220 = vmatpush1.msra.mxu0 0.0
        %4221 = vmatprep.subr.mxu0 0.0
        %4222 = vmatpush1.msra.mxu0 0.0
        %4223 = vmatprep.subr.mxu0 0.0
        %4224 = vmatpush1.msra.mxu0 0.0
        %4225 = vmatprep.subr.mxu0 0.0
        %4226 = vmatpush1.msra.mxu0 0.0
        %4227 = vmatprep.subr.mxu0 0.0
        %4228 = vmatpush1.msra.mxu0 0.0
        %4229 = vmatprep.subr.mxu0 0.0
        %4230 = vmatpush1.msra.mxu0 0.0
        %4231 = vmatprep.subr.mxu0 0.0
        %4232 = vmatpush1.msra.mxu0 0.0
        %4233 = vmatprep.mubr.f32.mxu0 0.0
        %4234 = vmatmul.mubr.f32.gmra.mrb[0].mxu0 %v4164
        %v4235 = vpop.f32.mrb[0].mxu0
        %v4236 = vadd.f32 0.0, %v4235
        %v4237 = vpop.f32.mrb[0].mxu0
        %4238 = vdwg.mxu0
        %v4239 = vld [vmem:[%s7] sm:$0xff]
        %v4240 = vld [vmem:[%s7 + $0x8] sm:$0xff]
        %vm4241 = vcmp.eq.s32.totalorder %v2480, 1
        %v4242 = vsel %vm4241, 1, 0
        %v4243 = vcvt.s32.f32 %v4242
        %v4245 = vsel %vm793, %v4243, 0
        %4247 = vmatprep.subr.mxu0 0.0
        %4248 = vmatpush1.msra.mxu0 %v4167
        %4249 = vmatprep.subr.mxu0 0.0
        %4250 = vmatpush1.msra.mxu0 0.0
        %4251 = vmatprep.subr.mxu0 0.0
        %4252 = vmatpush1.msra.mxu0 0.0
        %4253 = vmatprep.subr.mxu0 0.0
        %4254 = vmatpush1.msra.mxu0 0.0
        %4255 = vmatprep.subr.mxu0 0.0
        %4256 = vmatpush1.msra.mxu0 0.0
        %4257 = vmatprep.subr.mxu0 0.0
        %4258 = vmatpush1.msra.mxu0 0.0
        %4259 = vmatprep.subr.mxu0 0.0
        %4260 = vmatpush1.msra.mxu0 0.0
        %4261 = vmatprep.subr.mxu0 0.0
        %4262 = vmatpush1.msra.mxu0 0.0
        %4263 = vmatprep.subr.mxu0 0.0
        %4264 = vmatpush1.msra.mxu0 0.0
        %4265 = vmatprep.subr.mxu0 0.0
        %4266 = vmatpush1.msra.mxu0 0.0
        %4267 = vmatprep.subr.mxu0 0.0
        %4268 = vmatpush1.msra.mxu0 0.0
        %4269 = vmatprep.subr.mxu0 0.0
        %4270 = vmatpush1.msra.mxu0 0.0
        %4271 = vmatprep.subr.mxu0 0.0
        %4272 = vmatpush1.msra.mxu0 0.0
        %4273 = vmatprep.subr.mxu0 0.0
        %4274 = vmatpush1.msra.mxu0 0.0
        %4275 = vmatprep.subr.mxu0 0.0
        %4276 = vmatpush1.msra.mxu0 0.0
        %4277 = vmatprep.subr.mxu0 0.0
        %4278 = vmatpush1.msra.mxu0 0.0
        %4279 = vmatprep.subr.mxu0 0.0
        %4280 = vmatpush1.msra.mxu0 0.0
        %4281 = vmatprep.subr.mxu0 0.0
        %4282 = vmatpush1.msra.mxu0 0.0
        %4283 = vmatprep.subr.mxu0 0.0
        %4284 = vmatpush1.msra.mxu0 0.0
        %4285 = vmatprep.subr.mxu0 0.0
        %4286 = vmatpush1.msra.mxu0 0.0
        %4287 = vmatprep.subr.mxu0 0.0
        %4288 = vmatpush1.msra.mxu0 0.0
        %4289 = vmatprep.subr.mxu0 0.0
        %4290 = vmatpush1.msra.mxu0 0.0
        %4291 = vmatprep.subr.mxu0 0.0
        %4292 = vmatpush1.msra.mxu0 0.0
        %4293 = vmatprep.subr.mxu0 0.0
        %4294 = vmatpush1.msra.mxu0 0.0
        %4295 = vmatprep.subr.mxu0 0.0
        %4296 = vmatpush1.msra.mxu0 0.0
        %4297 = vmatprep.subr.mxu0 0.0
        %4298 = vmatpush1.msra.mxu0 0.0
        %4299 = vmatprep.subr.mxu0 0.0
        %4300 = vmatpush1.msra.mxu0 0.0
        %4301 = vmatprep.subr.mxu0 0.0
        %4302 = vmatpush1.msra.mxu0 0.0
        %4303 = vmatprep.subr.mxu0 0.0
        %4304 = vmatpush1.msra.mxu0 0.0
        %4305 = vmatprep.subr.mxu0 0.0
        %4306 = vmatpush1.msra.mxu0 0.0
        %4307 = vmatprep.subr.mxu0 0.0
        %4308 = vmatpush1.msra.mxu0 0.0
        %4309 = vmatprep.subr.mxu0 0.0
        %4310 = vmatpush1.msra.mxu0 0.0
        %4311 = vmatprep.mubr.f32.mxu0 0.0
        %4312 = vmatmul.mubr.f32.gmra.mrb[0].mxu0 %v4245
        %v4313 = vpop.f32.mrb[0].mxu0
        %v4314 = vadd.f32 0.0, %v4313
        %v4315 = vpop.f32.mrb[0].mxu0
        %4316 = vdwg.mxu0
        %s4317 = scalar_lea.vmem %s7, 16
        %v4318 = vld [vmem:[%s4317] sm:$0xff]
        %v4319 = vld [vmem:[%s4317 + $0x8] sm:$0xff]
        %vm4320 = vcmask 130048
        %v4322 = vsel %vm4320, %v4314, 0
        %4324 = vmatprep.subr.mxu0 0.0
        %4325 = vmatpush1.msra.mxu0 %v4318
        %4326 = vmatprep.subr.mxu0 0.0
        %4327 = vmatpush1.msra.mxu0 %v4319
        %4328 = vmatprep.subr.mxu0 0.0
        %4329 = vmatpush1.msra.mxu0 0.0
        %4330 = vmatprep.subr.mxu0 0.0
        %4331 = vmatpush1.msra.mxu0 0.0
        %4332 = vmatprep.subr.mxu0 0.0
        %4333 = vmatpush1.msra.mxu0 0.0
        %4334 = vmatprep.subr.mxu0 0.0
        %4335 = vmatpush1.msra.mxu0 0.0
        %4336 = vmatprep.subr.mxu0 0.0
        %4337 = vmatpush1.msra.mxu0 0.0
        %4338 = vmatprep.subr.mxu0 0.0
        %4339 = vmatpush1.msra.mxu0 0.0
        %4340 = vmatprep.subr.mxu0 0.0
        %4341 = vmatpush1.msra.mxu0 0.0
        %4342 = vmatprep.subr.mxu0 0.0
        %4343 = vmatpush1.msra.mxu0 0.0
        %4344 = vmatprep.subr.mxu0 0.0
        %4345 = vmatpush1.msra.mxu0 0.0
        %4346 = vmatprep.subr.mxu0 0.0
        %4347 = vmatpush1.msra.mxu0 0.0
        %4348 = vmatprep.subr.mxu0 0.0
        %4349 = vmatpush1.msra.mxu0 0.0
        %4350 = vmatprep.subr.mxu0 0.0
        %4351 = vmatpush1.msra.mxu0 0.0
        %4352 = vmatprep.subr.mxu0 0.0
        %4353 = vmatpush1.msra.mxu0 0.0
        %4354 = vmatprep.subr.mxu0 0.0
        %4355 = vmatpush1.msra.mxu0 0.0
        %4356 = vmatprep.subr.mxu0 0.0
        %4357 = vmatpush1.msra.mxu0 0.0
        %4358 = vmatprep.subr.mxu0 0.0
        %4359 = vmatpush1.msra.mxu0 0.0
        %4360 = vmatprep.subr.mxu0 0.0
        %4361 = vmatpush1.msra.mxu0 0.0
        %4362 = vmatprep.subr.mxu0 0.0
        %4363 = vmatpush1.msra.mxu0 0.0
        %4364 = vmatprep.subr.mxu0 0.0
        %4365 = vmatpush1.msra.mxu0 0.0
        %4366 = vmatprep.subr.mxu0 0.0
        %4367 = vmatpush1.msra.mxu0 0.0
        %4368 = vmatprep.subr.mxu0 0.0
        %4369 = vmatpush1.msra.mxu0 0.0
        %4370 = vmatprep.subr.mxu0 0.0
        %4371 = vmatpush1.msra.mxu0 0.0
        %4372 = vmatprep.subr.mxu0 0.0
        %4373 = vmatpush1.msra.mxu0 0.0
        %4374 = vmatprep.subr.mxu0 0.0
        %4375 = vmatpush1.msra.mxu0 0.0
        %4376 = vmatprep.subr.mxu0 0.0
        %4377 = vmatpush1.msra.mxu0 0.0
        %4378 = vmatprep.subr.mxu0 0.0
        %4379 = vmatpush1.msra.mxu0 0.0
        %4380 = vmatprep.subr.mxu0 0.0
        %4381 = vmatpush1.msra.mxu0 0.0
        %4382 = vmatprep.subr.mxu0 0.0
        %4383 = vmatpush1.msra.mxu0 0.0
        %4384 = vmatprep.subr.mxu0 0.0
        %4385 = vmatpush1.msra.mxu0 0.0
        %4386 = vmatprep.subr.mxu0 0.0
        %4387 = vmatpush1.msra.mxu0 0.0
        %4388 = vmatprep.mubr.f32.mxu0 0.0
        %4389 = vmatmul.mubr.f32.gmra.mrb[0].mxu0 %v4322
        %v4390 = vpop.f32.mrb[0].mxu0
        %v4391 = vadd.f32 0.0, %v4390
        %v4392 = vpop.f32.mrb[0].mxu0
        %4393 = vdwg.mxu0
        %v4395 = vsel %vm4320, %v4236, 0
        %4397 = vmatprep.subr.mxu0 0.0
        %4398 = vmatpush1.msra.mxu0 %v4239
        %4399 = vmatprep.subr.mxu0 0.0
        %4400 = vmatpush1.msra.mxu0 %v4240
        %4401 = vmatprep.subr.mxu0 0.0
        %4402 = vmatpush1.msra.mxu0 0.0
        %4403 = vmatprep.subr.mxu0 0.0
        %4404 = vmatpush1.msra.mxu0 0.0
        %4405 = vmatprep.subr.mxu0 0.0
        %4406 = vmatpush1.msra.mxu0 0.0
        %4407 = vmatprep.subr.mxu0 0.0
        %4408 = vmatpush1.msra.mxu0 0.0
        %4409 = vmatprep.subr.mxu0 0.0
        %4410 = vmatpush1.msra.mxu0 0.0
        %4411 = vmatprep.subr.mxu0 0.0
        %4412 = vmatpush1.msra.mxu0 0.0
        %4413 = vmatprep.subr.mxu0 0.0
        %4414 = vmatpush1.msra.mxu0 0.0
        %4415 = vmatprep.subr.mxu0 0.0
        %4416 = vmatpush1.msra.mxu0 0.0
        %4417 = vmatprep.subr.mxu0 0.0
        %4418 = vmatpush1.msra.mxu0 0.0
        %4419 = vmatprep.subr.mxu0 0.0
        %4420 = vmatpush1.msra.mxu0 0.0
        %4421 = vmatprep.subr.mxu0 0.0
        %4422 = vmatpush1.msra.mxu0 0.0
        %4423 = vmatprep.subr.mxu0 0.0
        %4424 = vmatpush1.msra.mxu0 0.0
        %4425 = vmatprep.subr.mxu0 0.0
        %4426 = vmatpush1.msra.mxu0 0.0
        %4427 = vmatprep.subr.mxu0 0.0
        %4428 = vmatpush1.msra.mxu0 0.0
        %4429 = vmatprep.subr.mxu0 0.0
        %4430 = vmatpush1.msra.mxu0 0.0
        %4431 = vmatprep.subr.mxu0 0.0
        %4432 = vmatpush1.msra.mxu0 0.0
        %4433 = vmatprep.subr.mxu0 0.0
        %4434 = vmatpush1.msra.mxu0 0.0
        %4435 = vmatprep.subr.mxu0 0.0
        %4436 = vmatpush1.msra.mxu0 0.0
        %4437 = vmatprep.subr.mxu0 0.0
        %4438 = vmatpush1.msra.mxu0 0.0
        %4439 = vmatprep.subr.mxu0 0.0
        %4440 = vmatpush1.msra.mxu0 0.0
        %4441 = vmatprep.subr.mxu0 0.0
        %4442 = vmatpush1.msra.mxu0 0.0
        %4443 = vmatprep.subr.mxu0 0.0
        %4444 = vmatpush1.msra.mxu0 0.0
        %4445 = vmatprep.subr.mxu0 0.0
        %4446 = vmatpush1.msra.mxu0 0.0
        %4447 = vmatprep.subr.mxu0 0.0
        %4448 = vmatpush1.msra.mxu0 0.0
        %4449 = vmatprep.subr.mxu0 0.0
        %4450 = vmatpush1.msra.mxu0 0.0
        %4451 = vmatprep.subr.mxu0 0.0
        %4452 = vmatpush1.msra.mxu0 0.0
        %4453 = vmatprep.subr.mxu0 0.0
        %4454 = vmatpush1.msra.mxu0 0.0
        %4455 = vmatprep.subr.mxu0 0.0
        %4456 = vmatpush1.msra.mxu0 0.0
        %4457 = vmatprep.subr.mxu0 0.0
        %4458 = vmatpush1.msra.mxu0 0.0
        %4459 = vmatprep.subr.mxu0 0.0
        %4460 = vmatpush1.msra.mxu0 0.0
        %4461 = vmatprep.mubr.f32.mxu0 0.0
        %4462 = vmatmul.mubr.f32.gmra.mrb[0].mxu0 %v4395
        %v4463 = vpop.f32.mrb[0].mxu0
        %v4464 = vadd.f32 %v4391, %v4463
        %v4465 = vpop.f32.mrb[0].mxu0
        %4466 = vdwg.mxu0
        %vm4467 = vcmp.eq.s32.totalorder %v2480, 2
        %v4468 = vsel %vm4467, 1, 0
        %v4469 = vcvt.s32.f32 %v4468
        %v4471 = vsel %vm793, %v4469, 0
        %4473 = vmatprep.subr.mxu0 0.0
        %4474 = vmatpush1.msra.mxu0 %v4167
        %4475 = vmatprep.subr.mxu0 0.0
        %4476 = vmatpush1.msra.mxu0 0.0
        %4477 = vmatprep.subr.mxu0 0.0
        %4478 = vmatpush1.msra.mxu0 0.0
        %4479 = vmatprep.subr.mxu0 0.0
        %4480 = vmatpush1.msra.mxu0 0.0
        %4481 = vmatprep.subr.mxu0 0.0
        %4482 = vmatpush1.msra.mxu0 0.0
        %4483 = vmatprep.subr.mxu0 0.0
        %4484 = vmatpush1.msra.mxu0 0.0
        %4485 = vmatprep.subr.mxu0 0.0
        %4486 = vmatpush1.msra.mxu0 0.0
        %4487 = vmatprep.subr.mxu0 0.0
        %4488 = vmatpush1.msra.mxu0 0.0
        %4489 = vmatprep.subr.mxu0 0.0
        %4490 = vmatpush1.msra.mxu0 0.0
        %4491 = vmatprep.subr.mxu0 0.0
        %4492 = vmatpush1.msra.mxu0 0.0
        %4493 = vmatprep.subr.mxu0 0.0
        %4494 = vmatpush1.msra.mxu0 0.0
        %4495 = vmatprep.subr.mxu0 0.0
        %4496 = vmatpush1.msra.mxu0 0.0
        %4497 = vmatprep.subr.mxu0 0.0
        %4498 = vmatpush1.msra.mxu0 0.0
        %4499 = vmatprep.subr.mxu0 0.0
        %4500 = vmatpush1.msra.mxu0 0.0
        %4501 = vmatprep.subr.mxu0 0.0
        %4502 = vmatpush1.msra.mxu0 0.0
        %4503 = vmatprep.subr.mxu0 0.0
        %4504 = vmatpush1.msra.mxu0 0.0
        %4505 = vmatprep.subr.mxu0 0.0
        %4506 = vmatpush1.msra.mxu0 0.0
        %4507 = vmatprep.subr.mxu0 0.0
        %4508 = vmatpush1.msra.mxu0 0.0
        %4509 = vmatprep.subr.mxu0 0.0
        %4510 = vmatpush1.msra.mxu0 0.0
        %4511 = vmatprep.subr.mxu0 0.0
        %4512 = vmatpush1.msra.mxu0 0.0
        %4513 = vmatprep.subr.mxu0 0.0
        %4514 = vmatpush1.msra.mxu0 0.0
        %4515 = vmatprep.subr.mxu0 0.0
        %4516 = vmatpush1.msra.mxu0 0.0
        %4517 = vmatprep.subr.mxu0 0.0
        %4518 = vmatpush1.msra.mxu0 0.0
        %4519 = vmatprep.subr.mxu0 0.0
        %4520 = vmatpush1.msra.mxu0 0.0
        %4521 = vmatprep.subr.mxu0 0.0
        %4522 = vmatpush1.msra.mxu0 0.0
        %4523 = vmatprep.subr.mxu0 0.0
        %4524 = vmatpush1.msra.mxu0 0.0
        %4525 = vmatprep.subr.mxu0 0.0
        %4526 = vmatpush1.msra.mxu0 0.0
        %4527 = vmatprep.subr.mxu0 0.0
        %4528 = vmatpush1.msra.mxu0 0.0
        %4529 = vmatprep.subr.mxu0 0.0
        %4530 = vmatpush1.msra.mxu0 0.0
        %4531 = vmatprep.subr.mxu0 0.0
        %4532 = vmatpush1.msra.mxu0 0.0
        %4533 = vmatprep.subr.mxu0 0.0
        %4534 = vmatpush1.msra.mxu0 0.0
        %4535 = vmatprep.subr.mxu0 0.0
        %4536 = vmatpush1.msra.mxu0 0.0
        %4537 = vmatprep.mubr.f32.mxu0 0.0
        %4538 = vmatmul.mubr.f32.gmra.mrb[0].mxu0 %v4471
        %v4539 = vpop.f32.mrb[0].mxu0
        %v4540 = vadd.f32 0.0, %v4539
        %v4541 = vpop.f32.mrb[0].mxu0
        %4542 = vdwg.mxu0
        %s4543 = scalar_lea.vmem %s7, 32
        %v4544 = vld [vmem:[%s4543] sm:$0xff]
        %v4545 = vld [vmem:[%s4543 + $0x8] sm:$0xff]
        %v4547 = vsel %vm4320, %v4540, 0
        %4549 = vmatprep.subr.mxu0 0.0
        %4550 = vmatpush1.msra.mxu0 %v4544
        %4551 = vmatprep.subr.mxu0 0.0
        %4552 = vmatpush1.msra.mxu0 %v4545
        %4553 = vmatprep.subr.mxu0 0.0
        %4554 = vmatpush1.msra.mxu0 0.0
        %4555 = vmatprep.subr.mxu0 0.0
        %4556 = vmatpush1.msra.mxu0 0.0
        %4557 = vmatprep.subr.mxu0 0.0
        %4558 = vmatpush1.msra.mxu0 0.0
        %4559 = vmatprep.subr.mxu0 0.0
        %4560 = vmatpush1.msra.mxu0 0.0
        %4561 = vmatprep.subr.mxu0 0.0
        %4562 = vmatpush1.msra.mxu0 0.0
        %4563 = vmatprep.subr.mxu0 0.0
        %4564 = vmatpush1.msra.mxu0 0.0
        %4565 = vmatprep.subr.mxu0 0.0
        %4566 = vmatpush1.msra.mxu0 0.0
        %4567 = vmatprep.subr.mxu0 0.0
        %4568 = vmatpush1.msra.mxu0 0.0
        %4569 = vmatprep.subr.mxu0 0.0
        %4570 = vmatpush1.msra.mxu0 0.0
        %4571 = vmatprep.subr.mxu0 0.0
        %4572 = vmatpush1.msra.mxu0 0.0
        %4573 = vmatprep.subr.mxu0 0.0
        %4574 = vmatpush1.msra.mxu0 0.0
        %4575 = vmatprep.subr.mxu0 0.0
        %4576 = vmatpush1.msra.mxu0 0.0
        %4577 = vmatprep.subr.mxu0 0.0
        %4578 = vmatpush1.msra.mxu0 0.0
        %4579 = vmatprep.subr.mxu0 0.0
        %4580 = vmatpush1.msra.mxu0 0.0
        %4581 = vmatprep.subr.mxu0 0.0
        %4582 = vmatpush1.msra.mxu0 0.0
        %4583 = vmatprep.subr.mxu0 0.0
        %4584 = vmatpush1.msra.mxu0 0.0
        %4585 = vmatprep.subr.mxu0 0.0
        %4586 = vmatpush1.msra.mxu0 0.0
        %4587 = vmatprep.subr.mxu0 0.0
        %4588 = vmatpush1.msra.mxu0 0.0
        %4589 = vmatprep.subr.mxu0 0.0
        %4590 = vmatpush1.msra.mxu0 0.0
        %4591 = vmatprep.subr.mxu0 0.0
        %4592 = vmatpush1.msra.mxu0 0.0
        %4593 = vmatprep.subr.mxu0 0.0
        %4594 = vmatpush1.msra.mxu0 0.0
        %4595 = vmatprep.subr.mxu0 0.0
        %4596 = vmatpush1.msra.mxu0 0.0
        %4597 = vmatprep.subr.mxu0 0.0
        %4598 = vmatpush1.msra.mxu0 0.0
        %4599 = vmatprep.subr.mxu0 0.0
        %4600 = vmatpush1.msra.mxu0 0.0
        %4601 = vmatprep.subr.mxu0 0.0
        %4602 = vmatpush1.msra.mxu0 0.0
        %4603 = vmatprep.subr.mxu0 0.0
        %4604 = vmatpush1.msra.mxu0 0.0
        %4605 = vmatprep.subr.mxu0 0.0
        %4606 = vmatpush1.msra.mxu0 0.0
        %4607 = vmatprep.subr.mxu0 0.0
        %4608 = vmatpush1.msra.mxu0 0.0
        %4609 = vmatprep.subr.mxu0 0.0
        %4610 = vmatpush1.msra.mxu0 0.0
        %4611 = vmatprep.subr.mxu0 0.0
        %4612 = vmatpush1.msra.mxu0 0.0
        %4613 = vmatprep.mubr.f32.mxu0 0.0
        %4614 = vmatmul.mubr.f32.gmra.mrb[0].mxu0 %v4547
        %v4615 = vpop.f32.mrb[0].mxu0
        %v4616 = vadd.f32 0.0, %v4615
        %v4617 = vpop.f32.mrb[0].mxu0
        %4618 = vdwg.mxu0
        %v4619 = vadd.f32 %v4464, %v4616
        %vm4620 = vcmp.eq.s32.totalorder %v2480, 3
        %v4621 = vsel %vm4620, 1, 0
        %v4622 = vcvt.s32.f32 %v4621
        %v4624 = vsel %vm793, %v4622, 0
        %4626 = vmatprep.subr.mxu0 0.0
        %4627 = vmatpush1.msra.mxu0 %v4167
        %4628 = vmatprep.subr.mxu0 0.0
        %4629 = vmatpush1.msra.mxu0 0.0
        %4630 = vmatprep.subr.mxu0 0.0
        %4631 = vmatpush1.msra.mxu0 0.0
        %4632 = vmatprep.subr.mxu0 0.0
        %4633 = vmatpush1.msra.mxu0 0.0
        %4634 = vmatprep.subr.mxu0 0.0
        %4635 = vmatpush1.msra.mxu0 0.0
        %4636 = vmatprep.subr.mxu0 0.0
        %4637 = vmatpush1.msra.mxu0 0.0
        %4638 = vmatprep.subr.mxu0 0.0
        %4639 = vmatpush1.msra.mxu0 0.0
        %4640 = vmatprep.subr.mxu0 0.0
        %4641 = vmatpush1.msra.mxu0 0.0
        %4642 = vmatprep.subr.mxu0 0.0
        %4643 = vmatpush1.msra.mxu0 0.0
        %4644 = vmatprep.subr.mxu0 0.0
        %4645 = vmatpush1.msra.mxu0 0.0
        %4646 = vmatprep.subr.mxu0 0.0
        %4647 = vmatpush1.msra.mxu0 0.0
        %4648 = vmatprep.subr.mxu0 0.0
        %4649 = vmatpush1.msra.mxu0 0.0
        %4650 = vmatprep.subr.mxu0 0.0
        %4651 = vmatpush1.msra.mxu0 0.0
        %4652 = vmatprep.subr.mxu0 0.0
        %4653 = vmatpush1.msra.mxu0 0.0
        %4654 = vmatprep.subr.mxu0 0.0
        %4655 = vmatpush1.msra.mxu0 0.0
        %4656 = vmatprep.subr.mxu0 0.0
        %4657 = vmatpush1.msra.mxu0 0.0
        %4658 = vmatprep.subr.mxu0 0.0
        %4659 = vmatpush1.msra.mxu0 0.0
        %4660 = vmatprep.subr.mxu0 0.0
        %4661 = vmatpush1.msra.mxu0 0.0
        %4662 = vmatprep.subr.mxu0 0.0
        %4663 = vmatpush1.msra.mxu0 0.0
        %4664 = vmatprep.subr.mxu0 0.0
        %4665 = vmatpush1.msra.mxu0 0.0
        %4666 = vmatprep.subr.mxu0 0.0
        %4667 = vmatpush1.msra.mxu0 0.0
        %4668 = vmatprep.subr.mxu0 0.0
        %4669 = vmatpush1.msra.mxu0 0.0
        %4670 = vmatprep.subr.mxu0 0.0
        %4671 = vmatpush1.msra.mxu0 0.0
        %4672 = vmatprep.subr.mxu0 0.0
        %4673 = vmatpush1.msra.mxu0 0.0
        %4674 = vmatprep.subr.mxu0 0.0
        %4675 = vmatpush1.msra.mxu0 0.0
        %4676 = vmatprep.subr.mxu0 0.0
        %4677 = vmatpush1.msra.mxu0 0.0
        %4678 = vmatprep.subr.mxu0 0.0
        %4679 = vmatpush1.msra.mxu0 0.0
        %4680 = vmatprep.subr.mxu0 0.0
        %4681 = vmatpush1.msra.mxu0 0.0
        %4682 = vmatprep.subr.mxu0 0.0
        %4683 = vmatpush1.msra.mxu0 0.0
        %4684 = vmatprep.subr.mxu0 0.0
        %4685 = vmatpush1.msra.mxu0 0.0
        %4686 = vmatprep.subr.mxu0 0.0
        %4687 = vmatpush1.msra.mxu0 0.0
        %4688 = vmatprep.subr.mxu0 0.0
        %4689 = vmatpush1.msra.mxu0 0.0
        %4690 = vmatprep.mubr.f32.mxu0 0.0
        %4691 = vmatmul.mubr.f32.gmra.mrb[0].mxu0 %v4624
        %v4692 = vpop.f32.mrb[0].mxu0
        %v4693 = vadd.f32 0.0, %v4692
        %v4694 = vpop.f32.mrb[0].mxu0
        %4695 = vdwg.mxu0
        %s4696 = scalar_lea.vmem %s7, 48
        %v4697 = vld [vmem:[%s4696] sm:$0xff]
        %v4698 = vld [vmem:[%s4696 + $0x8] sm:$0xff]
        %v4700 = vsel %vm4320, %v4693, 0
        %4702 = vmatprep.subr.mxu0 0.0
        %4703 = vmatpush1.msra.mxu0 %v4697
        %4704 = vmatprep.subr.mxu0 0.0
        %4705 = vmatpush1.msra.mxu0 %v4698
        %4706 = vmatprep.subr.mxu0 0.0
        %4707 = vmatpush1.msra.mxu0 0.0
        %4708 = vmatprep.subr.mxu0 0.0
        %4709 = vmatpush1.msra.mxu0 0.0
        %4710 = vmatprep.subr.mxu0 0.0
        %4711 = vmatpush1.msra.mxu0 0.0
        %4712 = vmatprep.subr.mxu0 0.0
        %4713 = vmatpush1.msra.mxu0 0.0
        %4714 = vmatprep.subr.mxu0 0.0
        %4715 = vmatpush1.msra.mxu0 0.0
        %4716 = vmatprep.subr.mxu0 0.0
        %4717 = vmatpush1.msra.mxu0 0.0
        %4718 = vmatprep.subr.mxu0 0.0
        %4719 = vmatpush1.msra.mxu0 0.0
        %4720 = vmatprep.subr.mxu0 0.0
        %4721 = vmatpush1.msra.mxu0 0.0
        %4722 = vmatprep.subr.mxu0 0.0
        %4723 = vmatpush1.msra.mxu0 0.0
        %4724 = vmatprep.subr.mxu0 0.0
        %4725 = vmatpush1.msra.mxu0 0.0
        %4726 = vmatprep.subr.mxu0 0.0
        %4727 = vmatpush1.msra.mxu0 0.0
        %4728 = vmatprep.subr.mxu0 0.0
        %4729 = vmatpush1.msra.mxu0 0.0
        %4730 = vmatprep.subr.mxu0 0.0
        %4731 = vmatpush1.msra.mxu0 0.0
        %4732 = vmatprep.subr.mxu0 0.0
        %4733 = vmatpush1.msra.mxu0 0.0
        %4734 = vmatprep.subr.mxu0 0.0
        %4735 = vmatpush1.msra.mxu0 0.0
        %4736 = vmatprep.subr.mxu0 0.0
        %4737 = vmatpush1.msra.mxu0 0.0
        %4738 = vmatprep.subr.mxu0 0.0
        %4739 = vmatpush1.msra.mxu0 0.0
        %4740 = vmatprep.subr.mxu0 0.0
        %4741 = vmatpush1.msra.mxu0 0.0
        %4742 = vmatprep.subr.mxu0 0.0
        %4743 = vmatpush1.msra.mxu0 0.0
        %4744 = vmatprep.subr.mxu0 0.0
        %4745 = vmatpush1.msra.mxu0 0.0
        %4746 = vmatprep.subr.mxu0 0.0
        %4747 = vmatpush1.msra.mxu0 0.0
        %4748 = vmatprep.subr.mxu0 0.0
        %4749 = vmatpush1.msra.mxu0 0.0
        %4750 = vmatprep.subr.mxu0 0.0
        %4751 = vmatpush1.msra.mxu0 0.0
        %4752 = vmatprep.subr.mxu0 0.0
        %4753 = vmatpush1.msra.mxu0 0.0
        %4754 = vmatprep.subr.mxu0 0.0
        %4755 = vmatpush1.msra.mxu0 0.0
        %4756 = vmatprep.subr.mxu0 0.0
        %4757 = vmatpush1.msra.mxu0 0.0
        %4758 = vmatprep.subr.mxu0 0.0
        %4759 = vmatpush1.msra.mxu0 0.0
        %4760 = vmatprep.subr.mxu0 0.0
        %4761 = vmatpush1.msra.mxu0 0.0
        %4762 = vmatprep.subr.mxu0 0.0
        %4763 = vmatpush1.msra.mxu0 0.0
        %4764 = vmatprep.subr.mxu0 0.0
        %4765 = vmatpush1.msra.mxu0 0.0
        %4766 = vmatprep.mubr.f32.mxu0 0.0
        %4767 = vmatmul.mubr.f32.gmra.mrb[0].mxu0 %v4700
        %v4768 = vpop.f32.mrb[0].mxu0
        %v4769 = vadd.f32 0.0, %v4768
        %v4770 = vpop.f32.mrb[0].mxu0
        %4771 = vdwg.mxu0
        %v4772 = vadd.f32 %v4619, %v4769
        %v4773 = vld [vmem:[%s8] sm:$0x1]
        %v4774 = vadd.f32 %v4772, %v4773
        %v4775 = vmax.f32 %v4774, 0.0
        %v4776 = vld [vmem:[%s9] sm:$0xf]
        %v4777 = vld [vmem:[%s10] sm:$0x1]
        %v4779 = vsel %vm793, %v4775, 0
        %v4782 = vsel %vm797, %v4776, 0
        %4784 = vmatprep.subr.mxu0 0.0
        %4785 = vmatpush1.msra.mxu0 %v4782
        %4786 = vmatprep.subr.mxu0 0.0
        %4787 = vmatpush1.msra.mxu0 0.0
        %4788 = vmatprep.subr.mxu0 0.0
        %4789 = vmatpush1.msra.mxu0 0.0
        %4790 = vmatprep.subr.mxu0 0.0
        %4791 = vmatpush1.msra.mxu0 0.0
        %4792 = vmatprep.subr.mxu0 0.0
        %4793 = vmatpush1.msra.mxu0 0.0
        %4794 = vmatprep.subr.mxu0 0.0
        %4795 = vmatpush1.msra.mxu0 0.0
        %4796 = vmatprep.subr.mxu0 0.0
        %4797 = vmatpush1.msra.mxu0 0.0
        %4798 = vmatprep.subr.mxu0 0.0
        %4799 = vmatpush1.msra.mxu0 0.0
        %4800 = vmatprep.subr.mxu0 0.0
        %4801 = vmatpush1.msra.mxu0 0.0
        %4802 = vmatprep.subr.mxu0 0.0
        %4803 = vmatpush1.msra.mxu0 0.0
        %4804 = vmatprep.subr.mxu0 0.0
        %4805 = vmatpush1.msra.mxu0 0.0
        %4806 = vmatprep.subr.mxu0 0.0
        %4807 = vmatpush1.msra.mxu0 0.0
        %4808 = vmatprep.subr.mxu0 0.0
        %4809 = vmatpush1.msra.mxu0 0.0
        %4810 = vmatprep.subr.mxu0 0.0
        %4811 = vmatpush1.msra.mxu0 0.0
        %4812 = vmatprep.subr.mxu0 0.0
        %4813 = vmatpush1.msra.mxu0 0.0
        %4814 = vmatprep.subr.mxu0 0.0
        %4815 = vmatpush1.msra.mxu0 0.0
        %4816 = vmatprep.subr.mxu0 0.0
        %4817 = vmatpush1.msra.mxu0 0.0
        %4818 = vmatprep.subr.mxu0 0.0
        %4819 = vmatpush1.msra.mxu0 0.0
        %4820 = vmatprep.subr.mxu0 0.0
        %4821 = vmatpush1.msra.mxu0 0.0
        %4822 = vmatprep.subr.mxu0 0.0
        %4823 = vmatpush1.msra.mxu0 0.0
        %4824 = vmatprep.subr.mxu0 0.0
        %4825 = vmatpush1.msra.mxu0 0.0
        %4826 = vmatprep.subr.mxu0 0.0
        %4827 = vmatpush1.msra.mxu0 0.0
        %4828 = vmatprep.subr.mxu0 0.0
        %4829 = vmatpush1.msra.mxu0 0.0
        %4830 = vmatprep.subr.mxu0 0.0
        %4831 = vmatpush1.msra.mxu0 0.0
        %4832 = vmatprep.subr.mxu0 0.0
        %4833 = vmatpush1.msra.mxu0 0.0
        %4834 = vmatprep.subr.mxu0 0.0
        %4835 = vmatpush1.msra.mxu0 0.0
        %4836 = vmatprep.subr.mxu0 0.0
        %4837 = vmatpush1.msra.mxu0 0.0
        %4838 = vmatprep.subr.mxu0 0.0
        %4839 = vmatpush1.msra.mxu0 0.0
        %4840 = vmatprep.subr.mxu0 0.0
        %4841 = vmatpush1.msra.mxu0 0.0
        %4842 = vmatprep.subr.mxu0 0.0
        %4843 = vmatpush1.msra.mxu0 0.0
        %4844 = vmatprep.subr.mxu0 0.0
        %4845 = vmatpush1.msra.mxu0 0.0
        %4846 = vmatprep.subr.mxu0 0.0
        %4847 = vmatpush1.msra.mxu0 0.0
        %4848 = vmatprep.mubr.f32.mxu0 0.0
        %4849 = vmatmul.mubr.f32.gmra.mrb[0].mxu0 %v4779
        %v4850 = vpop.f32.mrb[0].mxu0
        %v4851 = vadd.f32 %v4777, %v4850
        %v4852 = vpop.f32.mrb[0].mxu0
        %4853 = vdwg.mxu0
        %v4854 = vmax.f32 %v4851, 0.0
        %v4855 = vld [vmem:[%s11] sm:$0xff]
        %v4856 = vld [vmem:[%s11 + $0x8] sm:$0xff]
        %v4857 = vld [vmem:[%s11 + $0x10] sm:$0xff]
        %v4858 = vld [vmem:[%s11 + $0x18] sm:$0xff]
        %v4859 = vld [vmem:[%s11 + $0x20] sm:$0xff]
        %v4860 = vld [vmem:[%s11 + $0x28] sm:$0xff]
        %v4861 = vld [vmem:[%s11 + $0x30] sm:$0xff]
        %v4862 = vld [vmem:[%s11 + $0x38] sm:$0xff]
        %v4863 = vld [vmem:[%s11 + $0x40] sm:$0xff]
        %v4864 = vld [vmem:[%s11 + $0x48] sm:$0xff]
        %v4865 = vld [vmem:[%s11 + $0x50] sm:$0xff]
        %v4866 = vld [vmem:[%s11 + $0x58] sm:$0xff]
        %v4867 = vld [vmem:[%s11 + $0x60] sm:$0xff]
        %v4868 = vld [vmem:[%s11 + $0x68] sm:$0xff]
        %v4869 = vld [vmem:[%s11 + $0x70] sm:$0xff]
        %v4870 = vld [vmem:[%s11 + $0x78] sm:$0xff]
        %v4871 = vld [vmem:[%s12] sm:$0x1]
        %4872 = vmatprep.subr.mxu0 0.0
        %4873 = vmatpush1.msra.mxu0 %v4855
        %4874 = vmatprep.subr.mxu0 0.0
        %4875 = vmatpush1.msra.mxu0 %v4856
        %4876 = vmatprep.subr.mxu0 0.0
        %4877 = vmatpush1.msra.mxu0 %v4857
        %4878 = vmatprep.subr.mxu0 0.0
        %4879 = vmatpush1.msra.mxu0 %v4858
        %4880 = vmatprep.subr.mxu0 0.0
        %4881 = vmatpush1.msra.mxu0 %v4859
        %4882 = vmatprep.subr.mxu0 0.0
        %4883 = vmatpush1.msra.mxu0 %v4860
        %4884 = vmatprep.subr.mxu0 0.0
        %4885 = vmatpush1.msra.mxu0 %v4861
        %4886 = vmatprep.subr.mxu0 0.0
        %4887 = vmatpush1.msra.mxu0 %v4862
        %4888 = vmatprep.subr.mxu0 0.0
        %4889 = vmatpush1.msra.mxu0 %v4863
        %4890 = vmatprep.subr.mxu0 0.0
        %4891 = vmatpush1.msra.mxu0 %v4864
        %4892 = vmatprep.subr.mxu0 0.0
        %4893 = vmatpush1.msra.mxu0 %v4865
        %4894 = vmatprep.subr.mxu0 0.0
        %4895 = vmatpush1.msra.mxu0 %v4866
        %4896 = vmatprep.subr.mxu0 0.0
        %4897 = vmatpush1.msra.mxu0 %v4867
        %4898 = vmatprep.subr.mxu0 0.0
        %4899 = vmatpush1.msra.mxu0 %v4868
        %4900 = vmatprep.subr.mxu0 0.0
        %4901 = vmatpush1.msra.mxu0 %v4869
        %4902 = vmatprep.subr.mxu0 0.0
        %4903 = vmatpush1.msra.mxu0 %v4870
        %4904 = vmatprep.subr.mxu0 0.0
        %4905 = vmatpush1.msra.mxu0 0.0
        %4906 = vmatprep.subr.mxu0 0.0
        %4907 = vmatpush1.msra.mxu0 0.0
        %4908 = vmatprep.subr.mxu0 0.0
        %4909 = vmatpush1.msra.mxu0 0.0
        %4910 = vmatprep.subr.mxu0 0.0
        %4911 = vmatpush1.msra.mxu0 0.0
        %4912 = vmatprep.subr.mxu0 0.0
        %4913 = vmatpush1.msra.mxu0 0.0
        %4914 = vmatprep.subr.mxu0 0.0
        %4915 = vmatpush1.msra.mxu0 0.0
        %4916 = vmatprep.subr.mxu0 0.0
        %4917 = vmatpush1.msra.mxu0 0.0
        %4918 = vmatprep.subr.mxu0 0.0
        %4919 = vmatpush1.msra.mxu0 0.0
        %4920 = vmatprep.subr.mxu0 0.0
        %4921 = vmatpush1.msra.mxu0 0.0
        %4922 = vmatprep.subr.mxu0 0.0
        %4923 = vmatpush1.msra.mxu0 0.0
        %4924 = vmatprep.subr.mxu0 0.0
        %4925 = vmatpush1.msra.mxu0 0.0
        %4926 = vmatprep.subr.mxu0 0.0
        %4927 = vmatpush1.msra.mxu0 0.0
        %4928 = vmatprep.subr.mxu0 0.0
        %4929 = vmatpush1.msra.mxu0 0.0
        %4930 = vmatprep.subr.mxu0 0.0
        %4931 = vmatpush1.msra.mxu0 0.0
        %4932 = vmatprep.subr.mxu0 0.0
        %4933 = vmatpush1.msra.mxu0 0.0
        %4934 = vmatprep.subr.mxu0 0.0
        %4935 = vmatpush1.msra.mxu0 0.0
        %4936 = vmatprep.mubr.f32.mxu0 0.0
        %4937 = vmatmul.mubr.f32.gmra.mrb[0].mxu0 %v4854
        %v4938 = vpop.f32.mrb[0].mxu0
        %v4939 = vadd.f32 %v4871, %v4938
        %v4940 = vpop.f32.mrb[0].mxu0
        %4941 = vdwg.mxu0
        %v4942 = vmax.f32 %v4939, 0.0
        %v4943 = vld [vmem:[%s13] sm:$0xff]
        %v4944 = vld [vmem:[%s13 + $0x8] sm:$0xff]
        %v4945 = vld [vmem:[%s13 + $0x10] sm:$0xff]
        %v4946 = vld [vmem:[%s13 + $0x18] sm:$0xff]
        %v4947 = vld [vmem:[%s13 + $0x20] sm:$0xff]
        %v4948 = vld [vmem:[%s13 + $0x28] sm:$0xff]
        %v4949 = vld [vmem:[%s13 + $0x30] sm:$0xff]
        %v4950 = vld [vmem:[%s13 + $0x38] sm:$0xff]
        %v4951 = vld [vmem:[%s14] sm:$0x1]
        %v4953 = vsel %vm3476, %v4942, 0
        %4955 = vmatprep.subr.mxu0 0.0
        %4956 = vmatpush1.msra.mxu0 %v4943
        %4957 = vmatprep.subr.mxu0 0.0
        %4958 = vmatpush1.msra.mxu0 %v4944
        %4959 = vmatprep.subr.mxu0 0.0
        %4960 = vmatpush1.msra.mxu0 %v4945
        %4961 = vmatprep.subr.mxu0 0.0
        %4962 = vmatpush1.msra.mxu0 %v4946
        %4963 = vmatprep.subr.mxu0 0.0
        %4964 = vmatpush1.msra.mxu0 %v4947
        %4965 = vmatprep.subr.mxu0 0.0
        %4966 = vmatpush1.msra.mxu0 %v4948
        %4967 = vmatprep.subr.mxu0 0.0
        %4968 = vmatpush1.msra.mxu0 %v4949
        %4969 = vmatprep.subr.mxu0 0.0
        %4970 = vmatpush1.msra.mxu0 %v4950
        %4971 = vmatprep.subr.mxu0 0.0
        %4972 = vmatpush1.msra.mxu0 0.0
        %4973 = vmatprep.subr.mxu0 0.0
        %4974 = vmatpush1.msra.mxu0 0.0
        %4975 = vmatprep.subr.mxu0 0.0
        %4976 = vmatpush1.msra.mxu0 0.0
        %4977 = vmatprep.subr.mxu0 0.0
        %4978 = vmatpush1.msra.mxu0 0.0
        %4979 = vmatprep.subr.mxu0 0.0
        %4980 = vmatpush1.msra.mxu0 0.0
        %4981 = vmatprep.subr.mxu0 0.0
        %4982 = vmatpush1.msra.mxu0 0.0
        %4983 = vmatprep.subr.mxu0 0.0
        %4984 = vmatpush1.msra.mxu0 0.0
        %4985 = vmatprep.subr.mxu0 0.0
        %4986 = vmatpush1.msra.mxu0 0.0
        %4987 = vmatprep.subr.mxu0 0.0
        %4988 = vmatpush1.msra.mxu0 0.0
        %4989 = vmatprep.subr.mxu0 0.0
        %4990 = vmatpush1.msra.mxu0 0.0
        %4991 = vmatprep.subr.mxu0 0.0
        %4992 = vmatpush1.msra.mxu0 0.0
        %4993 = vmatprep.subr.mxu0 0.0
        %4994 = vmatpush1.msra.mxu0 0.0
        %4995 = vmatprep.subr.mxu0 0.0
        %4996 = vmatpush1.msra.mxu0 0.0
        %4997 = vmatprep.subr.mxu0 0.0
        %4998 = vmatpush1.msra.mxu0 0.0
        %4999 = vmatprep.subr.mxu0 0.0
        %5000 = vmatpush1.msra.mxu0 0.0
        %5001 = vmatprep.subr.mxu0 0.0
        %5002 = vmatpush1.msra.mxu0 0.0
        %5003 = vmatprep.subr.mxu0 0.0
        %5004 = vmatpush1.msra.mxu0 0.0
        %5005 = vmatprep.subr.mxu0 0.0
        %5006 = vmatpush1.msra.mxu0 0.0
        %5007 = vmatprep.subr.mxu0 0.0
        %5008 = vmatpush1.msra.mxu0 0.0
        %5009 = vmatprep.subr.mxu0 0.0
        %5010 = vmatpush1.msra.mxu0 0.0
        %5011 = vmatprep.subr.mxu0 0.0
        %5012 = vmatpush1.msra.mxu0 0.0
        %5013 = vmatprep.subr.mxu0 0.0
        %5014 = vmatpush1.msra.mxu0 0.0
        %5015 = vmatprep.subr.mxu0 0.0
        %5016 = vmatpush1.msra.mxu0 0.0
        %5017 = vmatprep.subr.mxu0 0.0
        %5018 = vmatpush1.msra.mxu0 0.0
        %5019 = vmatprep.mubr.f32.mxu0 0.0
        %5020 = vmatmul.mubr.f32.gmra.mrb[0].mxu0 %v4953
        %v5021 = vpop.f32.mrb[0].mxu0
        %v5022 = vadd.f32 %v4951, %v5021
        %v5023 = vpop.f32.mrb[0].mxu0
        %5024 = vdwg.mxu0
        %v5025 = vmax.f32 %v5022, 0.0
        %v5026 = vld [vmem:[%s15] sm:$0xff]
        %v5027 = vld [vmem:[%s15 + $0x8] sm:$0xff]
        %v5028 = vld [vmem:[%s15 + $0x10] sm:$0xff]
        %v5029 = vld [vmem:[%s15 + $0x18] sm:$0xff]
        %v5030 = vld [vmem:[%s16] sm:$0x1]
        %vm5031 = vcmask 261120
        %v5033 = vsel %vm5031, %v5025, 0
        %5035 = vmatprep.subr.mxu0 0.0
        %5036 = vmatpush1.msra.mxu0 %v5026
        %5037 = vmatprep.subr.mxu0 0.0
        %5038 = vmatpush1.msra.mxu0 %v5027
        %5039 = vmatprep.subr.mxu0 0.0
        %5040 = vmatpush1.msra.mxu0 %v5028
        %5041 = vmatprep.subr.mxu0 0.0
        %5042 = vmatpush1.msra.mxu0 %v5029
        %5043 = vmatprep.subr.mxu0 0.0
        %5044 = vmatpush1.msra.mxu0 0.0
        %5045 = vmatprep.subr.mxu0 0.0
        %5046 = vmatpush1.msra.mxu0 0.0
        %5047 = vmatprep.subr.mxu0 0.0
        %5048 = vmatpush1.msra.mxu0 0.0
        %5049 = vmatprep.subr.mxu0 0.0
        %5050 = vmatpush1.msra.mxu0 0.0
        %5051 = vmatprep.subr.mxu0 0.0
        %5052 = vmatpush1.msra.mxu0 0.0
        %5053 = vmatprep.subr.mxu0 0.0
        %5054 = vmatpush1.msra.mxu0 0.0
        %5055 = vmatprep.subr.mxu0 0.0
        %5056 = vmatpush1.msra.mxu0 0.0
        %5057 = vmatprep.subr.mxu0 0.0
        %5058 = vmatpush1.msra.mxu0 0.0
        %5059 = vmatprep.subr.mxu0 0.0
        %5060 = vmatpush1.msra.mxu0 0.0
        %5061 = vmatprep.subr.mxu0 0.0
        %5062 = vmatpush1.msra.mxu0 0.0
        %5063 = vmatprep.subr.mxu0 0.0
        %5064 = vmatpush1.msra.mxu0 0.0
        %5065 = vmatprep.subr.mxu0 0.0
        %5066 = vmatpush1.msra.mxu0 0.0
        %5067 = vmatprep.subr.mxu0 0.0
        %5068 = vmatpush1.msra.mxu0 0.0
        %5069 = vmatprep.subr.mxu0 0.0
        %5070 = vmatpush1.msra.mxu0 0.0
        %5071 = vmatprep.subr.mxu0 0.0
        %5072 = vmatpush1.msra.mxu0 0.0
        %5073 = vmatprep.subr.mxu0 0.0
        %5074 = vmatpush1.msra.mxu0 0.0
        %5075 = vmatprep.subr.mxu0 0.0
        %5076 = vmatpush1.msra.mxu0 0.0
        %5077 = vmatprep.subr.mxu0 0.0
        %5078 = vmatpush1.msra.mxu0 0.0
        %5079 = vmatprep.subr.mxu0 0.0
        %5080 = vmatpush1.msra.mxu0 0.0
        %5081 = vmatprep.subr.mxu0 0.0
        %5082 = vmatpush1.msra.mxu0 0.0
        %5083 = vmatprep.subr.mxu0 0.0
        %5084 = vmatpush1.msra.mxu0 0.0
        %5085 = vmatprep.subr.mxu0 0.0
        %5086 = vmatpush1.msra.mxu0 0.0
        %5087 = vmatprep.subr.mxu0 0.0
        %5088 = vmatpush1.msra.mxu0 0.0
        %5089 = vmatprep.subr.mxu0 0.0
        %5090 = vmatpush1.msra.mxu0 0.0
        %5091 = vmatprep.subr.mxu0 0.0
        %5092 = vmatpush1.msra.mxu0 0.0
        %5093 = vmatprep.subr.mxu0 0.0
        %5094 = vmatpush1.msra.mxu0 0.0
        %5095 = vmatprep.subr.mxu0 0.0
        %5096 = vmatpush1.msra.mxu0 0.0
        %5097 = vmatprep.subr.mxu0 0.0
        %5098 = vmatpush1.msra.mxu0 0.0
        %5099 = vmatprep.mubr.f32.mxu0 0.0
        %5100 = vmatmul.mubr.f32.gmra.mrb[0].mxu0 %v5033
        %v5101 = vpop.f32.mrb[0].mxu0
        %v5102 = vadd.f32 %v5030, %v5101
        %v5103 = vpop.f32.mrb[0].mxu0
        %5104 = vdwg.mxu0
        %v5105 = vmax.f32 %v5102, 0.0
        %v5106 = vld [vmem:[%s17] sm:$0xff]
        %v5107 = vld [vmem:[%s17 + $0x8] sm:$0xff]
        %v5108 = vld [vmem:[%s18] sm:$0x1]
        %v5110 = vsel %vm4320, %v5105, 0
        %5112 = vmatprep.subr.mxu0 0.0
        %5113 = vmatpush1.msra.mxu0 %v5106
        %5114 = vmatprep.subr.mxu0 0.0
        %5115 = vmatpush1.msra.mxu0 %v5107
        %5116 = vmatprep.subr.mxu0 0.0
        %5117 = vmatpush1.msra.mxu0 0.0
        %5118 = vmatprep.subr.mxu0 0.0
        %5119 = vmatpush1.msra.mxu0 0.0
        %5120 = vmatprep.subr.mxu0 0.0
        %5121 = vmatpush1.msra.mxu0 0.0
        %5122 = vmatprep.subr.mxu0 0.0
        %5123 = vmatpush1.msra.mxu0 0.0
        %5124 = vmatprep.subr.mxu0 0.0
        %5125 = vmatpush1.msra.mxu0 0.0
        %5126 = vmatprep.subr.mxu0 0.0
        %5127 = vmatpush1.msra.mxu0 0.0
        %5128 = vmatprep.subr.mxu0 0.0
        %5129 = vmatpush1.msra.mxu0 0.0
        %5130 = vmatprep.subr.mxu0 0.0
        %5131 = vmatpush1.msra.mxu0 0.0
        %5132 = vmatprep.subr.mxu0 0.0
        %5133 = vmatpush1.msra.mxu0 0.0
        %5134 = vmatprep.subr.mxu0 0.0
        %5135 = vmatpush1.msra.mxu0 0.0
        %5136 = vmatprep.subr.mxu0 0.0
        %5137 = vmatpush1.msra.mxu0 0.0
        %5138 = vmatprep.subr.mxu0 0.0
        %5139 = vmatpush1.msra.mxu0 0.0
        %5140 = vmatprep.subr.mxu0 0.0
        %5141 = vmatpush1.msra.mxu0 0.0
        %5142 = vmatprep.subr.mxu0 0.0
        %5143 = vmatpush1.msra.mxu0 0.0
        %5144 = vmatprep.subr.mxu0 0.0
        %5145 = vmatpush1.msra.mxu0 0.0
        %5146 = vmatprep.subr.mxu0 0.0
        %5147 = vmatpush1.msra.mxu0 0.0
        %5148 = vmatprep.subr.mxu0 0.0
        %5149 = vmatpush1.msra.mxu0 0.0
        %5150 = vmatprep.subr.mxu0 0.0
        %5151 = vmatpush1.msra.mxu0 0.0
        %5152 = vmatprep.subr.mxu0 0.0
        %5153 = vmatpush1.msra.mxu0 0.0
        %5154 = vmatprep.subr.mxu0 0.0
        %5155 = vmatpush1.msra.mxu0 0.0
        %5156 = vmatprep.subr.mxu0 0.0
        %5157 = vmatpush1.msra.mxu0 0.0
        %5158 = vmatprep.subr.mxu0 0.0
        %5159 = vmatpush1.msra.mxu0 0.0
        %5160 = vmatprep.subr.mxu0 0.0
        %5161 = vmatpush1.msra.mxu0 0.0
        %5162 = vmatprep.subr.mxu0 0.0
        %5163 = vmatpush1.msra.mxu0 0.0
        %5164 = vmatprep.subr.mxu0 0.0
        %5165 = vmatpush1.msra.mxu0 0.0
        %5166 = vmatprep.subr.mxu0 0.0
        %5167 = vmatpush1.msra.mxu0 0.0
        %5168 = vmatprep.subr.mxu0 0.0
        %5169 = vmatpush1.msra.mxu0 0.0
        %5170 = vmatprep.subr.mxu0 0.0
        %5171 = vmatpush1.msra.mxu0 0.0
        %5172 = vmatprep.subr.mxu0 0.0
        %5173 = vmatpush1.msra.mxu0 0.0
        %5174 = vmatprep.subr.mxu0 0.0
        %5175 = vmatpush1.msra.mxu0 0.0
        %5176 = vmatprep.mubr.f32.mxu0 0.0
        %5177 = vmatmul.mubr.f32.gmra.mrb[0].mxu0 %v5110
        %v5178 = vpop.f32.mrb[0].mxu0
        %v5179 = vadd.f32 %v5108, %v5178
        %v5180 = vpop.f32.mrb[0].mxu0
        %5181 = vdwg.mxu0
        %v5182 = vmax.f32 %v5179, 0.0
        %v5183 = vld [vmem:[%s19] sm:$0xff]
        %v5184 = vld [vmem:[#allocation2] sm:$0x1]
        %vm5185 = vcmask 64512
        %v5187 = vsel %vm5185, %v5182, 0
        %5189 = vmatprep.subr.mxu0 0.0
        %5190 = vmatpush1.msra.mxu0 %v5183
        %5191 = vmatprep.subr.mxu0 0.0
        %5192 = vmatpush1.msra.mxu0 0.0
        %5193 = vmatprep.subr.mxu0 0.0
        %5194 = vmatpush1.msra.mxu0 0.0
        %5195 = vmatprep.subr.mxu0 0.0
        %5196 = vmatpush1.msra.mxu0 0.0
        %5197 = vmatprep.subr.mxu0 0.0
        %5198 = vmatpush1.msra.mxu0 0.0
        %5199 = vmatprep.subr.mxu0 0.0
        %5200 = vmatpush1.msra.mxu0 0.0
        %5201 = vmatprep.subr.mxu0 0.0
        %5202 = vmatpush1.msra.mxu0 0.0
        %5203 = vmatprep.subr.mxu0 0.0
        %5204 = vmatpush1.msra.mxu0 0.0
        %5205 = vmatprep.subr.mxu0 0.0
        %5206 = vmatpush1.msra.mxu0 0.0
        %5207 = vmatprep.subr.mxu0 0.0
        %5208 = vmatpush1.msra.mxu0 0.0
        %5209 = vmatprep.subr.mxu0 0.0
        %5210 = vmatpush1.msra.mxu0 0.0
        %5211 = vmatprep.subr.mxu0 0.0
        %5212 = vmatpush1.msra.mxu0 0.0
        %5213 = vmatprep.subr.mxu0 0.0
        %5214 = vmatpush1.msra.mxu0 0.0
        %5215 = vmatprep.subr.mxu0 0.0
        %5216 = vmatpush1.msra.mxu0 0.0
        %5217 = vmatprep.subr.mxu0 0.0
        %5218 = vmatpush1.msra.mxu0 0.0
        %5219 = vmatprep.subr.mxu0 0.0
        %5220 = vmatpush1.msra.mxu0 0.0
        %5221 = vmatprep.subr.mxu0 0.0
        %5222 = vmatpush1.msra.mxu0 0.0
        %5223 = vmatprep.subr.mxu0 0.0
        %5224 = vmatpush1.msra.mxu0 0.0
        %5225 = vmatprep.subr.mxu0 0.0
        %5226 = vmatpush1.msra.mxu0 0.0
        %5227 = vmatprep.subr.mxu0 0.0
        %5228 = vmatpush1.msra.mxu0 0.0
        %5229 = vmatprep.subr.mxu0 0.0
        %5230 = vmatpush1.msra.mxu0 0.0
        %5231 = vmatprep.subr.mxu0 0.0
        %5232 = vmatpush1.msra.mxu0 0.0
        %5233 = vmatprep.subr.mxu0 0.0
        %5234 = vmatpush1.msra.mxu0 0.0
        %5235 = vmatprep.subr.mxu0 0.0
        %5236 = vmatpush1.msra.mxu0 0.0
        %5237 = vmatprep.subr.mxu0 0.0
        %5238 = vmatpush1.msra.mxu0 0.0
        %5239 = vmatprep.subr.mxu0 0.0
        %5240 = vmatpush1.msra.mxu0 0.0
        %5241 = vmatprep.subr.mxu0 0.0
        %5242 = vmatpush1.msra.mxu0 0.0
        %5243 = vmatprep.subr.mxu0 0.0
        %5244 = vmatpush1.msra.mxu0 0.0
        %5245 = vmatprep.subr.mxu0 0.0
        %5246 = vmatpush1.msra.mxu0 0.0
        %5247 = vmatprep.subr.mxu0 0.0
        %5248 = vmatpush1.msra.mxu0 0.0
        %5249 = vmatprep.subr.mxu0 0.0
        %5250 = vmatpush1.msra.mxu0 0.0
        %5251 = vmatprep.subr.mxu0 0.0
        %5252 = vmatpush1.msra.mxu0 0.0
        %5253 = vmatprep.mubr.f32.mxu0 0.0
        %5254 = vmatmul.mubr.f32.gmra.mrb[0].mxu0 %v5187
        %v5255 = vpop.f32.mrb[0].mxu0
        %v5256 = vadd.f32 %v5184, %v5255
        %v5257 = vpop.f32.mrb[0].mxu0
        %5258 = vdwg.mxu0
        %vm5259 = vcmask 0
        %5260 = vst.msk [vmem:[%s765] sm:$0x1] %vm5259, %v5256
        %vm5261 = vcmask 57344
        %5262 = vst.msk [vmem:[%s739] sm:$0x1] %vm5261, %v5182
        %p5263 = scmp.lt.s32.totalorder %s39, 1
        %s5264 = scalar_select %p5263, %s39, 1
        %s5265 = scalar_lea.vmem %s21, %s5264
        %s5266 = sand.u32 %s539, 1
        %s5267 = scalar_lea.sflag [#allocation4], %s5266
        %s5268 = sand.u32 %s539, 1
        %s5269 = scalar_lea.vmem [#allocation3], %s5268
        // Predicated region
        $region105: #{learn_loss_active_forward.1} parent=103 // pred_check
          %p5270 = pneg %p523
        $region106: #{learn_loss_active_forward.1} parent=103 // pred_check_branch
          %5272 = sbr.rel (%p5270) target = $region108
        $region107: #{learn_loss_active_forward.1} parent=103 // pred_region
          _
        $region108: #{learn_loss_active_forward.1} parent=103 // pred_fallthru
          _
        // Predicated region
        $region109: #{learn_loss_active_forward.1} parent=103 // pred_check
          %p5273 = pneg %p549
        $region110: #{learn_loss_active_forward.1} parent=103 // pred_check_branch
          %5275 = sbr.rel (%p5273) target = $region112
        $region111: #{learn_loss_active_forward.1} parent=103 // pred_region
          %s5277 = ssub.s32 16, 16
          %5278 = vsyncadd %s5267, %s5277
          %s5279 = smul.addr %s39, 16
          %s5280 = scalar_lea.hbm %s22, %s5279
          %s5282 = sshll.u32 %s5269, 4
          %s5283 = int_to_ptr.vmem [resolvable:$true] %s5282
          %5285 = dma.vmem_to_hbm [thread:$0]  %s5283, 16, %s5280, %s5267
        $region112: #{learn_loss_active_forward.1} parent=103 // pred_fallthru
          _
      $region104: #{learn_loss_active_forward.1} parent=5 // pred_fallthru
        _
      %p5286 = scmp.le.s32.totalorder 2, %s34
      // Predicated region
      $region113: #{learn_loss_active_forward.1} parent=5 // pred_check
        %p5287 = pneg %p5286
      $region114: #{learn_loss_active_forward.1} parent=5 // pred_check_branch
        %5289 = sbr.rel (%p5287) target = $region116
      $region115: #{learn_loss_active_forward.1} parent=5 // pred_region
        %s5290 = ssub.s32 %s34, 2
        // Predicated region
        $region117: #{learn_loss_active_forward.1} parent=115 // pred_check
          %p5291 = pneg %p529
        $region118: #{learn_loss_active_forward.1} parent=115 // pred_check_branch
          %5293 = sbr.rel (%p5291) target = $region120
        $region119: #{learn_loss_active_forward.1} parent=115 // pred_region
          %p5294 = scmp.lt.s32.totalorder %s40, 1
          %s5295 = scalar_select %p5294, %s40, 1
          %s5296 = scalar_lea.vmem %s21, %s5295
        $region120: #{learn_loss_active_forward.1} parent=115 // pred_fallthru
          _
        // Predicated region
        $region121: #{learn_loss_active_forward.1} parent=115 // pred_check
          %p5297 = pneg %p555
        $region122: #{learn_loss_active_forward.1} parent=115 // pred_check_branch
          %5299 = sbr.rel (%p5297) target = $region124
        $region123: #{learn_loss_active_forward.1} parent=115 // pred_region
          %s5300 = sand.u32 %s540, 1
          %s5301 = scalar_lea.sflag [#allocation4], %s5300
          %s5302 = sand.u32 %s540, 1
          %s5303 = scalar_lea.vmem [#allocation3], %s5302
          %5304 = dma.done %s5301, 16
        $region124: #{learn_loss_active_forward.1} parent=115 // pred_fallthru
          _
      $region116: #{learn_loss_active_forward.1} parent=5 // pred_fallthru
        _
    $region6: #{learn_loss_active_forward.1} parent=1 // loop_footer
      %s38 = sadd.s32 1, %s34
    $region7: #{learn_loss_active_forward.1} parent=1 // loop_footer_branch
      %33 = sbr.rel target = $region3
    $region8: #{learn_loss_active_forward.1} parent=1 // loop_exit
      _
    %5305 = vsyncpa [#allocation4], 1
    %s5306 = scalar_lea.sflag [#allocation4], 1
    %5307 = vsyncpa %s5306, 1

</llo_original>
